<compile_context>
chip_gen: v7x
topology: tpu7x:2x2x1
jax: 0.10.0
libtpu: 0.0.40
codegen_flags: <defaults>
</compile_context>

<pallas_src>
import functools

import jax
import jax.numpy as jnp
from jax import lax
from jax.experimental import pallas as pl
from jax.experimental.pallas import tpu as pltpu


# ------------------------------ fused kernel ------------------------------- #

def _fused_kernel(x_ref, w1_ref, b1_ref, w2_ref, b2_ref, w3_ref, b3_ref,
                  o_ref, y1_ref, *, stride, residual, use_mxu_pw1):
    """One row-band of one image: pw1 -> dw3x3(stride) -> pw3 (+residual).

    x_ref : (H+2, W+2, cin)   whole zero-padded input image (resident per n)
    w1_ref: (cin, mid)   b1_ref: (1, mid)      BN-folded 1x1 expand
    w2_ref: (3, 3, mid)  b2_ref: (1, mid)      BN-folded depthwise 3x3
    w3_ref: (mid, cout)  b3_ref: (1, cout)     BN-folded 1x1 project
    o_ref : (tr, W_out, cout)                  output row-band
    y1_ref: (rows_in, W+2, mid) f32 VMEM scratch for the expanded slab
    """
    Hp, Wp, cin = x_ref.shape
    rows_in, _, mid = y1_ref.shape
    tr, W_out, cout = o_ref.shape
    H = Hp - 2

    rb = pl.program_id(1)
    row_start = pl.multiple_of(rb * (tr * stride), tr * stride)

    # Input slab covering this band's receptive field (incl. 1-row halo).
    xs = x_ref[pl.ds(row_start, rows_in), :, :].astype(jnp.float32)

    # ---- conv1: 1x1 + BN + ReLU (full-resolution slab, kept in VMEM) -------- #
    if use_mxu_pw1:
        y1 = jnp.dot(xs.reshape(rows_in * Wp, cin), w1_ref[...],
                     preferred_element_type=jnp.float32)
        y1 = y1.reshape(rows_in, Wp, mid)
    else:
        # Tiny K: VPU broadcast-MAC beats a <10%-utilized MXU matmul.
        y1 = jnp.zeros((rows_in, Wp, mid), jnp.float32)
        for c in range(cin):
            y1 = y1 + xs[:, :, c:c + 1] * w1_ref[c:c + 1, :]
    y1 = jnp.maximum(y1 + b1_ref[...], 0.0)
    y1_ref[...] = y1

    # Zero the halo ring: the depthwise conv must see zero padding of y1
    # (the pointwise conv turned the zero-padded pixels into relu(b1)).
    zcol = jnp.zeros((rows_in, 1, mid), jnp.float32)
    y1_ref[:, 0:1, :] = zcol
    y1_ref[:, Wp - 1:Wp, :] = zcol
    zrow = jnp.zeros((1, Wp, mid), jnp.float32)

    @pl.when(row_start == 0)                       # slab contains padded row 0
    def _():
        y1_ref[0:1, :, :] = zrow

    @pl.when(row_start + rows_in - 1 == H + 1)     # slab contains padded row H+1
    def _():
        y1_ref[rows_in - 1:rows_in, :, :] = zrow

    # ---- conv2: depthwise 3x3 (stride) + BN + ReLU -------------------------- #
    acc = jnp.zeros((tr, W_out, mid), jnp.float32)
    for kw in range(3):
        if stride == 1:
            # Hoist the sublane-unaligned column shift once per kw (3 realigns,
            # not 9); row shifts of the loaded value are cheap.
            cv = y1_ref[:, kw:kw + W_out, :]               # (rows_in, W_out, mid)
            for kh in range(3):
                acc = acc + cv[kh:kh + tr] * w2_ref[kh:kh + 1, kw:kw + 1, :]
        else:
            # Strided accumulation directly from the slab (no stride-1 +
            # subsample pass): output (r, w) reads y1[stride*r+kh, stride*w+kw].
            for kh in range(3):
                sub = y1_ref[pl.ds(kh, tr, stride), pl.ds(kw, W_out, stride), :]
                acc = acc + sub * w2_ref[kh:kh + 1, kw:kw + 1, :]
    y2 = jnp.maximum(acc + b2_ref[...], 0.0)

    # ---- conv3: 1x1 + BN (no activation), fused residual -------------------- #
    y3 = jnp.dot(y2.reshape(tr * W_out, mid), w3_ref[...],
                 preferred_element_type=jnp.float32)
    y3 = y3.reshape(tr, W_out, cout) + b3_ref[...]
    if residual:
        # stride == 1 here, so W_out == W and cout == cin; identity comes from
        # the interior of the padded input image already resident in VMEM.
        ident = x_ref[pl.ds(row_start + 1, tr), 1:W_out + 1, :]
        y3 = y3 + ident.astype(jnp.float32)
    o_ref[...] = y3.astype(o_ref.dtype)


# -------------------------------- wrappers --------------------------------- #

def _pick_tile_rows(h_out, wp, mid, stride, slab_budget=2 * 1024 * 1024):
    """Largest divisor of h_out whose f32 y1 slab fits the VMEM budget."""
    best = 1
    for tr in range(1, h_out + 1):
        if h_out % tr:
            continue
        rows_in = (tr - 1) * stride + 3
        if rows_in * wp * mid * 4 <= slab_budget:
            best = tr
    return best


def linear_bottleneck_nhwc(x, w1, b1, w2, b2, w3, b3, stride, residual):
    """Fused LinearBottleneck on NHWC input (BN already folded into w*/b*)."""
    N, H, W, cin = x.shape
    mid = w1.shape[1]
    cout = w3.shape[1]
    H_out = (H - 1) // stride + 1
    W_out = (W - 1) // stride + 1
    Hp, Wp = H + 2, W + 2

    # Pad only the SMALL (cin-channel) input; the 6x-wide mid activation never
    # leaves VMEM.
    xp = jnp.pad(x, ((0, 0), (1, 1), (1, 1), (0, 0)))

    tr = _pick_tile_rows(H_out, Wp, mid, stride)
    rows_in = (tr - 1) * stride + 3
    num_bands = H_out // tr

    itemsize = x.dtype.itemsize
    est_vmem = (2 * Hp * Wp * cin + 2 * tr * W_out * cout) * itemsize \
        + rows_in * Wp * mid * 4 \
        + 2 * (cin * mid + 9 * mid + mid * cout + 2 * mid + cout) * 4
    vmem_limit = None
    if est_vmem > 12 * 1024 * 1024:
        # Stay under v7x's 64 MiB physical VMEM.
        vmem_limit = int(min(est_vmem + 8 * 1024 * 1024, 56 * 1024 * 1024))

    kernel = functools.partial(
        _fused_kernel, stride=stride, residual=residual,
        use_mxu_pw1=(cin >= 16))

    out = pl.pallas_call(
        kernel,
        out_shape=jax.ShapeDtypeStruct((N, H_out, W_out, cout), x.dtype),
        grid_spec=pltpu.PrefetchScalarGridSpec(
            num_scalar_prefetch=0,
            grid=(N, num_bands),
            in_specs=[
                # Whole padded image per n; constant across bands, so Pallas
                # only re-DMAs it when n changes.
                pl.BlockSpec((None, Hp, Wp, cin), lambda n, rb: (n, 0, 0, 0)),
                pl.BlockSpec((cin, mid), lambda n, rb: (0, 0)),
                pl.BlockSpec((1, mid), lambda n, rb: (0, 0)),
                pl.BlockSpec((3, 3, mid), lambda n, rb: (0, 0, 0)),
                pl.BlockSpec((1, mid), lambda n, rb: (0, 0)),
                pl.BlockSpec((mid, cout), lambda n, rb: (0, 0)),
                pl.BlockSpec((1, cout), lambda n, rb: (0, 0)),
            ],
            out_specs=pl.BlockSpec((None, tr, W_out, cout),
                                   lambda n, rb: (n, rb, 0, 0)),
            scratch_shapes=[pltpu.VMEM((rows_in, Wp, mid), jnp.float32)],
        ),
        compiler_params=pltpu.CompilerParams(
            dimension_semantics=("parallel", "parallel"),
            vmem_limit_bytes=vmem_limit),
    )(xp, w1, b1.reshape(1, mid), w2, b2.reshape(1, mid),
      w3, b3.reshape(1, cout))
    return out


def _fold_bn(gamma, beta, mean, var, eps=1e-5):
    scale = gamma / jnp.sqrt(var + eps)
    bias = beta - mean * scale
    return scale, bias


def linear_bottleneck(x_nchw, params, stride):
    """PyTorch-layout entry point: (N, Cin, H, W) -> (N, Cout, H', W')."""
    in_c = x_nchw.shape[1]
    out_c = params["w3"].shape[1]
    residual = (in_c == out_c) and (stride == 1)

    s1, b1 = _fold_bn(*params["bn1"])
    s2, b2 = _fold_bn(*params["bn2"])
    s3, b3 = _fold_bn(*params["bn3"])
    w1e = params["w1"] * s1[None, :]
    w2e = params["w2"] * s2[None, None, :]
    w3e = params["w3"] * s3[None, :]

    x = jnp.transpose(x_nchw, (0, 2, 3, 1))  # NCHW -> NHWC (layout plumbing only)
    y = linear_bottleneck_nhwc(x, w1e, b1, w2e, b2, w3e, b3, stride, residual)
    return jnp.transpose(y, (0, 3, 1, 2))


def make_params(key, in_channels, out_channels):
    mid = in_channels * 6
    ks = jax.random.split(key, 15)
    p = {}
    p["w1"] = 0.1 * jax.random.normal(ks[0], (in_channels, mid), jnp.float32)
    p["bn1"] = (jax.random.uniform(ks[1], (mid,), jnp.float32, 0.5, 1.5),
                0.1 * jax.random.normal(ks[2], (mid,), jnp.float32),
                0.1 * jax.random.normal(ks[3], (mid,), jnp.float32),
                jax.random.uniform(ks[4], (mid,), jnp.float32, 0.5, 1.5))
    p["w2"] = 0.1 * jax.random.normal(ks[5], (3, 3, mid), jnp.float32)
    p["bn2"] = (jax.random.uniform(ks[6], (mid,), jnp.float32, 0.5, 1.5),
                0.1 * jax.random.normal(ks[7], (mid,), jnp.float32),
                0.1 * jax.random.normal(ks[8], (mid,), jnp.float32),
                jax.random.uniform(ks[9], (mid,), jnp.float32, 0.5, 1.5))
    p["w3"] = 0.1 * jax.random.normal(ks[10], (mid, out_channels), jnp.float32)
    p["bn3"] = (jax.random.uniform(ks[11], (out_channels,), jnp.float32, 0.5, 1.5),
                0.1 * jax.random.normal(ks[12], (out_channels,), jnp.float32),
                0.1 * jax.random.normal(ks[13], (out_channels,), jnp.float32),
                jax.random.uniform(ks[14], (out_channels,), jnp.float32, 0.5, 1.5))
    return p


# ------------------------- pure-JAX reference check ------------------------ #

def reference(x_nchw, params, stride):
    in_c = x_nchw.shape[1]
    mid_c = params["w1"].shape[1]
    out_c = params["w3"].shape[1]
    residual = (in_c == out_c) and (stride == 1)
    s1, b1 = _fold_bn(*params["bn1"])
    s2, b2 = _fold_bn(*params["bn2"])
    s3, b3 = _fold_bn(*params["bn3"])
    w1e = params["w1"] * s1[None, :]
    w2e = params["w2"] * s2[None, None, :]
    w3e = params["w3"] * s3[None, :]

    x = jnp.transpose(x_nchw, (0, 2, 3, 1))
    y1 = jax.nn.relu(jnp.einsum("nhwc,cd->nhwd", x, w1e,
                                precision=lax.Precision.HIGHEST) + b1)
    y2 = lax.conv_general_dilated(
        y1, w2e.reshape(3, 3, 1, mid_c),
        window_strides=(stride, stride), padding=((1, 1), (1, 1)),
        dimension_numbers=("NHWC", "HWIO", "NHWC"),
        feature_group_count=mid_c, precision=lax.Precision.HIGHEST)
    y2 = jax.nn.relu(y2 + b2)
    y3 = jnp.einsum("nhwc,cd->nhwd", y2, w3e,
                    precision=lax.Precision.HIGHEST) + b3
    if residual:
        y3 = y3 + x
    return jnp.transpose(y3, (0, 3, 1, 2))


if __name__ == "__main__":
    key = jax.random.PRNGKey(0)
    k_x, k_p1, k_p2 = jax.random.split(key, 3)

    N, C, H, W = 2, 4, 16, 16
    x = jax.random.normal(k_x, (N, C, H, W), jnp.float32)

    # Case 1: residual path (in_channels == out_channels, stride == 1).
    params = make_params(k_p1, in_channels=C, out_channels=C)
    out = jax.block_until_ready(linear_bottleneck(x, params, stride=1))
    ref = jax.block_until_ready(reference(x, params, stride=1))
    assert out.shape == ref.shape == (N, C, H, W)
    assert jnp.allclose(out, ref, atol=2e-4, rtol=1e-3), \
        f"max err {jnp.max(jnp.abs(out - ref))}"

    # Case 2: projection path (in_channels != out_channels, no residual).
    C_out = 8
    params2 = make_params(k_p2, in_channels=C, out_channels=C_out)
    out2 = jax.block_until_ready(linear_bottleneck(x, params2, stride=1))
    ref2 = jax.block_until_ready(reference(x, params2, stride=1))
    assert out2.shape == ref2.shape == (N, C_out, H, W)
    assert jnp.allclose(out2, ref2, atol=2e-4, rtol=1e-3), \
        f"max err {jnp.max(jnp.abs(out2 - ref2))}"

    print("KERNEL_OK")
</pallas_src>

<mosaic_0001>
module attributes {stable_mosaic.version = 11 : i64} {
  func.func @_fused_kernel(%arg0: i32, %arg1: i32, %arg2: memref<1x18x18x4xf32, #tpu.memory_space<vmem>>, %arg3: memref<4x24xf32, #tpu.memory_space<vmem>>, %arg4: memref<1x24xf32, #tpu.memory_space<vmem>>, %arg5: memref<3x3x24xf32, #tpu.memory_space<vmem>>, %arg6: memref<1x24xf32, #tpu.memory_space<vmem>>, %arg7: memref<24x4xf32, #tpu.memory_space<vmem>>, %arg8: memref<1x4xf32, #tpu.memory_space<vmem>>, %arg9: memref<1x16x16x4xf32, #tpu.memory_space<vmem>>, %arg10: memref<18x18x24xf32, #tpu.memory_space<vmem>>) attributes {dimension_semantics = [#tpu.dimension_semantics<parallel>, #tpu.dimension_semantics<parallel>], iteration_bounds = array<i64: 2, 1>, scalar_prefetch = 0 : i64, scratch_operands = 1 : i64, tpu.core_type = #tpu.core_type<tc>, window_params = [{transform_indices = @transform_0, window_bounds = array<i64: 1, 18, 18, 4>}, {pipeline_mode = #tpu.pipeline_mode<synchronous>, transform_indices = @transform_1, window_bounds = array<i64: 4, 24>}, {pipeline_mode = #tpu.pipeline_mode<synchronous>, transform_indices = @transform_2, window_bounds = array<i64: 1, 24>}, {pipeline_mode = #tpu.pipeline_mode<synchronous>, transform_indices = @transform_3, window_bounds = array<i64: 3, 3, 24>}, {pipeline_mode = #tpu.pipeline_mode<synchronous>, transform_indices = @transform_4, window_bounds = array<i64: 1, 24>}, {pipeline_mode = #tpu.pipeline_mode<synchronous>, transform_indices = @transform_5, window_bounds = array<i64: 24, 4>}, {pipeline_mode = #tpu.pipeline_mode<synchronous>, transform_indices = @transform_6, window_bounds = array<i64: 1, 4>}, {transform_indices = @transform_7, window_bounds = array<i64: 1, 16, 16, 4>}]} {
    %c16_i32 = arith.constant 16 : i32
    %0 = arith.muli %arg1, %c16_i32 : i32
    %1 = tpu.assume_multiple %0, 16 : i32
    %c0 = arith.constant 0 : index
    %2 = arith.index_cast %1 : i32 to index
    %c0_0 = arith.constant 0 : index
    %c0_1 = arith.constant 0 : index
    %3 = vector.load %arg2[%c0, %2, %c0_0, %c0_1] : memref<1x18x18x4xf32, #tpu.memory_space<vmem>>, vector<1x18x18x4xf32>
    %4 = vector.shape_cast %3 : vector<1x18x18x4xf32> to vector<18x18x4xf32>
    %cst = arith.constant 0.000000e+00 : f32
    %5 = vector.broadcast %cst : f32 to vector<18x18x24xf32>
    %6 = vector.extract_strided_slice %4 {offsets = [0, 0, 0], sizes = [18, 18, 1], strides = [1, 1, 1]} : vector<18x18x4xf32> to vector<18x18x1xf32>
    %c0_2 = arith.constant 0 : index
    %c0_3 = arith.constant 0 : index
    %7 = vector.load %arg3[%c0_2, %c0_3] : memref<4x24xf32, #tpu.memory_space<vmem>>, vector<1x24xf32>
    %8 = vector.shape_cast %7 : vector<1x24xf32> to vector<1x1x24xf32>
    %9 = vector.broadcast %6 : vector<18x18x1xf32> to vector<18x18x24xf32>
    %10 = vector.broadcast %8 : vector<1x1x24xf32> to vector<18x18x24xf32>
    %11 = arith.mulf %9, %10 : vector<18x18x24xf32>
    %12 = arith.addf %5, %11 : vector<18x18x24xf32>
    %13 = vector.extract_strided_slice %4 {offsets = [0, 0, 1], sizes = [18, 18, 1], strides = [1, 1, 1]} : vector<18x18x4xf32> to vector<18x18x1xf32>
    %c1 = arith.constant 1 : index
    %c0_4 = arith.constant 0 : index
    %14 = vector.load %arg3[%c1, %c0_4] : memref<4x24xf32, #tpu.memory_space<vmem>>, vector<1x24xf32>
    %15 = vector.shape_cast %14 : vector<1x24xf32> to vector<1x1x24xf32>
    %16 = vector.broadcast %13 : vector<18x18x1xf32> to vector<18x18x24xf32>
    %17 = vector.broadcast %15 : vector<1x1x24xf32> to vector<18x18x24xf32>
    %18 = arith.mulf %16, %17 : vector<18x18x24xf32>
    %19 = arith.addf %12, %18 : vector<18x18x24xf32>
    %20 = vector.extract_strided_slice %4 {offsets = [0, 0, 2], sizes = [18, 18, 1], strides = [1, 1, 1]} : vector<18x18x4xf32> to vector<18x18x1xf32>
    %c2 = arith.constant 2 : index
    %c0_5 = arith.constant 0 : index
    %21 = vector.load %arg3[%c2, %c0_5] : memref<4x24xf32, #tpu.memory_space<vmem>>, vector<1x24xf32>
    %22 = vector.shape_cast %21 : vector<1x24xf32> to vector<1x1x24xf32>
    %23 = vector.broadcast %20 : vector<18x18x1xf32> to vector<18x18x24xf32>
    %24 = vector.broadcast %22 : vector<1x1x24xf32> to vector<18x18x24xf32>
    %25 = arith.mulf %23, %24 : vector<18x18x24xf32>
    %26 = arith.addf %19, %25 : vector<18x18x24xf32>
    %27 = vector.extract_strided_slice %4 {offsets = [0, 0, 3], sizes = [18, 18, 1], strides = [1, 1, 1]} : vector<18x18x4xf32> to vector<18x18x1xf32>
    %c3 = arith.constant 3 : index
    %c0_6 = arith.constant 0 : index
    %28 = vector.load %arg3[%c3, %c0_6] : memref<4x24xf32, #tpu.memory_space<vmem>>, vector<1x24xf32>
    %29 = vector.shape_cast %28 : vector<1x24xf32> to vector<1x1x24xf32>
    %30 = vector.broadcast %27 : vector<18x18x1xf32> to vector<18x18x24xf32>
    %31 = vector.broadcast %29 : vector<1x1x24xf32> to vector<18x18x24xf32>
    %32 = arith.mulf %30, %31 : vector<18x18x24xf32>
    %33 = arith.addf %26, %32 : vector<18x18x24xf32>
    %c0_7 = arith.constant 0 : index
    %c0_8 = arith.constant 0 : index
    %34 = vector.load %arg4[%c0_7, %c0_8] : memref<1x24xf32, #tpu.memory_space<vmem>>, vector<1x24xf32>
    %35 = vector.shape_cast %34 : vector<1x24xf32> to vector<1x1x24xf32>
    %36 = vector.broadcast %35 : vector<1x1x24xf32> to vector<18x18x24xf32>
    %37 = arith.addf %33, %36 : vector<18x18x24xf32>
    %cst_9 = arith.constant 0.000000e+00 : f32
    %38 = vector.broadcast %cst_9 : f32 to vector<18x18x24xf32>
    %39 = arith.maximumf %37, %38 : vector<18x18x24xf32>
    %c0_10 = arith.constant 0 : index
    %c0_11 = arith.constant 0 : index
    %c0_12 = arith.constant 0 : index
    %40 = vector.load %arg10[%c0_10, %c0_11, %c0_12] : memref<18x18x24xf32, #tpu.memory_space<vmem>>, vector<18x18x24xf32>
    tpu.vector_store %arg10[%c0_10, %c0_11, %c0_12], %39 {strides = array<i32>} : memref<18x18x24xf32, #tpu.memory_space<vmem>>, vector<18x18x24xf32>,
    %cst_13 = arith.constant 0.000000e+00 : f32
    %41 = vector.broadcast %cst_13 : f32 to vector<18x1x24xf32>
    %c0_14 = arith.constant 0 : index
    %c0_15 = arith.constant 0 : index
    %c0_16 = arith.constant 0 : index
    %42 = vector.load %arg10[%c0_14, %c0_15, %c0_16] : memref<18x18x24xf32, #tpu.memory_space<vmem>>, vector<18x1x24xf32>
    tpu.vector_store %arg10[%c0_14, %c0_15, %c0_16], %41 {strides = array<i32>} : memref<18x18x24xf32, #tpu.memory_space<vmem>>, vector<18x1x24xf32>,
    %c0_17 = arith.constant 0 : index
    %c17 = arith.constant 17 : index
    %c0_18 = arith.constant 0 : index
    %43 = vector.load %arg10[%c0_17, %c17, %c0_18] : memref<18x18x24xf32, #tpu.memory_space<vmem>>, vector<18x1x24xf32>
    tpu.vector_store %arg10[%c0_17, %c17, %c0_18], %41 {strides = array<i32>} : memref<18x18x24xf32, #tpu.memory_space<vmem>>, vector<18x1x24xf32>,
    %cst_19 = arith.constant 0.000000e+00 : f32
    %44 = vector.broadcast %cst_19 : f32 to vector<1x18x24xf32>
    %c0_i32 = arith.constant 0 : i32
    %45 = arith.cmpi eq, %1, %c0_i32 : i32
    %46 = arith.extui %45 : i1 to i32
    %c0_i32_20 = arith.constant 0 : i32
    %47 = arith.cmpi ne, %46, %c0_i32_20 : i32
    scf.if %47 {
      %c0_75 = arith.constant 0 : index
      %c0_76 = arith.constant 0 : index
      %c0_77 = arith.constant 0 : index
      %124 = vector.load %arg10[%c0_75, %c0_76, %c0_77] : memref<18x18x24xf32, #tpu.memory_space<vmem>>, vector<1x18x24xf32>
      tpu.vector_store %arg10[%c0_75, %c0_76, %c0_77], %44 {strides = array<i32>} : memref<18x18x24xf32, #tpu.memory_space<vmem>>, vector<1x18x24xf32>,
    } else {
    }
    %c18_i32 = arith.constant 18 : i32
    %48 = arith.addi %1, %c18_i32 : i32
    %c1_i32 = arith.constant 1 : i32
    %49 = arith.subi %48, %c1_i32 : i32
    %c17_i32 = arith.constant 17 : i32
    %50 = arith.cmpi eq, %49, %c17_i32 : i32
    %51 = arith.extui %50 : i1 to i32
    %c0_i32_21 = arith.constant 0 : i32
    %52 = arith.cmpi ne, %51, %c0_i32_21 : i32
    scf.if %52 {
      %c17_75 = arith.constant 17 : index
      %c0_76 = arith.constant 0 : index
      %c0_77 = arith.constant 0 : index
      %124 = vector.load %arg10[%c17_75, %c0_76, %c0_77] : memref<18x18x24xf32, #tpu.memory_space<vmem>>, vector<1x18x24xf32>
      tpu.vector_store %arg10[%c17_75, %c0_76, %c0_77], %44 {strides = array<i32>} : memref<18x18x24xf32, #tpu.memory_space<vmem>>, vector<1x18x24xf32>,
    } else {
    }
    %cst_22 = arith.constant 0.000000e+00 : f32
    %53 = vector.broadcast %cst_22 : f32 to vector<16x16x24xf32>
    %c0_23 = arith.constant 0 : index
    %c0_24 = arith.constant 0 : index
    %c0_25 = arith.constant 0 : index
    %54 = vector.load %arg10[%c0_23, %c0_24, %c0_25] : memref<18x18x24xf32, #tpu.memory_space<vmem>>, vector<18x16x24xf32>
    %55 = vector.extract_strided_slice %54 {offsets = [0, 0, 0], sizes = [16, 16, 24], strides = [1, 1, 1]} : vector<18x16x24xf32> to vector<16x16x24xf32>
    %c0_26 = arith.constant 0 : index
    %c0_27 = arith.constant 0 : index
    %c0_28 = arith.constant 0 : index
    %56 = vector.load %arg5[%c0_26, %c0_27, %c0_28] : memref<3x3x24xf32, #tpu.memory_space<vmem>>, vector<1x1x24xf32>
    %57 = vector.broadcast %56 : vector<1x1x24xf32> to vector<16x16x24xf32>
    %58 = arith.mulf %55, %57 : vector<16x16x24xf32>
    %59 = arith.addf %53, %58 : vector<16x16x24xf32>
    %60 = vector.extract_strided_slice %54 {offsets = [1, 0, 0], sizes = [16, 16, 24], strides = [1, 1, 1]} : vector<18x16x24xf32> to vector<16x16x24xf32>
    %c1_29 = arith.constant 1 : index
    %c0_30 = arith.constant 0 : index
    %c0_31 = arith.constant 0 : index
    %61 = vector.load %arg5[%c1_29, %c0_30, %c0_31] : memref<3x3x24xf32, #tpu.memory_space<vmem>>, vector<1x1x24xf32>
    %62 = vector.broadcast %61 : vector<1x1x24xf32> to vector<16x16x24xf32>
    %63 = arith.mulf %60, %62 : vector<16x16x24xf32>
    %64 = arith.addf %59, %63 : vector<16x16x24xf32>
    %65 = vector.extract_strided_slice %54 {offsets = [2, 0, 0], sizes = [16, 16, 24], strides = [1, 1, 1]} : vector<18x16x24xf32> to vector<16x16x24xf32>
    %c2_32 = arith.constant 2 : index
    %c0_33 = arith.constant 0 : index
    %c0_34 = arith.constant 0 : index
    %66 = vector.load %arg5[%c2_32, %c0_33, %c0_34] : memref<3x3x24xf32, #tpu.memory_space<vmem>>, vector<1x1x24xf32>
    %67 = vector.broadcast %66 : vector<1x1x24xf32> to vector<16x16x24xf32>
    %68 = arith.mulf %65, %67 : vector<16x16x24xf32>
    %69 = arith.addf %64, %68 : vector<16x16x24xf32>
    %c0_35 = arith.constant 0 : index
    %c1_36 = arith.constant 1 : index
    %c0_37 = arith.constant 0 : index
    %70 = vector.load %arg10[%c0_35, %c1_36, %c0_37] : memref<18x18x24xf32, #tpu.memory_space<vmem>>, vector<18x16x24xf32>
    %71 = vector.extract_strided_slice %70 {offsets = [0, 0, 0], sizes = [16, 16, 24], strides = [1, 1, 1]} : vector<18x16x24xf32> to vector<16x16x24xf32>
    %c0_38 = arith.constant 0 : index
    %c1_39 = arith.constant 1 : index
    %c0_40 = arith.constant 0 : index
    %72 = vector.load %arg5[%c0_38, %c1_39, %c0_40] : memref<3x3x24xf32, #tpu.memory_space<vmem>>, vector<1x1x24xf32>
    %73 = vector.broadcast %72 : vector<1x1x24xf32> to vector<16x16x24xf32>
    %74 = arith.mulf %71, %73 : vector<16x16x24xf32>
    %75 = arith.addf %69, %74 : vector<16x16x24xf32>
    %76 = vector.extract_strided_slice %70 {offsets = [1, 0, 0], sizes = [16, 16, 24], strides = [1, 1, 1]} : vector<18x16x24xf32> to vector<16x16x24xf32>
    %c1_41 = arith.constant 1 : index
    %c1_42 = arith.constant 1 : index
    %c0_43 = arith.constant 0 : index
    %77 = vector.load %arg5[%c1_41, %c1_42, %c0_43] : memref<3x3x24xf32, #tpu.memory_space<vmem>>, vector<1x1x24xf32>
    %78 = vector.broadcast %77 : vector<1x1x24xf32> to vector<16x16x24xf32>
    %79 = arith.mulf %76, %78 : vector<16x16x24xf32>
    %80 = arith.addf %75, %79 : vector<16x16x24xf32>
    %81 = vector.extract_strided_slice %70 {offsets = [2, 0, 0], sizes = [16, 16, 24], strides = [1, 1, 1]} : vector<18x16x24xf32> to vector<16x16x24xf32>
    %c2_44 = arith.constant 2 : index
    %c1_45 = arith.constant 1 : index
    %c0_46 = arith.constant 0 : index
    %82 = vector.load %arg5[%c2_44, %c1_45, %c0_46] : memref<3x3x24xf32, #tpu.memory_space<vmem>>, vector<1x1x24xf32>
    %83 = vector.broadcast %82 : vector<1x1x24xf32> to vector<16x16x24xf32>
    %84 = arith.mulf %81, %83 : vector<16x16x24xf32>
    %85 = arith.addf %80, %84 : vector<16x16x24xf32>
    %c0_47 = arith.constant 0 : index
    %c2_48 = arith.constant 2 : index
    %c0_49 = arith.constant 0 : index
    %86 = vector.load %arg10[%c0_47, %c2_48, %c0_49] : memref<18x18x24xf32, #tpu.memory_space<vmem>>, vector<18x16x24xf32>
    %87 = vector.extract_strided_slice %86 {offsets = [0, 0, 0], sizes = [16, 16, 24], strides = [1, 1, 1]} : vector<18x16x24xf32> to vector<16x16x24xf32>
    %c0_50 = arith.constant 0 : index
    %c2_51 = arith.constant 2 : index
    %c0_52 = arith.constant 0 : index
    %88 = vector.load %arg5[%c0_50, %c2_51, %c0_52] : memref<3x3x24xf32, #tpu.memory_space<vmem>>, vector<1x1x24xf32>
    %89 = vector.broadcast %88 : vector<1x1x24xf32> to vector<16x16x24xf32>
    %90 = arith.mulf %87, %89 : vector<16x16x24xf32>
    %91 = arith.addf %85, %90 : vector<16x16x24xf32>
    %92 = vector.extract_strided_slice %86 {offsets = [1, 0, 0], sizes = [16, 16, 24], strides = [1, 1, 1]} : vector<18x16x24xf32> to vector<16x16x24xf32>
    %c1_53 = arith.constant 1 : index
    %c2_54 = arith.constant 2 : index
    %c0_55 = arith.constant 0 : index
    %93 = vector.load %arg5[%c1_53, %c2_54, %c0_55] : memref<3x3x24xf32, #tpu.memory_space<vmem>>, vector<1x1x24xf32>
    %94 = vector.broadcast %93 : vector<1x1x24xf32> to vector<16x16x24xf32>
    %95 = arith.mulf %92, %94 : vector<16x16x24xf32>
    %96 = arith.addf %91, %95 : vector<16x16x24xf32>
    %97 = vector.extract_strided_slice %86 {offsets = [2, 0, 0], sizes = [16, 16, 24], strides = [1, 1, 1]} : vector<18x16x24xf32> to vector<16x16x24xf32>
    %c2_56 = arith.constant 2 : index
    %c2_57 = arith.constant 2 : index
    %c0_58 = arith.constant 0 : index
    %98 = vector.load %arg5[%c2_56, %c2_57, %c0_58] : memref<3x3x24xf32, #tpu.memory_space<vmem>>, vector<1x1x24xf32>
    %99 = vector.broadcast %98 : vector<1x1x24xf32> to vector<16x16x24xf32>
    %100 = arith.mulf %97, %99 : vector<16x16x24xf32>
    %101 = arith.addf %96, %100 : vector<16x16x24xf32>
    %c0_59 = arith.constant 0 : index
    %c0_60 = arith.constant 0 : index
    %102 = vector.load %arg6[%c0_59, %c0_60] : memref<1x24xf32, #tpu.memory_space<vmem>>, vector<1x24xf32>
    %103 = vector.shape_cast %102 : vector<1x24xf32> to vector<1x1x24xf32>
    %104 = vector.broadcast %103 : vector<1x1x24xf32> to vector<16x16x24xf32>
    %105 = arith.addf %101, %104 : vector<16x16x24xf32>
    %cst_61 = arith.constant 0.000000e+00 : f32
    %106 = vector.broadcast %cst_61 : f32 to vector<16x16x24xf32>
    %107 = arith.maximumf %105, %106 : vector<16x16x24xf32>
    %108 = vector.shape_cast %107 : vector<16x16x24xf32> to vector<256x24xf32>
    %c0_62 = arith.constant 0 : index
    %c0_63 = arith.constant 0 : index
    %109 = vector.load %arg7[%c0_62, %c0_63] : memref<24x4xf32, #tpu.memory_space<vmem>>, vector<24x4xf32>
    %cst_64 = arith.constant dense<0.000000e+00> : vector<256x4xf32>
    %110 = tpu.matmul %108, %109, %cst_64 {dimension_numbers = #tpu.dot_dimension_numbers<[1], [0], [0], [1], [0, 0, 1, 1], [], []>} : vector<256x24xf32>, vector<24x4xf32>, vector<256x4xf32> -> vector<256x4xf32>
    %111 = vector.shape_cast %110 : vector<256x4xf32> to vector<16x16x4xf32>
    %c0_65 = arith.constant 0 : index
    %c0_66 = arith.constant 0 : index
    %112 = vector.load %arg8[%c0_65, %c0_66] : memref<1x4xf32, #tpu.memory_space<vmem>>, vector<1x4xf32>
    %113 = vector.shape_cast %112 : vector<1x4xf32> to vector<1x1x4xf32>
    %114 = vector.broadcast %113 : vector<1x1x4xf32> to vector<16x16x4xf32>
    %115 = arith.addf %111, %114 : vector<16x16x4xf32>
    %c1_i32_67 = arith.constant 1 : i32
    %116 = arith.addi %1, %c1_i32_67 : i32
    %c0_68 = arith.constant 0 : index
    %117 = arith.index_cast %116 : i32 to index
    %c1_69 = arith.constant 1 : index
    %c0_70 = arith.constant 0 : index
    %118 = vector.load %arg2[%c0_68, %117, %c1_69, %c0_70] : memref<1x18x18x4xf32, #tpu.memory_space<vmem>>, vector<1x16x16x4xf32>
    %119 = vector.shape_cast %118 : vector<1x16x16x4xf32> to vector<16x16x4xf32>
    %120 = arith.addf %115, %119 : vector<16x16x4xf32>
    %c0_71 = arith.constant 0 : index
    %c0_72 = arith.constant 0 : index
    %c0_73 = arith.constant 0 : index
    %c0_74 = arith.constant 0 : index
    %121 = vector.load %arg9[%c0_71, %c0_72, %c0_73, %c0_74] : memref<1x16x16x4xf32, #tpu.memory_space<vmem>>, vector<1x16x16x4xf32>
    %122 = vector.shape_cast %121 : vector<1x16x16x4xf32> to vector<16x16x4xf32>
    %123 = vector.shape_cast %120 : vector<16x16x4xf32> to vector<1x16x16x4xf32>
    tpu.vector_store %arg9[%c0_71, %c0_72, %c0_73, %c0_74], %123 {strides = array<i32>} : memref<1x16x16x4xf32, #tpu.memory_space<vmem>>, vector<1x16x16x4xf32>,
    return
  }
  func.func @transform_0(%arg0: i32, %arg1: i32) -> (i32, i32, i32, i32) {
    %c0_i32 = arith.constant 0 : i32
    %c0_i32_0 = arith.constant 0 : i32
    %c0_i32_1 = arith.constant 0 : i32
    %c0_i32_2 = arith.constant 0 : i32
    return %arg0, %c0_i32, %c0_i32_0, %c0_i32_1 : i32, i32, i32, i32
  }
  func.func @transform_1(%arg0: i32, %arg1: i32) -> (i32, i32) {
    %c0_i32 = arith.constant 0 : i32
    %c0_i32_0 = arith.constant 0 : i32
    %c0_i32_1 = arith.constant 0 : i32
    return %c0_i32, %c0_i32_0 : i32, i32
  }
  func.func @transform_2(%arg0: i32, %arg1: i32) -> (i32, i32) {
    %c0_i32 = arith.constant 0 : i32
    %c0_i32_0 = arith.constant 0 : i32
    %c0_i32_1 = arith.constant 0 : i32
    return %c0_i32, %c0_i32_0 : i32, i32
  }
  func.func @transform_3(%arg0: i32, %arg1: i32) -> (i32, i32, i32) {
    %c0_i32 = arith.constant 0 : i32
    %c0_i32_0 = arith.constant 0 : i32
    %c0_i32_1 = arith.constant 0 : i32
    %c0_i32_2 = arith.constant 0 : i32
    return %c0_i32, %c0_i32_0, %c0_i32_1 : i32, i32, i32
  }
  func.func @transform_4(%arg0: i32, %arg1: i32) -> (i32, i32) {
    %c0_i32 = arith.constant 0 : i32
    %c0_i32_0 = arith.constant 0 : i32
    %c0_i32_1 = arith.constant 0 : i32
    return %c0_i32, %c0_i32_0 : i32, i32
  }
  func.func @transform_5(%arg0: i32, %arg1: i32) -> (i32, i32) {
    %c0_i32 = arith.constant 0 : i32
    %c0_i32_0 = arith.constant 0 : i32
    %c0_i32_1 = arith.constant 0 : i32
    return %c0_i32, %c0_i32_0 : i32, i32
  }
  func.func @transform_6(%arg0: i32, %arg1: i32) -> (i32, i32) {
    %c0_i32 = arith.constant 0 : i32
    %c0_i32_0 = arith.constant 0 : i32
    %c0_i32_1 = arith.constant 0 : i32
    return %c0_i32, %c0_i32_0 : i32, i32
  }
  func.func @transform_7(%arg0: i32, %arg1: i32) -> (i32, i32, i32, i32) {
    %c0_i32 = arith.constant 0 : i32
    %c0_i32_0 = arith.constant 0 : i32
    %c0_i32_1 = arith.constant 0 : i32
    return %arg0, %arg1, %c0_i32, %c0_i32_0 : i32, i32, i32, i32
  }
}

</mosaic_0001>

<llo_original>
// kernel: tpu_custom_call.1
$region0: #{tpu_custom_call.1}
  #allocation0 [shape = 'u32[]', space=smem, size = 0x4, offset = 0x4, fixed_abs, tag = 'smem constant byte address 0x4 - core index']
  #allocation1 [shape = 'u32[144,128]{1,0:T(1,128)}', space=vmem, size = 0x12000, scoped, tag = 'internal scratch']
  #allocation2 [shape = 'f32[18,18,24]{2,1,0:T(8,128)}', space=vmem, size = 0x36000, scoped, tag = 'scratch operand']
  %s0 = inlined_call_operand.vmem [shape: f32[2,18,18,4], index: 0, kind: input, shape index: {}]
  %s1 = inlined_call_operand.vmem [shape: f32[4,24], index: 1, kind: input, shape index: {}]
  %s2 = inlined_call_operand.vmem [shape: f32[1,24], index: 2, kind: input, shape index: {}]
  %s3 = inlined_call_operand.vmem [shape: f32[3,3,24], index: 3, kind: input, shape index: {}]
  %s4 = inlined_call_operand.vmem [shape: f32[1,24], index: 4, kind: input, shape index: {}]
  %s5 = inlined_call_operand.vmem [shape: f32[24,4], index: 5, kind: input, shape index: {}]
  %s6 = inlined_call_operand.vmem [shape: f32[1,4], index: 6, kind: input, shape index: {}]
  %s7 = inlined_call_operand.vmem [shape: f32[2,16,16,4], index: 7, kind: output, shape index: {}]
  %s8 = sld [smem:[#allocation0]]
  $region69: #{tpu_custom_call.1} parent=0
    _
  %s10 = ssub.s32 1, %s8
  %s11 = scalar_select 0, %s10, %s8
  loop: start=0, step=1, limit=4
  $region2: #{tpu_custom_call.1} parent=0 // loop_pre_header
    _
  $region3: #{tpu_custom_call.1} parent=0 // loop_header
    %s13 = sphi 0, %s17
    %p14 = scmp.ge.s32.totalorder %s13, 4
    %s20 = sphi 0, %s32
    %s21 = sphi 0, %s28
    %s22 = sphi 0, %s20
    %s23 = sphi 0, %s21
    %s24 = sphi 0, %s22
    %s25 = sphi 0, %s23
    %s35 = sphi 0, %s37
    %s38 = sphi 0, %s35
    %s39 = sphi 0, %s38
    %s55 = sphi 0, %s39
    %s59 = sphi 0, %s59
    %s61 = sphi 0, %s59
    %s62 = sphi 0, %s61
    %s76 = sphi 0, %s62
    %s80 = sphi 0, %s80
    %s82 = sphi 0, %s80
    %s83 = sphi 0, %s82
    %s97 = sphi 0, %s83
    %s101 = sphi 0, %s101
    %s103 = sphi 0, %s101
    %s104 = sphi 0, %s103
    %s118 = sphi 0, %s104
    %s122 = sphi 0, %s122
    %s124 = sphi 0, %s122
    %s125 = sphi 0, %s124
    %s139 = sphi 0, %s125
    %s143 = sphi 0, %s143
    %s145 = sphi 0, %s143
    %s146 = sphi 0, %s145
    %s160 = sphi 0, %s146
    %s164 = sphi 0, %s164
    %s166 = sphi 0, %s164
    %s167 = sphi 0, %s166
    %s181 = sphi 0, %s167
    %s189 = sphi 0, %s191
    %s192 = sphi 0, %s189
    %s193 = sphi 0, %s192
    %s209 = sphi 0, %s193
  $region4: #{tpu_custom_call.1} parent=0 // loop_header_branch
    %16 = sbr.rel (%p14) target = $region8
  $region5: #{tpu_custom_call.1} parent=0 // loop_body
    %s18 = ssub.s32 %s13, 1
    %s19 = ssub.s32 %s13, 2
    %s26 = sadd.s32 1, %s21
    %p27 = scmp.ge.s32.totalorder %s26, 1
    %s28 = scalar_select %p27, 0, %s26
    %s29 = sadd.s32 1, %s20
    %s30 = scalar_select %p27, %s29, %s20
    %p31 = scmp.ge.s32.totalorder %s30, 2
    %s32 = scalar_select %p31, 0, %s30
    %s33 = ssub.s32 %s20, %s32
    %p34 = scmp.eq.s32.totalorder %s33, 0
    %s36 = sadd.s32 %s35, 1
    %s37 = scalar_select %p34, %s35, %s36
    %p40 = pneg %p34
    %p41 = scmp.eq.s32.totalorder %s13, 1
    %p42 = por %p40, %p41
    %p43 = scmp.ne.s32.totalorder %s35, %s38
    %p44 = scmp.eq.s32.totalorder %s13, 0
    %p45 = por %p43, %p44
    %p46 = scmp.ne.s32.totalorder %s35, %s38
    %p47 = scmp.eq.s32.totalorder %s18, 1
    %p48 = por %p46, %p47
    %p49 = scmp.ne.s32.totalorder %s38, %s39
    %p50 = scmp.eq.s32.totalorder %s18, 0
    %p51 = por %p49, %p50
    %p52 = scmp.ne.s32.totalorder %s38, %s39
    %p53 = scmp.eq.s32.totalorder %s19, 1
    %p54 = por %p52, %p53
    %p56 = scmp.ne.s32.totalorder %s39, %s55
    %p57 = scmp.eq.s32.totalorder %s19, 0
    %p58 = por %p56, %p57
    %s60 = sadd.s32 %s59, 1
    %p63 = scmp.eq.s32.totalorder %s13, 1
    %p64 = scmp.ne.s32.totalorder %s59, %s61
    %p65 = scmp.eq.s32.totalorder %s13, 0
    %p66 = por %p64, %p65
    %p67 = scmp.ne.s32.totalorder %s59, %s61
    %p68 = scmp.eq.s32.totalorder %s18, 1
    %p69 = por %p67, %p68
    %p70 = scmp.ne.s32.totalorder %s61, %s62
    %p71 = scmp.eq.s32.totalorder %s18, 0
    %p72 = por %p70, %p71
    %p73 = scmp.ne.s32.totalorder %s61, %s62
    %p74 = scmp.eq.s32.totalorder %s19, 1
    %p75 = por %p73, %p74
    %p77 = scmp.ne.s32.totalorder %s62, %s76
    %p78 = scmp.eq.s32.totalorder %s19, 0
    %p79 = por %p77, %p78
    %s81 = sadd.s32 %s80, 1
    %p84 = scmp.eq.s32.totalorder %s13, 1
    %p85 = scmp.ne.s32.totalorder %s80, %s82
    %p86 = scmp.eq.s32.totalorder %s13, 0
    %p87 = por %p85, %p86
    %p88 = scmp.ne.s32.totalorder %s80, %s82
    %p89 = scmp.eq.s32.totalorder %s18, 1
    %p90 = por %p88, %p89
    %p91 = scmp.ne.s32.totalorder %s82, %s83
    %p92 = scmp.eq.s32.totalorder %s18, 0
    %p93 = por %p91, %p92
    %p94 = scmp.ne.s32.totalorder %s82, %s83
    %p95 = scmp.eq.s32.totalorder %s19, 1
    %p96 = por %p94, %p95
    %p98 = scmp.ne.s32.totalorder %s83, %s97
    %p99 = scmp.eq.s32.totalorder %s19, 0
    %p100 = por %p98, %p99
    %s102 = sadd.s32 %s101, 1
    %p105 = scmp.eq.s32.totalorder %s13, 1
    %p106 = scmp.ne.s32.totalorder %s101, %s103
    %p107 = scmp.eq.s32.totalorder %s13, 0
    %p108 = por %p106, %p107
    %p109 = scmp.ne.s32.totalorder %s101, %s103
    %p110 = scmp.eq.s32.totalorder %s18, 1
    %p111 = por %p109, %p110
    %p112 = scmp.ne.s32.totalorder %s103, %s104
    %p113 = scmp.eq.s32.totalorder %s18, 0
    %p114 = por %p112, %p113
    %p115 = scmp.ne.s32.totalorder %s103, %s104
    %p116 = scmp.eq.s32.totalorder %s19, 1
    %p117 = por %p115, %p116
    %p119 = scmp.ne.s32.totalorder %s104, %s118
    %p120 = scmp.eq.s32.totalorder %s19, 0
    %p121 = por %p119, %p120
    %s123 = sadd.s32 %s122, 1
    %p126 = scmp.eq.s32.totalorder %s13, 1
    %p127 = scmp.ne.s32.totalorder %s122, %s124
    %p128 = scmp.eq.s32.totalorder %s13, 0
    %p129 = por %p127, %p128
    %p130 = scmp.ne.s32.totalorder %s122, %s124
    %p131 = scmp.eq.s32.totalorder %s18, 1
    %p132 = por %p130, %p131
    %p133 = scmp.ne.s32.totalorder %s124, %s125
    %p134 = scmp.eq.s32.totalorder %s18, 0
    %p135 = por %p133, %p134
    %p136 = scmp.ne.s32.totalorder %s124, %s125
    %p137 = scmp.eq.s32.totalorder %s19, 1
    %p138 = por %p136, %p137
    %p140 = scmp.ne.s32.totalorder %s125, %s139
    %p141 = scmp.eq.s32.totalorder %s19, 0
    %p142 = por %p140, %p141
    %s144 = sadd.s32 %s143, 1
    %p147 = scmp.eq.s32.totalorder %s13, 1
    %p148 = scmp.ne.s32.totalorder %s143, %s145
    %p149 = scmp.eq.s32.totalorder %s13, 0
    %p150 = por %p148, %p149
    %p151 = scmp.ne.s32.totalorder %s143, %s145
    %p152 = scmp.eq.s32.totalorder %s18, 1
    %p153 = por %p151, %p152
    %p154 = scmp.ne.s32.totalorder %s145, %s146
    %p155 = scmp.eq.s32.totalorder %s18, 0
    %p156 = por %p154, %p155
    %p157 = scmp.ne.s32.totalorder %s145, %s146
    %p158 = scmp.eq.s32.totalorder %s19, 1
    %p159 = por %p157, %p158
    %p161 = scmp.ne.s32.totalorder %s146, %s160
    %p162 = scmp.eq.s32.totalorder %s19, 0
    %p163 = por %p161, %p162
    %s165 = sadd.s32 %s164, 1
    %p168 = scmp.eq.s32.totalorder %s13, 1
    %p169 = scmp.ne.s32.totalorder %s164, %s166
    %p170 = scmp.eq.s32.totalorder %s13, 0
    %p171 = por %p169, %p170
    %p172 = scmp.ne.s32.totalorder %s164, %s166
    %p173 = scmp.eq.s32.totalorder %s18, 1
    %p174 = por %p172, %p173
    %p175 = scmp.ne.s32.totalorder %s166, %s167
    %p176 = scmp.eq.s32.totalorder %s18, 0
    %p177 = por %p175, %p176
    %p178 = scmp.ne.s32.totalorder %s166, %s167
    %p179 = scmp.eq.s32.totalorder %s19, 1
    %p180 = por %p178, %p179
    %p182 = scmp.ne.s32.totalorder %s167, %s181
    %p183 = scmp.eq.s32.totalorder %s19, 0
    %p184 = por %p182, %p183
    %s185 = ssub.s32 %s20, %s32
    %s186 = ssub.s32 %s21, %s28
    %s187 = sor.u32 %s185, %s186
    %p188 = scmp.eq.s32.totalorder %s187, 0
    %s190 = sadd.s32 %s189, 1
    %s191 = scalar_select %p188, %s189, %s190
    %p194 = pneg %p188
    %p195 = scmp.eq.s32.totalorder %s13, 1
    %p196 = por %p194, %p195
    %p197 = scmp.ne.s32.totalorder %s189, %s192
    %p198 = scmp.eq.s32.totalorder %s13, 0
    %p199 = por %p197, %p198
    %p200 = scmp.ne.s32.totalorder %s189, %s192
    %p201 = scmp.eq.s32.totalorder %s18, 1
    %p202 = por %p200, %p201
    %p203 = scmp.ne.s32.totalorder %s192, %s193
    %p204 = scmp.eq.s32.totalorder %s18, 0
    %p205 = por %p203, %p204
    %p206 = scmp.ne.s32.totalorder %s192, %s193
    %p207 = scmp.eq.s32.totalorder %s19, 1
    %p208 = por %p206, %p207
    %p210 = scmp.ne.s32.totalorder %s193, %s209
    %p211 = scmp.eq.s32.totalorder %s19, 0
    %p212 = por %p210, %p211
    %p213 = scmp.le.s32.totalorder 1, %s13
    %p214 = scmp.lt.s32.totalorder %s13, 3
    %p215 = pnand %p213, %p214
    %p216 = pneg %p215
    // Predicated region
    $region9: #{tpu_custom_call.1} parent=5 // pred_check
      _
    $region10: #{tpu_custom_call.1} parent=5 // pred_check_branch
      %218 = sbr.rel (%p215) target = $region12
    $region11: #{tpu_custom_call.1} parent=5 // pred_region
      %s219 = ssub.s32 %s13, 1
      // Predicated region
      $region13: #{tpu_custom_call.1} parent=11 // pred_check
        %p220 = pneg %p72
      $region14: #{tpu_custom_call.1} parent=11 // pred_check_branch
        %222 = sbr.rel (%p220) target = $region16
      $region15: #{tpu_custom_call.1} parent=11 // pred_region
        _
      $region16: #{tpu_custom_call.1} parent=11 // pred_fallthru
        _
      // Predicated region
      $region17: #{tpu_custom_call.1} parent=11 // pred_check
        %p223 = pneg %p93
      $region18: #{tpu_custom_call.1} parent=11 // pred_check_branch
        %225 = sbr.rel (%p223) target = $region20
      $region19: #{tpu_custom_call.1} parent=11 // pred_region
        _
      $region20: #{tpu_custom_call.1} parent=11 // pred_fallthru
        _
      // Predicated region
      $region21: #{tpu_custom_call.1} parent=11 // pred_check
        %p226 = pneg %p114
      $region22: #{tpu_custom_call.1} parent=11 // pred_check_branch
        %228 = sbr.rel (%p226) target = $region24
      $region23: #{tpu_custom_call.1} parent=11 // pred_region
        _
      $region24: #{tpu_custom_call.1} parent=11 // pred_fallthru
        _
      // Predicated region
      $region25: #{tpu_custom_call.1} parent=11 // pred_check
        %p229 = pneg %p135
      $region26: #{tpu_custom_call.1} parent=11 // pred_check_branch
        %231 = sbr.rel (%p229) target = $region28
      $region27: #{tpu_custom_call.1} parent=11 // pred_region
        _
      $region28: #{tpu_custom_call.1} parent=11 // pred_fallthru
        _
      // Predicated region
      $region29: #{tpu_custom_call.1} parent=11 // pred_check
        %p232 = pneg %p156
      $region30: #{tpu_custom_call.1} parent=11 // pred_check_branch
        %234 = sbr.rel (%p232) target = $region32
      $region31: #{tpu_custom_call.1} parent=11 // pred_region
        _
      $region32: #{tpu_custom_call.1} parent=11 // pred_fallthru
        _
      // Predicated region
      $region33: #{tpu_custom_call.1} parent=11 // pred_check
        %p235 = pneg %p177
      $region34: #{tpu_custom_call.1} parent=11 // pred_check_branch
        %237 = sbr.rel (%p235) target = $region36
      $region35: #{tpu_custom_call.1} parent=11 // pred_region
        _
      $region36: #{tpu_custom_call.1} parent=11 // pred_fallthru
        _
    $region12: #{tpu_custom_call.1} parent=5 // pred_fallthru
      _
    %p238 = scmp.lt.s32.totalorder %s13, 2
    // Predicated region
    $region37: #{tpu_custom_call.1} parent=5 // pred_check
      %p239 = pneg %p238
    $region38: #{tpu_custom_call.1} parent=5 // pred_check_branch
      %241 = sbr.rel (%p239) target = $region40
    $region39: #{tpu_custom_call.1} parent=5 // pred_region
      // Predicated region
      $region41: #{tpu_custom_call.1} parent=39 // pred_check
        %p242 = pneg %p45
      $region42: #{tpu_custom_call.1} parent=39 // pred_check_branch
        %244 = sbr.rel (%p242) target = $region44
      $region43: #{tpu_custom_call.1} parent=39 // pred_region
        %p245 = scmp.lt.s32.totalorder %s20, 1
        %s246 = scalar_select %p245, %s20, 1
        %s247 = smul.addr %s246, 54
        %s248 = smul.addr %s247, 8
        %s249 = scalar_lea.vmem %s0, %s248
      $region44: #{tpu_custom_call.1} parent=39 // pred_fallthru
        _
    $region40: #{tpu_custom_call.1} parent=5 // pred_fallthru
      _
    %p250 = scmp.le.s32.totalorder 1, %s13
    %p251 = scmp.lt.s32.totalorder %s13, 3
    %p252 = pnand %p250, %p251
    %p253 = pneg %p252
    // Predicated region
    $region45: #{tpu_custom_call.1} parent=5 // pred_check
      _
    $region46: #{tpu_custom_call.1} parent=5 // pred_check_branch
      %255 = sbr.rel (%p252) target = $region48
    $region47: #{tpu_custom_call.1} parent=5 // pred_region
      %s256 = ssub.s32 %s13, 1
      %p257 = scmp.lt.s32.totalorder %s22, 1
      %s258 = scalar_select %p257, %s22, 1
      %s259 = smul.addr %s258, 54
      %s260 = smul.addr %s259, 8
      %s261 = scalar_lea.vmem %s0, %s260
      %p262 = pneg %p51
      %p263 = pneg %p48
      %p264 = pneg %p72
      %p265 = pneg %p69
      %p266 = pneg %p93
      %p267 = pneg %p90
      %p268 = pneg %p114
      %p269 = pneg %p111
      %p270 = pneg %p135
      %p271 = pneg %p132
      %p272 = pneg %p156
      %p273 = pneg %p153
      %p274 = pneg %p177
      %p275 = pneg %p174
      %p276 = pneg %p205
      %p277 = pneg %p202
      %s278 = smul.u32 16, %s23
      %p279 = scmp.lt.s32.totalorder %s22, 1
      %s280 = scalar_select %p279, %s22, 1
      %p281 = scmp.lt.s32.totalorder %s278, 15
      %s282 = scalar_select %p281, %s278, 15
      %s283 = smul.addr %s282, 2
      %s284 = smul.addr %s280, 32
      %s285 = sadd.s32 %s283, %s284
      %s286 = smul.addr %s285, 8
      %s287 = scalar_lea.vmem %s7, %s286
      %p288 = scmp.lt.s32.totalorder %s22, 1
      %s289 = scalar_select %p288, %s22, 1
      %s290 = smul.addr %s289, 54
      %s291 = smul.addr %s290, 8
      %s292 = scalar_lea.vmem %s0, %s291
      %s293 = smul.u32 16, %s23
      %p294 = scmp.lt.s32.totalorder %s22, 1
      %s295 = scalar_select %p294, %s22, 1
      %p296 = scmp.lt.s32.totalorder %s293, 15
      %s297 = scalar_select %p296, %s293, 15
      %s298 = smul.addr %s297, 2
      %s299 = smul.addr %s295, 32
      %s300 = sadd.s32 %s298, %s299
      %s301 = smul.addr %s300, 8
      %s302 = scalar_lea.vmem %s7, %s301
      %s303 = smul.u32 16, %s23
      %s304 = smul.u32 %s23, 16
      %s305 = smul.u32 %s304, 24
      %s306 = scalar_lea.vmem %s292, %s305
      %v307 = vld [vmem:[%s306] sm:$0xff]
      %v308 = vld [vmem:[%s306 + $0x8] sm:$0xff]
      %v309 = vld [vmem:[%s306 + $0x10] sm:$0x3]
      %v310 = vld [vmem:[%s306 + $0x18] sm:$0xff]
      %v311 = vld [vmem:[%s306 + $0x20] sm:$0xff]
      %v312 = vld [vmem:[%s306 + $0x28] sm:$0x3]
      %v313 = vld [vmem:[%s306 + $0x30] sm:$0xff]
      %v314 = vld [vmem:[%s306 + $0x38] sm:$0xff]
      %v315 = vld [vmem:[%s306 + $0x40] sm:$0x3]
      %v316 = vld [vmem:[%s306 + $0x48] sm:$0xff]
      %v317 = vld [vmem:[%s306 + $0x50] sm:$0xff]
      %v318 = vld [vmem:[%s306 + $0x58] sm:$0x3]
      %v319 = vld [vmem:[%s306 + $0x60] sm:$0xff]
      %v320 = vld [vmem:[%s306 + $0x68] sm:$0xff]
      %v321 = vld [vmem:[%s306 + $0x70] sm:$0x3]
      %v322 = vld [vmem:[%s306 + $0x78] sm:$0xff]
      %v323 = vld [vmem:[%s306 + $0x80] sm:$0xff]
      %v324 = vld [vmem:[%s306 + $0x88] sm:$0x3]
      %v325 = vld [vmem:[%s306 + $0x90] sm:$0xff]
      %v326 = vld [vmem:[%s306 + $0x98] sm:$0xff]
      %v327 = vld [vmem:[%s306 + $0xa0] sm:$0x3]
      %v328 = vld [vmem:[%s306 + $0xa8] sm:$0xff]
      %v329 = vld [vmem:[%s306 + $0xb0] sm:$0xff]
      %v330 = vld [vmem:[%s306 + $0xb8] sm:$0x3]
      %v331 = vld [vmem:[%s306 + $0xc0] sm:$0xff]
      %v332 = vld [vmem:[%s306 + $0xc8] sm:$0xff]
      %v333 = vld [vmem:[%s306 + $0xd0] sm:$0x3]
      %v334 = vld [vmem:[%s306 + $0xd8] sm:$0xff]
      %v335 = vld [vmem:[%s306 + $0xe0] sm:$0xff]
      %v336 = vld [vmem:[%s306 + $0xe8] sm:$0x3]
      %v337 = vld [vmem:[%s306 + $0xf0] sm:$0xff]
      %v338 = vld [vmem:[%s306 + $0xf8] sm:$0xff]
      %v339 = vld [vmem:[%s306 + $0x100] sm:$0x3]
      %v340 = vld [vmem:[%s306 + $0x108] sm:$0xff]
      %v341 = vld [vmem:[%s306 + $0x110] sm:$0xff]
      %v342 = vld [vmem:[%s306 + $0x118] sm:$0x3]
      %v343 = vld [vmem:[%s306 + $0x120] sm:$0xff]
      %v344 = vld [vmem:[%s306 + $0x128] sm:$0xff]
      %v345 = vld [vmem:[%s306 + $0x130] sm:$0x3]
      %v346 = vld [vmem:[%s306 + $0x138] sm:$0xff]
      %v347 = vld [vmem:[%s306 + $0x140] sm:$0xff]
      %v348 = vld [vmem:[%s306 + $0x148] sm:$0x3]
      %v349 = vld [vmem:[%s306 + $0x150] sm:$0xff]
      %v350 = vld [vmem:[%s306 + $0x158] sm:$0xff]
      %v351 = vld [vmem:[%s306 + $0x160] sm:$0x3]
      %v352 = vld [vmem:[%s306 + $0x168] sm:$0xff]
      %v353 = vld [vmem:[%s306 + $0x170] sm:$0xff]
      %v354 = vld [vmem:[%s306 + $0x178] sm:$0x3]
      %v355 = vld [vmem:[%s306 + $0x180] sm:$0xff]
      %v356 = vld [vmem:[%s306 + $0x188] sm:$0xff]
      %v357 = vld [vmem:[%s306 + $0x190] sm:$0x3]
      %v358 = vld [vmem:[%s306 + $0x198] sm:$0xff]
      %v359 = vld [vmem:[%s306 + $0x1a0] sm:$0xff]
      %v360 = vld [vmem:[%s306 + $0x1a8] sm:$0x3]
      %v361 = vld [vmem:[%s1] sm:$0x1]
      %363 = vset.pattern.permute.xlu0 0
      %364 = vperm.xlu0 %363, %v307
      %v365 = vpop.permute.xlu0 %364
      %368 = vset.pattern.permute.xlu0 0
      %369 = vperm.xlu0 %368, %v308
      %v370 = vpop.permute.xlu0 %369
      %373 = vset.pattern.permute.xlu0 0
      %374 = vperm.xlu0 %373, %v309
      %v375 = vpop.permute.xlu0 %374
      %378 = vset.pattern.permute.xlu0 0
      %379 = vperm.xlu0 %378, %v310
      %v380 = vpop.permute.xlu0 %379
      %383 = vset.pattern.permute.xlu0 0
      %384 = vperm.xlu0 %383, %v311
      %v385 = vpop.permute.xlu0 %384
      %388 = vset.pattern.permute.xlu0 0
      %389 = vperm.xlu0 %388, %v312
      %v390 = vpop.permute.xlu0 %389
      %393 = vset.pattern.permute.xlu0 0
      %394 = vperm.xlu0 %393, %v313
      %v395 = vpop.permute.xlu0 %394
      %398 = vset.pattern.permute.xlu0 0
      %399 = vperm.xlu0 %398, %v314
      %v400 = vpop.permute.xlu0 %399
      %403 = vset.pattern.permute.xlu0 0
      %404 = vperm.xlu0 %403, %v315
      %v405 = vpop.permute.xlu0 %404
      %408 = vset.pattern.permute.xlu0 0
      %409 = vperm.xlu0 %408, %v316
      %v410 = vpop.permute.xlu0 %409
      %413 = vset.pattern.permute.xlu0 0
      %414 = vperm.xlu0 %413, %v317
      %v415 = vpop.permute.xlu0 %414
      %418 = vset.pattern.permute.xlu0 0
      %419 = vperm.xlu0 %418, %v318
      %v420 = vpop.permute.xlu0 %419
      %423 = vset.pattern.permute.xlu0 0
      %424 = vperm.xlu0 %423, %v319
      %v425 = vpop.permute.xlu0 %424
      %428 = vset.pattern.permute.xlu0 0
      %429 = vperm.xlu0 %428, %v320
      %v430 = vpop.permute.xlu0 %429
      %433 = vset.pattern.permute.xlu0 0
      %434 = vperm.xlu0 %433, %v321
      %v435 = vpop.permute.xlu0 %434
      %438 = vset.pattern.permute.xlu0 0
      %439 = vperm.xlu0 %438, %v322
      %v440 = vpop.permute.xlu0 %439
      %443 = vset.pattern.permute.xlu0 0
      %444 = vperm.xlu0 %443, %v323
      %v445 = vpop.permute.xlu0 %444
      %448 = vset.pattern.permute.xlu0 0
      %449 = vperm.xlu0 %448, %v324
      %v450 = vpop.permute.xlu0 %449
      %453 = vset.pattern.permute.xlu0 0
      %454 = vperm.xlu0 %453, %v325
      %v455 = vpop.permute.xlu0 %454
      %458 = vset.pattern.permute.xlu0 0
      %459 = vperm.xlu0 %458, %v326
      %v460 = vpop.permute.xlu0 %459
      %463 = vset.pattern.permute.xlu0 0
      %464 = vperm.xlu0 %463, %v327
      %v465 = vpop.permute.xlu0 %464
      %468 = vset.pattern.permute.xlu0 0
      %469 = vperm.xlu0 %468, %v328
      %v470 = vpop.permute.xlu0 %469
      %473 = vset.pattern.permute.xlu0 0
      %474 = vperm.xlu0 %473, %v329
      %v475 = vpop.permute.xlu0 %474
      %478 = vset.pattern.permute.xlu0 0
      %479 = vperm.xlu0 %478, %v330
      %v480 = vpop.permute.xlu0 %479
      %483 = vset.pattern.permute.xlu0 0
      %484 = vperm.xlu0 %483, %v331
      %v485 = vpop.permute.xlu0 %484
      %488 = vset.pattern.permute.xlu0 0
      %489 = vperm.xlu0 %488, %v332
      %v490 = vpop.permute.xlu0 %489
      %493 = vset.pattern.permute.xlu0 0
      %494 = vperm.xlu0 %493, %v333
      %v495 = vpop.permute.xlu0 %494
      %498 = vset.pattern.permute.xlu0 0
      %499 = vperm.xlu0 %498, %v334
      %v500 = vpop.permute.xlu0 %499
      %503 = vset.pattern.permute.xlu0 0
      %504 = vperm.xlu0 %503, %v335
      %v505 = vpop.permute.xlu0 %504
      %508 = vset.pattern.permute.xlu0 0
      %509 = vperm.xlu0 %508, %v336
      %v510 = vpop.permute.xlu0 %509
      %513 = vset.pattern.permute.xlu0 0
      %514 = vperm.xlu0 %513, %v337
      %v515 = vpop.permute.xlu0 %514
      %518 = vset.pattern.permute.xlu0 0
      %519 = vperm.xlu0 %518, %v338
      %v520 = vpop.permute.xlu0 %519
      %523 = vset.pattern.permute.xlu0 0
      %524 = vperm.xlu0 %523, %v339
      %v525 = vpop.permute.xlu0 %524
      %528 = vset.pattern.permute.xlu0 0
      %529 = vperm.xlu0 %528, %v340
      %v530 = vpop.permute.xlu0 %529
      %533 = vset.pattern.permute.xlu0 0
      %534 = vperm.xlu0 %533, %v341
      %v535 = vpop.permute.xlu0 %534
      %538 = vset.pattern.permute.xlu0 0
      %539 = vperm.xlu0 %538, %v342
      %v540 = vpop.permute.xlu0 %539
      %543 = vset.pattern.permute.xlu0 0
      %544 = vperm.xlu0 %543, %v343
      %v545 = vpop.permute.xlu0 %544
      %548 = vset.pattern.permute.xlu0 0
      %549 = vperm.xlu0 %548, %v344
      %v550 = vpop.permute.xlu0 %549
      %553 = vset.pattern.permute.xlu0 0
      %554 = vperm.xlu0 %553, %v345
      %v555 = vpop.permute.xlu0 %554
      %558 = vset.pattern.permute.xlu0 0
      %559 = vperm.xlu0 %558, %v346
      %v560 = vpop.permute.xlu0 %559
      %563 = vset.pattern.permute.xlu0 0
      %564 = vperm.xlu0 %563, %v347
      %v565 = vpop.permute.xlu0 %564
      %568 = vset.pattern.permute.xlu0 0
      %569 = vperm.xlu0 %568, %v348
      %v570 = vpop.permute.xlu0 %569
      %573 = vset.pattern.permute.xlu0 0
      %574 = vperm.xlu0 %573, %v349
      %v575 = vpop.permute.xlu0 %574
      %578 = vset.pattern.permute.xlu0 0
      %579 = vperm.xlu0 %578, %v350
      %v580 = vpop.permute.xlu0 %579
      %583 = vset.pattern.permute.xlu0 0
      %584 = vperm.xlu0 %583, %v351
      %v585 = vpop.permute.xlu0 %584
      %588 = vset.pattern.permute.xlu0 0
      %589 = vperm.xlu0 %588, %v352
      %v590 = vpop.permute.xlu0 %589
      %593 = vset.pattern.permute.xlu0 0
      %594 = vperm.xlu0 %593, %v353
      %v595 = vpop.permute.xlu0 %594
      %598 = vset.pattern.permute.xlu0 0
      %599 = vperm.xlu0 %598, %v354
      %v600 = vpop.permute.xlu0 %599
      %603 = vset.pattern.permute.xlu0 0
      %604 = vperm.xlu0 %603, %v355
      %v605 = vpop.permute.xlu0 %604
      %608 = vset.pattern.permute.xlu0 0
      %609 = vperm.xlu0 %608, %v356
      %v610 = vpop.permute.xlu0 %609
      %613 = vset.pattern.permute.xlu0 0
      %614 = vperm.xlu0 %613, %v357
      %v615 = vpop.permute.xlu0 %614
      %618 = vset.pattern.permute.xlu0 0
      %619 = vperm.xlu0 %618, %v358
      %v620 = vpop.permute.xlu0 %619
      %623 = vset.pattern.permute.xlu0 0
      %624 = vperm.xlu0 %623, %v359
      %v625 = vpop.permute.xlu0 %624
      %628 = vset.pattern.permute.xlu0 0
      %629 = vperm.xlu0 %628, %v360
      %v630 = vpop.permute.xlu0 %629
      %v632 = vlaneseq
      %v633 = vshrl.u32 %v632, 7
      %v634 = vsub.s32 0, %v633
      %v635 = vrot.slane %v361, %v634
      %v636 = vmul.f32 %v365, %v635
      %v637 = vmul.f32 %v370, %v635
      %v638 = vmul.f32 %v375, %v635
      %v639 = vmul.f32 %v380, %v635
      %v640 = vmul.f32 %v385, %v635
      %v641 = vmul.f32 %v390, %v635
      %v642 = vmul.f32 %v395, %v635
      %v643 = vmul.f32 %v400, %v635
      %v644 = vmul.f32 %v405, %v635
      %v645 = vmul.f32 %v410, %v635
      %v646 = vmul.f32 %v415, %v635
      %v647 = vmul.f32 %v420, %v635
      %v648 = vmul.f32 %v425, %v635
      %v649 = vmul.f32 %v430, %v635
      %v650 = vmul.f32 %v435, %v635
      %v651 = vmul.f32 %v440, %v635
      %v652 = vmul.f32 %v445, %v635
      %v653 = vmul.f32 %v450, %v635
      %v654 = vmul.f32 %v455, %v635
      %v655 = vmul.f32 %v460, %v635
      %v656 = vmul.f32 %v465, %v635
      %v657 = vmul.f32 %v470, %v635
      %v658 = vmul.f32 %v475, %v635
      %v659 = vmul.f32 %v480, %v635
      %v660 = vmul.f32 %v485, %v635
      %v661 = vmul.f32 %v490, %v635
      %v662 = vmul.f32 %v495, %v635
      %v663 = vmul.f32 %v500, %v635
      %v664 = vmul.f32 %v505, %v635
      %v665 = vmul.f32 %v510, %v635
      %v666 = vmul.f32 %v515, %v635
      %v667 = vmul.f32 %v520, %v635
      %v668 = vmul.f32 %v525, %v635
      %v669 = vmul.f32 %v530, %v635
      %v670 = vmul.f32 %v535, %v635
      %v671 = vmul.f32 %v540, %v635
      %v672 = vmul.f32 %v545, %v635
      %v673 = vmul.f32 %v550, %v635
      %v674 = vmul.f32 %v555, %v635
      %v675 = vmul.f32 %v560, %v635
      %v676 = vmul.f32 %v565, %v635
      %v677 = vmul.f32 %v570, %v635
      %v678 = vmul.f32 %v575, %v635
      %v679 = vmul.f32 %v580, %v635
      %v680 = vmul.f32 %v585, %v635
      %v681 = vmul.f32 %v590, %v635
      %v682 = vmul.f32 %v595, %v635
      %v683 = vmul.f32 %v600, %v635
      %v684 = vmul.f32 %v605, %v635
      %v685 = vmul.f32 %v610, %v635
      %v686 = vmul.f32 %v615, %v635
      %v687 = vmul.f32 %v620, %v635
      %v688 = vmul.f32 %v625, %v635
      %v689 = vmul.f32 %v630, %v635
      %v690 = vadd.f32 %v636, 0.0
      %v691 = vadd.f32 %v637, 0.0
      %v692 = vadd.f32 %v638, 0.0
      %v693 = vadd.f32 %v639, 0.0
      %v694 = vadd.f32 %v640, 0.0
      %v695 = vadd.f32 %v641, 0.0
      %v696 = vadd.f32 %v642, 0.0
      %v697 = vadd.f32 %v643, 0.0
      %v698 = vadd.f32 %v644, 0.0
      %v699 = vadd.f32 %v645, 0.0
      %v700 = vadd.f32 %v646, 0.0
      %v701 = vadd.f32 %v647, 0.0
      %v702 = vadd.f32 %v648, 0.0
      %v703 = vadd.f32 %v649, 0.0
      %v704 = vadd.f32 %v650, 0.0
      %v705 = vadd.f32 %v651, 0.0
      %v706 = vadd.f32 %v652, 0.0
      %v707 = vadd.f32 %v653, 0.0
      %v708 = vadd.f32 %v654, 0.0
      %v709 = vadd.f32 %v655, 0.0
      %v710 = vadd.f32 %v656, 0.0
      %v711 = vadd.f32 %v657, 0.0
      %v712 = vadd.f32 %v658, 0.0
      %v713 = vadd.f32 %v659, 0.0
      %v714 = vadd.f32 %v660, 0.0
      %v715 = vadd.f32 %v661, 0.0
      %v716 = vadd.f32 %v662, 0.0
      %v717 = vadd.f32 %v663, 0.0
      %v718 = vadd.f32 %v664, 0.0
      %v719 = vadd.f32 %v665, 0.0
      %v720 = vadd.f32 %v666, 0.0
      %v721 = vadd.f32 %v667, 0.0
      %v722 = vadd.f32 %v668, 0.0
      %v723 = vadd.f32 %v669, 0.0
      %v724 = vadd.f32 %v670, 0.0
      %v725 = vadd.f32 %v671, 0.0
      %v726 = vadd.f32 %v672, 0.0
      %v727 = vadd.f32 %v673, 0.0
      %v728 = vadd.f32 %v674, 0.0
      %v729 = vadd.f32 %v675, 0.0
      %v730 = vadd.f32 %v676, 0.0
      %v731 = vadd.f32 %v677, 0.0
      %v732 = vadd.f32 %v678, 0.0
      %v733 = vadd.f32 %v679, 0.0
      %v734 = vadd.f32 %v680, 0.0
      %v735 = vadd.f32 %v681, 0.0
      %v736 = vadd.f32 %v682, 0.0
      %v737 = vadd.f32 %v683, 0.0
      %v738 = vadd.f32 %v684, 0.0
      %v739 = vadd.f32 %v685, 0.0
      %v740 = vadd.f32 %v686, 0.0
      %v741 = vadd.f32 %v687, 0.0
      %v742 = vadd.f32 %v688, 0.0
      %v743 = vadd.f32 %v689, 0.0
      %v744 = vld [vmem:[%s1 + $0x1] sm:$0x1]
      %745 = vset.pattern.permute.xlu0 1
      %746 = vperm.xlu0 %745, %v307
      %v747 = vpop.permute.xlu0 %746
      %749 = vset.pattern.permute.xlu0 1
      %750 = vperm.xlu0 %749, %v308
      %v751 = vpop.permute.xlu0 %750
      %753 = vset.pattern.permute.xlu0 1
      %754 = vperm.xlu0 %753, %v309
      %v755 = vpop.permute.xlu0 %754
      %757 = vset.pattern.permute.xlu0 1
      %758 = vperm.xlu0 %757, %v310
      %v759 = vpop.permute.xlu0 %758
      %761 = vset.pattern.permute.xlu0 1
      %762 = vperm.xlu0 %761, %v311
      %v763 = vpop.permute.xlu0 %762
      %765 = vset.pattern.permute.xlu0 1
      %766 = vperm.xlu0 %765, %v312
      %v767 = vpop.permute.xlu0 %766
      %769 = vset.pattern.permute.xlu0 1
      %770 = vperm.xlu0 %769, %v313
      %v771 = vpop.permute.xlu0 %770
      %773 = vset.pattern.permute.xlu0 1
      %774 = vperm.xlu0 %773, %v314
      %v775 = vpop.permute.xlu0 %774
      %777 = vset.pattern.permute.xlu0 1
      %778 = vperm.xlu0 %777, %v315
      %v779 = vpop.permute.xlu0 %778
      %781 = vset.pattern.permute.xlu0 1
      %782 = vperm.xlu0 %781, %v316
      %v783 = vpop.permute.xlu0 %782
      %785 = vset.pattern.permute.xlu0 1
      %786 = vperm.xlu0 %785, %v317
      %v787 = vpop.permute.xlu0 %786
      %789 = vset.pattern.permute.xlu0 1
      %790 = vperm.xlu0 %789, %v318
      %v791 = vpop.permute.xlu0 %790
      %793 = vset.pattern.permute.xlu0 1
      %794 = vperm.xlu0 %793, %v319
      %v795 = vpop.permute.xlu0 %794
      %797 = vset.pattern.permute.xlu0 1
      %798 = vperm.xlu0 %797, %v320
      %v799 = vpop.permute.xlu0 %798
      %801 = vset.pattern.permute.xlu0 1
      %802 = vperm.xlu0 %801, %v321
      %v803 = vpop.permute.xlu0 %802
      %805 = vset.pattern.permute.xlu0 1
      %806 = vperm.xlu0 %805, %v322
      %v807 = vpop.permute.xlu0 %806
      %809 = vset.pattern.permute.xlu0 1
      %810 = vperm.xlu0 %809, %v323
      %v811 = vpop.permute.xlu0 %810
      %813 = vset.pattern.permute.xlu0 1
      %814 = vperm.xlu0 %813, %v324
      %v815 = vpop.permute.xlu0 %814
      %817 = vset.pattern.permute.xlu0 1
      %818 = vperm.xlu0 %817, %v325
      %v819 = vpop.permute.xlu0 %818
      %821 = vset.pattern.permute.xlu0 1
      %822 = vperm.xlu0 %821, %v326
      %v823 = vpop.permute.xlu0 %822
      %825 = vset.pattern.permute.xlu0 1
      %826 = vperm.xlu0 %825, %v327
      %v827 = vpop.permute.xlu0 %826
      %829 = vset.pattern.permute.xlu0 1
      %830 = vperm.xlu0 %829, %v328
      %v831 = vpop.permute.xlu0 %830
      %833 = vset.pattern.permute.xlu0 1
      %834 = vperm.xlu0 %833, %v329
      %v835 = vpop.permute.xlu0 %834
      %837 = vset.pattern.permute.xlu0 1
      %838 = vperm.xlu0 %837, %v330
      %v839 = vpop.permute.xlu0 %838
      %841 = vset.pattern.permute.xlu0 1
      %842 = vperm.xlu0 %841, %v331
      %v843 = vpop.permute.xlu0 %842
      %845 = vset.pattern.permute.xlu0 1
      %846 = vperm.xlu0 %845, %v332
      %v847 = vpop.permute.xlu0 %846
      %849 = vset.pattern.permute.xlu0 1
      %850 = vperm.xlu0 %849, %v333
      %v851 = vpop.permute.xlu0 %850
      %853 = vset.pattern.permute.xlu0 1
      %854 = vperm.xlu0 %853, %v334
      %v855 = vpop.permute.xlu0 %854
      %857 = vset.pattern.permute.xlu0 1
      %858 = vperm.xlu0 %857, %v335
      %v859 = vpop.permute.xlu0 %858
      %861 = vset.pattern.permute.xlu0 1
      %862 = vperm.xlu0 %861, %v336
      %v863 = vpop.permute.xlu0 %862
      %865 = vset.pattern.permute.xlu0 1
      %866 = vperm.xlu0 %865, %v337
      %v867 = vpop.permute.xlu0 %866
      %869 = vset.pattern.permute.xlu0 1
      %870 = vperm.xlu0 %869, %v338
      %v871 = vpop.permute.xlu0 %870
      %873 = vset.pattern.permute.xlu0 1
      %874 = vperm.xlu0 %873, %v339
      %v875 = vpop.permute.xlu0 %874
      %877 = vset.pattern.permute.xlu0 1
      %878 = vperm.xlu0 %877, %v340
      %v879 = vpop.permute.xlu0 %878
      %881 = vset.pattern.permute.xlu0 1
      %882 = vperm.xlu0 %881, %v341
      %v883 = vpop.permute.xlu0 %882
      %885 = vset.pattern.permute.xlu0 1
      %886 = vperm.xlu0 %885, %v342
      %v887 = vpop.permute.xlu0 %886
      %889 = vset.pattern.permute.xlu0 1
      %890 = vperm.xlu0 %889, %v343
      %v891 = vpop.permute.xlu0 %890
      %893 = vset.pattern.permute.xlu0 1
      %894 = vperm.xlu0 %893, %v344
      %v895 = vpop.permute.xlu0 %894
      %897 = vset.pattern.permute.xlu0 1
      %898 = vperm.xlu0 %897, %v345
      %v899 = vpop.permute.xlu0 %898
      %901 = vset.pattern.permute.xlu0 1
      %902 = vperm.xlu0 %901, %v346
      %v903 = vpop.permute.xlu0 %902
      %905 = vset.pattern.permute.xlu0 1
      %906 = vperm.xlu0 %905, %v347
      %v907 = vpop.permute.xlu0 %906
      %909 = vset.pattern.permute.xlu0 1
      %910 = vperm.xlu0 %909, %v348
      %v911 = vpop.permute.xlu0 %910
      %913 = vset.pattern.permute.xlu0 1
      %914 = vperm.xlu0 %913, %v349
      %v915 = vpop.permute.xlu0 %914
      %917 = vset.pattern.permute.xlu0 1
      %918 = vperm.xlu0 %917, %v350
      %v919 = vpop.permute.xlu0 %918
      %921 = vset.pattern.permute.xlu0 1
      %922 = vperm.xlu0 %921, %v351
      %v923 = vpop.permute.xlu0 %922
      %925 = vset.pattern.permute.xlu0 1
      %926 = vperm.xlu0 %925, %v352
      %v927 = vpop.permute.xlu0 %926
      %929 = vset.pattern.permute.xlu0 1
      %930 = vperm.xlu0 %929, %v353
      %v931 = vpop.permute.xlu0 %930
      %933 = vset.pattern.permute.xlu0 1
      %934 = vperm.xlu0 %933, %v354
      %v935 = vpop.permute.xlu0 %934
      %937 = vset.pattern.permute.xlu0 1
      %938 = vperm.xlu0 %937, %v355
      %v939 = vpop.permute.xlu0 %938
      %941 = vset.pattern.permute.xlu0 1
      %942 = vperm.xlu0 %941, %v356
      %v943 = vpop.permute.xlu0 %942
      %945 = vset.pattern.permute.xlu0 1
      %946 = vperm.xlu0 %945, %v357
      %v947 = vpop.permute.xlu0 %946
      %949 = vset.pattern.permute.xlu0 1
      %950 = vperm.xlu0 %949, %v358
      %v951 = vpop.permute.xlu0 %950
      %953 = vset.pattern.permute.xlu0 1
      %954 = vperm.xlu0 %953, %v359
      %v955 = vpop.permute.xlu0 %954
      %957 = vset.pattern.permute.xlu0 1
      %958 = vperm.xlu0 %957, %v360
      %v959 = vpop.permute.xlu0 %958
      %v961 = vlaneseq
      %v962 = vshrl.u32 %v961, 7
      %v963 = vsub.s32 0, %v962
      %v964 = vrot.slane %v744, %v963
      %v965 = vmul.f32 %v747, %v964
      %v966 = vmul.f32 %v751, %v964
      %v967 = vmul.f32 %v755, %v964
      %v968 = vmul.f32 %v759, %v964
      %v969 = vmul.f32 %v763, %v964
      %v970 = vmul.f32 %v767, %v964
      %v971 = vmul.f32 %v771, %v964
      %v972 = vmul.f32 %v775, %v964
      %v973 = vmul.f32 %v779, %v964
      %v974 = vmul.f32 %v783, %v964
      %v975 = vmul.f32 %v787, %v964
      %v976 = vmul.f32 %v791, %v964
      %v977 = vmul.f32 %v795, %v964
      %v978 = vmul.f32 %v799, %v964
      %v979 = vmul.f32 %v803, %v964
      %v980 = vmul.f32 %v807, %v964
      %v981 = vmul.f32 %v811, %v964
      %v982 = vmul.f32 %v815, %v964
      %v983 = vmul.f32 %v819, %v964
      %v984 = vmul.f32 %v823, %v964
      %v985 = vmul.f32 %v827, %v964
      %v986 = vmul.f32 %v831, %v964
      %v987 = vmul.f32 %v835, %v964
      %v988 = vmul.f32 %v839, %v964
      %v989 = vmul.f32 %v843, %v964
      %v990 = vmul.f32 %v847, %v964
      %v991 = vmul.f32 %v851, %v964
      %v992 = vmul.f32 %v855, %v964
      %v993 = vmul.f32 %v859, %v964
      %v994 = vmul.f32 %v863, %v964
      %v995 = vmul.f32 %v867, %v964
      %v996 = vmul.f32 %v871, %v964
      %v997 = vmul.f32 %v875, %v964
      %v998 = vmul.f32 %v879, %v964
      %v999 = vmul.f32 %v883, %v964
      %v1000 = vmul.f32 %v887, %v964
      %v1001 = vmul.f32 %v891, %v964
      %v1002 = vmul.f32 %v895, %v964
      %v1003 = vmul.f32 %v899, %v964
      %v1004 = vmul.f32 %v903, %v964
      %v1005 = vmul.f32 %v907, %v964
      %v1006 = vmul.f32 %v911, %v964
      %v1007 = vmul.f32 %v915, %v964
      %v1008 = vmul.f32 %v919, %v964
      %v1009 = vmul.f32 %v923, %v964
      %v1010 = vmul.f32 %v927, %v964
      %v1011 = vmul.f32 %v931, %v964
      %v1012 = vmul.f32 %v935, %v964
      %v1013 = vmul.f32 %v939, %v964
      %v1014 = vmul.f32 %v943, %v964
      %v1015 = vmul.f32 %v947, %v964
      %v1016 = vmul.f32 %v951, %v964
      %v1017 = vmul.f32 %v955, %v964
      %v1018 = vmul.f32 %v959, %v964
      %v1019 = vadd.f32 %v690, %v965
      %v1020 = vadd.f32 %v691, %v966
      %v1021 = vadd.f32 %v692, %v967
      %v1022 = vadd.f32 %v693, %v968
      %v1023 = vadd.f32 %v694, %v969
      %v1024 = vadd.f32 %v695, %v970
      %v1025 = vadd.f32 %v696, %v971
      %v1026 = vadd.f32 %v697, %v972
      %v1027 = vadd.f32 %v698, %v973
      %v1028 = vadd.f32 %v699, %v974
      %v1029 = vadd.f32 %v700, %v975
      %v1030 = vadd.f32 %v701, %v976
      %v1031 = vadd.f32 %v702, %v977
      %v1032 = vadd.f32 %v703, %v978
      %v1033 = vadd.f32 %v704, %v979
      %v1034 = vadd.f32 %v705, %v980
      %v1035 = vadd.f32 %v706, %v981
      %v1036 = vadd.f32 %v707, %v982
      %v1037 = vadd.f32 %v708, %v983
      %v1038 = vadd.f32 %v709, %v984
      %v1039 = vadd.f32 %v710, %v985
      %v1040 = vadd.f32 %v711, %v986
      %v1041 = vadd.f32 %v712, %v987
      %v1042 = vadd.f32 %v713, %v988
      %v1043 = vadd.f32 %v714, %v989
      %v1044 = vadd.f32 %v715, %v990
      %v1045 = vadd.f32 %v716, %v991
      %v1046 = vadd.f32 %v717, %v992
      %v1047 = vadd.f32 %v718, %v993
      %v1048 = vadd.f32 %v719, %v994
      %v1049 = vadd.f32 %v720, %v995
      %v1050 = vadd.f32 %v721, %v996
      %v1051 = vadd.f32 %v722, %v997
      %v1052 = vadd.f32 %v723, %v998
      %v1053 = vadd.f32 %v724, %v999
      %v1054 = vadd.f32 %v725, %v1000
      %v1055 = vadd.f32 %v726, %v1001
      %v1056 = vadd.f32 %v727, %v1002
      %v1057 = vadd.f32 %v728, %v1003
      %v1058 = vadd.f32 %v729, %v1004
      %v1059 = vadd.f32 %v730, %v1005
      %v1060 = vadd.f32 %v731, %v1006
      %v1061 = vadd.f32 %v732, %v1007
      %v1062 = vadd.f32 %v733, %v1008
      %v1063 = vadd.f32 %v734, %v1009
      %v1064 = vadd.f32 %v735, %v1010
      %v1065 = vadd.f32 %v736, %v1011
      %v1066 = vadd.f32 %v737, %v1012
      %v1067 = vadd.f32 %v738, %v1013
      %v1068 = vadd.f32 %v739, %v1014
      %v1069 = vadd.f32 %v740, %v1015
      %v1070 = vadd.f32 %v741, %v1016
      %v1071 = vadd.f32 %v742, %v1017
      %v1072 = vadd.f32 %v743, %v1018
      %v1073 = vld [vmem:[%s1 + $0x2] sm:$0x1]
      %1074 = vset.pattern.permute.xlu0 2
      %1075 = vperm.xlu0 %1074, %v307
      %v1076 = vpop.permute.xlu0 %1075
      %1078 = vset.pattern.permute.xlu0 2
      %1079 = vperm.xlu0 %1078, %v308
      %v1080 = vpop.permute.xlu0 %1079
      %1082 = vset.pattern.permute.xlu0 2
      %1083 = vperm.xlu0 %1082, %v309
      %v1084 = vpop.permute.xlu0 %1083
      %1086 = vset.pattern.permute.xlu0 2
      %1087 = vperm.xlu0 %1086, %v310
      %v1088 = vpop.permute.xlu0 %1087
      %1090 = vset.pattern.permute.xlu0 2
      %1091 = vperm.xlu0 %1090, %v311
      %v1092 = vpop.permute.xlu0 %1091
      %1094 = vset.pattern.permute.xlu0 2
      %1095 = vperm.xlu0 %1094, %v312
      %v1096 = vpop.permute.xlu0 %1095
      %1098 = vset.pattern.permute.xlu0 2
      %1099 = vperm.xlu0 %1098, %v313
      %v1100 = vpop.permute.xlu0 %1099
      %1102 = vset.pattern.permute.xlu0 2
      %1103 = vperm.xlu0 %1102, %v314
      %v1104 = vpop.permute.xlu0 %1103
      %1106 = vset.pattern.permute.xlu0 2
      %1107 = vperm.xlu0 %1106, %v315
      %v1108 = vpop.permute.xlu0 %1107
      %1110 = vset.pattern.permute.xlu0 2
      %1111 = vperm.xlu0 %1110, %v316
      %v1112 = vpop.permute.xlu0 %1111
      %1114 = vset.pattern.permute.xlu0 2
      %1115 = vperm.xlu0 %1114, %v317
      %v1116 = vpop.permute.xlu0 %1115
      %1118 = vset.pattern.permute.xlu0 2
      %1119 = vperm.xlu0 %1118, %v318
      %v1120 = vpop.permute.xlu0 %1119
      %1122 = vset.pattern.permute.xlu0 2
      %1123 = vperm.xlu0 %1122, %v319
      %v1124 = vpop.permute.xlu0 %1123
      %1126 = vset.pattern.permute.xlu0 2
      %1127 = vperm.xlu0 %1126, %v320
      %v1128 = vpop.permute.xlu0 %1127
      %1130 = vset.pattern.permute.xlu0 2
      %1131 = vperm.xlu0 %1130, %v321
      %v1132 = vpop.permute.xlu0 %1131
      %1134 = vset.pattern.permute.xlu0 2
      %1135 = vperm.xlu0 %1134, %v322
      %v1136 = vpop.permute.xlu0 %1135
      %1138 = vset.pattern.permute.xlu0 2
      %1139 = vperm.xlu0 %1138, %v323
      %v1140 = vpop.permute.xlu0 %1139
      %1142 = vset.pattern.permute.xlu0 2
      %1143 = vperm.xlu0 %1142, %v324
      %v1144 = vpop.permute.xlu0 %1143
      %1146 = vset.pattern.permute.xlu0 2
      %1147 = vperm.xlu0 %1146, %v325
      %v1148 = vpop.permute.xlu0 %1147
      %1150 = vset.pattern.permute.xlu0 2
      %1151 = vperm.xlu0 %1150, %v326
      %v1152 = vpop.permute.xlu0 %1151
      %1154 = vset.pattern.permute.xlu0 2
      %1155 = vperm.xlu0 %1154, %v327
      %v1156 = vpop.permute.xlu0 %1155
      %1158 = vset.pattern.permute.xlu0 2
      %1159 = vperm.xlu0 %1158, %v328
      %v1160 = vpop.permute.xlu0 %1159
      %1162 = vset.pattern.permute.xlu0 2
      %1163 = vperm.xlu0 %1162, %v329
      %v1164 = vpop.permute.xlu0 %1163
      %1166 = vset.pattern.permute.xlu0 2
      %1167 = vperm.xlu0 %1166, %v330
      %v1168 = vpop.permute.xlu0 %1167
      %1170 = vset.pattern.permute.xlu0 2
      %1171 = vperm.xlu0 %1170, %v331
      %v1172 = vpop.permute.xlu0 %1171
      %1174 = vset.pattern.permute.xlu0 2
      %1175 = vperm.xlu0 %1174, %v332
      %v1176 = vpop.permute.xlu0 %1175
      %1178 = vset.pattern.permute.xlu0 2
      %1179 = vperm.xlu0 %1178, %v333
      %v1180 = vpop.permute.xlu0 %1179
      %1182 = vset.pattern.permute.xlu0 2
      %1183 = vperm.xlu0 %1182, %v334
      %v1184 = vpop.permute.xlu0 %1183
      %1186 = vset.pattern.permute.xlu0 2
      %1187 = vperm.xlu0 %1186, %v335
      %v1188 = vpop.permute.xlu0 %1187
      %1190 = vset.pattern.permute.xlu0 2
      %1191 = vperm.xlu0 %1190, %v336
      %v1192 = vpop.permute.xlu0 %1191
      %1194 = vset.pattern.permute.xlu0 2
      %1195 = vperm.xlu0 %1194, %v337
      %v1196 = vpop.permute.xlu0 %1195
      %1198 = vset.pattern.permute.xlu0 2
      %1199 = vperm.xlu0 %1198, %v338
      %v1200 = vpop.permute.xlu0 %1199
      %1202 = vset.pattern.permute.xlu0 2
      %1203 = vperm.xlu0 %1202, %v339
      %v1204 = vpop.permute.xlu0 %1203
      %1206 = vset.pattern.permute.xlu0 2
      %1207 = vperm.xlu0 %1206, %v340
      %v1208 = vpop.permute.xlu0 %1207
      %1210 = vset.pattern.permute.xlu0 2
      %1211 = vperm.xlu0 %1210, %v341
      %v1212 = vpop.permute.xlu0 %1211
      %1214 = vset.pattern.permute.xlu0 2
      %1215 = vperm.xlu0 %1214, %v342
      %v1216 = vpop.permute.xlu0 %1215
      %1218 = vset.pattern.permute.xlu0 2
      %1219 = vperm.xlu0 %1218, %v343
      %v1220 = vpop.permute.xlu0 %1219
      %1222 = vset.pattern.permute.xlu0 2
      %1223 = vperm.xlu0 %1222, %v344
      %v1224 = vpop.permute.xlu0 %1223
      %1226 = vset.pattern.permute.xlu0 2
      %1227 = vperm.xlu0 %1226, %v345
      %v1228 = vpop.permute.xlu0 %1227
      %1230 = vset.pattern.permute.xlu0 2
      %1231 = vperm.xlu0 %1230, %v346
      %v1232 = vpop.permute.xlu0 %1231
      %1234 = vset.pattern.permute.xlu0 2
      %1235 = vperm.xlu0 %1234, %v347
      %v1236 = vpop.permute.xlu0 %1235
      %1238 = vset.pattern.permute.xlu0 2
      %1239 = vperm.xlu0 %1238, %v348
      %v1240 = vpop.permute.xlu0 %1239
      %1242 = vset.pattern.permute.xlu0 2
      %1243 = vperm.xlu0 %1242, %v349
      %v1244 = vpop.permute.xlu0 %1243
      %1246 = vset.pattern.permute.xlu0 2
      %1247 = vperm.xlu0 %1246, %v350
      %v1248 = vpop.permute.xlu0 %1247
      %1250 = vset.pattern.permute.xlu0 2
      %1251 = vperm.xlu0 %1250, %v351
      %v1252 = vpop.permute.xlu0 %1251
      %1254 = vset.pattern.permute.xlu0 2
      %1255 = vperm.xlu0 %1254, %v352
      %v1256 = vpop.permute.xlu0 %1255
      %1258 = vset.pattern.permute.xlu0 2
      %1259 = vperm.xlu0 %1258, %v353
      %v1260 = vpop.permute.xlu0 %1259
      %1262 = vset.pattern.permute.xlu0 2
      %1263 = vperm.xlu0 %1262, %v354
      %v1264 = vpop.permute.xlu0 %1263
      %1266 = vset.pattern.permute.xlu0 2
      %1267 = vperm.xlu0 %1266, %v355
      %v1268 = vpop.permute.xlu0 %1267
      %1270 = vset.pattern.permute.xlu0 2
      %1271 = vperm.xlu0 %1270, %v356
      %v1272 = vpop.permute.xlu0 %1271
      %1274 = vset.pattern.permute.xlu0 2
      %1275 = vperm.xlu0 %1274, %v357
      %v1276 = vpop.permute.xlu0 %1275
      %1278 = vset.pattern.permute.xlu0 2
      %1279 = vperm.xlu0 %1278, %v358
      %v1280 = vpop.permute.xlu0 %1279
      %1282 = vset.pattern.permute.xlu0 2
      %1283 = vperm.xlu0 %1282, %v359
      %v1284 = vpop.permute.xlu0 %1283
      %1286 = vset.pattern.permute.xlu0 2
      %1287 = vperm.xlu0 %1286, %v360
      %v1288 = vpop.permute.xlu0 %1287
      %v1290 = vlaneseq
      %v1291 = vshrl.u32 %v1290, 7
      %v1292 = vsub.s32 0, %v1291
      %v1293 = vrot.slane %v1073, %v1292
      %v1294 = vmul.f32 %v1076, %v1293
      %v1295 = vmul.f32 %v1080, %v1293
      %v1296 = vmul.f32 %v1084, %v1293
      %v1297 = vmul.f32 %v1088, %v1293
      %v1298 = vmul.f32 %v1092, %v1293
      %v1299 = vmul.f32 %v1096, %v1293
      %v1300 = vmul.f32 %v1100, %v1293
      %v1301 = vmul.f32 %v1104, %v1293
      %v1302 = vmul.f32 %v1108, %v1293
      %v1303 = vmul.f32 %v1112, %v1293
      %v1304 = vmul.f32 %v1116, %v1293
      %v1305 = vmul.f32 %v1120, %v1293
      %v1306 = vmul.f32 %v1124, %v1293
      %v1307 = vmul.f32 %v1128, %v1293
      %v1308 = vmul.f32 %v1132, %v1293
      %v1309 = vmul.f32 %v1136, %v1293
      %v1310 = vmul.f32 %v1140, %v1293
      %v1311 = vmul.f32 %v1144, %v1293
      %v1312 = vmul.f32 %v1148, %v1293
      %v1313 = vmul.f32 %v1152, %v1293
      %v1314 = vmul.f32 %v1156, %v1293
      %v1315 = vmul.f32 %v1160, %v1293
      %v1316 = vmul.f32 %v1164, %v1293
      %v1317 = vmul.f32 %v1168, %v1293
      %v1318 = vmul.f32 %v1172, %v1293
      %v1319 = vmul.f32 %v1176, %v1293
      %v1320 = vmul.f32 %v1180, %v1293
      %v1321 = vmul.f32 %v1184, %v1293
      %v1322 = vmul.f32 %v1188, %v1293
      %v1323 = vmul.f32 %v1192, %v1293
      %v1324 = vmul.f32 %v1196, %v1293
      %v1325 = vmul.f32 %v1200, %v1293
      %v1326 = vmul.f32 %v1204, %v1293
      %v1327 = vmul.f32 %v1208, %v1293
      %v1328 = vmul.f32 %v1212, %v1293
      %v1329 = vmul.f32 %v1216, %v1293
      %v1330 = vmul.f32 %v1220, %v1293
      %v1331 = vmul.f32 %v1224, %v1293
      %v1332 = vmul.f32 %v1228, %v1293
      %v1333 = vmul.f32 %v1232, %v1293
      %v1334 = vmul.f32 %v1236, %v1293
      %v1335 = vmul.f32 %v1240, %v1293
      %v1336 = vmul.f32 %v1244, %v1293
      %v1337 = vmul.f32 %v1248, %v1293
      %v1338 = vmul.f32 %v1252, %v1293
      %v1339 = vmul.f32 %v1256, %v1293
      %v1340 = vmul.f32 %v1260, %v1293
      %v1341 = vmul.f32 %v1264, %v1293
      %v1342 = vmul.f32 %v1268, %v1293
      %v1343 = vmul.f32 %v1272, %v1293
      %v1344 = vmul.f32 %v1276, %v1293
      %v1345 = vmul.f32 %v1280, %v1293
      %v1346 = vmul.f32 %v1284, %v1293
      %v1347 = vmul.f32 %v1288, %v1293
      %v1348 = vadd.f32 %v1019, %v1294
      %v1349 = vadd.f32 %v1020, %v1295
      %v1350 = vadd.f32 %v1021, %v1296
      %v1351 = vadd.f32 %v1022, %v1297
      %v1352 = vadd.f32 %v1023, %v1298
      %v1353 = vadd.f32 %v1024, %v1299
      %v1354 = vadd.f32 %v1025, %v1300
      %v1355 = vadd.f32 %v1026, %v1301
      %v1356 = vadd.f32 %v1027, %v1302
      %v1357 = vadd.f32 %v1028, %v1303
      %v1358 = vadd.f32 %v1029, %v1304
      %v1359 = vadd.f32 %v1030, %v1305
      %v1360 = vadd.f32 %v1031, %v1306
      %v1361 = vadd.f32 %v1032, %v1307
      %v1362 = vadd.f32 %v1033, %v1308
      %v1363 = vadd.f32 %v1034, %v1309
      %v1364 = vadd.f32 %v1035, %v1310
      %v1365 = vadd.f32 %v1036, %v1311
      %v1366 = vadd.f32 %v1037, %v1312
      %v1367 = vadd.f32 %v1038, %v1313
      %v1368 = vadd.f32 %v1039, %v1314
      %v1369 = vadd.f32 %v1040, %v1315
      %v1370 = vadd.f32 %v1041, %v1316
      %v1371 = vadd.f32 %v1042, %v1317
      %v1372 = vadd.f32 %v1043, %v1318
      %v1373 = vadd.f32 %v1044, %v1319
      %v1374 = vadd.f32 %v1045, %v1320
      %v1375 = vadd.f32 %v1046, %v1321
      %v1376 = vadd.f32 %v1047, %v1322
      %v1377 = vadd.f32 %v1048, %v1323
      %v1378 = vadd.f32 %v1049, %v1324
      %v1379 = vadd.f32 %v1050, %v1325
      %v1380 = vadd.f32 %v1051, %v1326
      %v1381 = vadd.f32 %v1052, %v1327
      %v1382 = vadd.f32 %v1053, %v1328
      %v1383 = vadd.f32 %v1054, %v1329
      %v1384 = vadd.f32 %v1055, %v1330
      %v1385 = vadd.f32 %v1056, %v1331
      %v1386 = vadd.f32 %v1057, %v1332
      %v1387 = vadd.f32 %v1058, %v1333
      %v1388 = vadd.f32 %v1059, %v1334
      %v1389 = vadd.f32 %v1060, %v1335
      %v1390 = vadd.f32 %v1061, %v1336
      %v1391 = vadd.f32 %v1062, %v1337
      %v1392 = vadd.f32 %v1063, %v1338
      %v1393 = vadd.f32 %v1064, %v1339
      %v1394 = vadd.f32 %v1065, %v1340
      %v1395 = vadd.f32 %v1066, %v1341
      %v1396 = vadd.f32 %v1067, %v1342
      %v1397 = vadd.f32 %v1068, %v1343
      %v1398 = vadd.f32 %v1069, %v1344
      %v1399 = vadd.f32 %v1070, %v1345
      %v1400 = vadd.f32 %v1071, %v1346
      %v1401 = vadd.f32 %v1072, %v1347
      %v1402 = vld [vmem:[%s1 + $0x3] sm:$0x1]
      %1403 = vset.pattern.permute.xlu0 3
      %1404 = vperm.xlu0 %1403, %v307
      %v1405 = vpop.permute.xlu0 %1404
      %1407 = vset.pattern.permute.xlu0 3
      %1408 = vperm.xlu0 %1407, %v308
      %v1409 = vpop.permute.xlu0 %1408
      %1411 = vset.pattern.permute.xlu0 3
      %1412 = vperm.xlu0 %1411, %v309
      %v1413 = vpop.permute.xlu0 %1412
      %1415 = vset.pattern.permute.xlu0 3
      %1416 = vperm.xlu0 %1415, %v310
      %v1417 = vpop.permute.xlu0 %1416
      %1419 = vset.pattern.permute.xlu0 3
      %1420 = vperm.xlu0 %1419, %v311
      %v1421 = vpop.permute.xlu0 %1420
      %1423 = vset.pattern.permute.xlu0 3
      %1424 = vperm.xlu0 %1423, %v312
      %v1425 = vpop.permute.xlu0 %1424
      %1427 = vset.pattern.permute.xlu0 3
      %1428 = vperm.xlu0 %1427, %v313
      %v1429 = vpop.permute.xlu0 %1428
      %1431 = vset.pattern.permute.xlu0 3
      %1432 = vperm.xlu0 %1431, %v314
      %v1433 = vpop.permute.xlu0 %1432
      %1435 = vset.pattern.permute.xlu0 3
      %1436 = vperm.xlu0 %1435, %v315
      %v1437 = vpop.permute.xlu0 %1436
      %1439 = vset.pattern.permute.xlu0 3
      %1440 = vperm.xlu0 %1439, %v316
      %v1441 = vpop.permute.xlu0 %1440
      %1443 = vset.pattern.permute.xlu0 3
      %1444 = vperm.xlu0 %1443, %v317
      %v1445 = vpop.permute.xlu0 %1444
      %1447 = vset.pattern.permute.xlu0 3
      %1448 = vperm.xlu0 %1447, %v318
      %v1449 = vpop.permute.xlu0 %1448
      %1451 = vset.pattern.permute.xlu0 3
      %1452 = vperm.xlu0 %1451, %v319
      %v1453 = vpop.permute.xlu0 %1452
      %1455 = vset.pattern.permute.xlu0 3
      %1456 = vperm.xlu0 %1455, %v320
      %v1457 = vpop.permute.xlu0 %1456
      %1459 = vset.pattern.permute.xlu0 3
      %1460 = vperm.xlu0 %1459, %v321
      %v1461 = vpop.permute.xlu0 %1460
      %1463 = vset.pattern.permute.xlu0 3
      %1464 = vperm.xlu0 %1463, %v322
      %v1465 = vpop.permute.xlu0 %1464
      %1467 = vset.pattern.permute.xlu0 3
      %1468 = vperm.xlu0 %1467, %v323
      %v1469 = vpop.permute.xlu0 %1468
      %1471 = vset.pattern.permute.xlu0 3
      %1472 = vperm.xlu0 %1471, %v324
      %v1473 = vpop.permute.xlu0 %1472
      %1475 = vset.pattern.permute.xlu0 3
      %1476 = vperm.xlu0 %1475, %v325
      %v1477 = vpop.permute.xlu0 %1476
      %1479 = vset.pattern.permute.xlu0 3
      %1480 = vperm.xlu0 %1479, %v326
      %v1481 = vpop.permute.xlu0 %1480
      %1483 = vset.pattern.permute.xlu0 3
      %1484 = vperm.xlu0 %1483, %v327
      %v1485 = vpop.permute.xlu0 %1484
      %1487 = vset.pattern.permute.xlu0 3
      %1488 = vperm.xlu0 %1487, %v328
      %v1489 = vpop.permute.xlu0 %1488
      %1491 = vset.pattern.permute.xlu0 3
      %1492 = vperm.xlu0 %1491, %v329
      %v1493 = vpop.permute.xlu0 %1492
      %1495 = vset.pattern.permute.xlu0 3
      %1496 = vperm.xlu0 %1495, %v330
      %v1497 = vpop.permute.xlu0 %1496
      %1499 = vset.pattern.permute.xlu0 3
      %1500 = vperm.xlu0 %1499, %v331
      %v1501 = vpop.permute.xlu0 %1500
      %1503 = vset.pattern.permute.xlu0 3
      %1504 = vperm.xlu0 %1503, %v332
      %v1505 = vpop.permute.xlu0 %1504
      %1507 = vset.pattern.permute.xlu0 3
      %1508 = vperm.xlu0 %1507, %v333
      %v1509 = vpop.permute.xlu0 %1508
      %1511 = vset.pattern.permute.xlu0 3
      %1512 = vperm.xlu0 %1511, %v334
      %v1513 = vpop.permute.xlu0 %1512
      %1515 = vset.pattern.permute.xlu0 3
      %1516 = vperm.xlu0 %1515, %v335
      %v1517 = vpop.permute.xlu0 %1516
      %1519 = vset.pattern.permute.xlu0 3
      %1520 = vperm.xlu0 %1519, %v336
      %v1521 = vpop.permute.xlu0 %1520
      %1523 = vset.pattern.permute.xlu0 3
      %1524 = vperm.xlu0 %1523, %v337
      %v1525 = vpop.permute.xlu0 %1524
      %1527 = vset.pattern.permute.xlu0 3
      %1528 = vperm.xlu0 %1527, %v338
      %v1529 = vpop.permute.xlu0 %1528
      %1531 = vset.pattern.permute.xlu0 3
      %1532 = vperm.xlu0 %1531, %v339
      %v1533 = vpop.permute.xlu0 %1532
      %1535 = vset.pattern.permute.xlu0 3
      %1536 = vperm.xlu0 %1535, %v340
      %v1537 = vpop.permute.xlu0 %1536
      %1539 = vset.pattern.permute.xlu0 3
      %1540 = vperm.xlu0 %1539, %v341
      %v1541 = vpop.permute.xlu0 %1540
      %1543 = vset.pattern.permute.xlu0 3
      %1544 = vperm.xlu0 %1543, %v342
      %v1545 = vpop.permute.xlu0 %1544
      %1547 = vset.pattern.permute.xlu0 3
      %1548 = vperm.xlu0 %1547, %v343
      %v1549 = vpop.permute.xlu0 %1548
      %1551 = vset.pattern.permute.xlu0 3
      %1552 = vperm.xlu0 %1551, %v344
      %v1553 = vpop.permute.xlu0 %1552
      %1555 = vset.pattern.permute.xlu0 3
      %1556 = vperm.xlu0 %1555, %v345
      %v1557 = vpop.permute.xlu0 %1556
      %1559 = vset.pattern.permute.xlu0 3
      %1560 = vperm.xlu0 %1559, %v346
      %v1561 = vpop.permute.xlu0 %1560
      %1563 = vset.pattern.permute.xlu0 3
      %1564 = vperm.xlu0 %1563, %v347
      %v1565 = vpop.permute.xlu0 %1564
      %1567 = vset.pattern.permute.xlu0 3
      %1568 = vperm.xlu0 %1567, %v348
      %v1569 = vpop.permute.xlu0 %1568
      %1571 = vset.pattern.permute.xlu0 3
      %1572 = vperm.xlu0 %1571, %v349
      %v1573 = vpop.permute.xlu0 %1572
      %1575 = vset.pattern.permute.xlu0 3
      %1576 = vperm.xlu0 %1575, %v350
      %v1577 = vpop.permute.xlu0 %1576
      %1579 = vset.pattern.permute.xlu0 3
      %1580 = vperm.xlu0 %1579, %v351
      %v1581 = vpop.permute.xlu0 %1580
      %1583 = vset.pattern.permute.xlu0 3
      %1584 = vperm.xlu0 %1583, %v352
      %v1585 = vpop.permute.xlu0 %1584
      %1587 = vset.pattern.permute.xlu0 3
      %1588 = vperm.xlu0 %1587, %v353
      %v1589 = vpop.permute.xlu0 %1588
      %1591 = vset.pattern.permute.xlu0 3
      %1592 = vperm.xlu0 %1591, %v354
      %v1593 = vpop.permute.xlu0 %1592
      %1595 = vset.pattern.permute.xlu0 3
      %1596 = vperm.xlu0 %1595, %v355
      %v1597 = vpop.permute.xlu0 %1596
      %1599 = vset.pattern.permute.xlu0 3
      %1600 = vperm.xlu0 %1599, %v356
      %v1601 = vpop.permute.xlu0 %1600
      %1603 = vset.pattern.permute.xlu0 3
      %1604 = vperm.xlu0 %1603, %v357
      %v1605 = vpop.permute.xlu0 %1604
      %1607 = vset.pattern.permute.xlu0 3
      %1608 = vperm.xlu0 %1607, %v358
      %v1609 = vpop.permute.xlu0 %1608
      %1611 = vset.pattern.permute.xlu0 3
      %1612 = vperm.xlu0 %1611, %v359
      %v1613 = vpop.permute.xlu0 %1612
      %1615 = vset.pattern.permute.xlu0 3
      %1616 = vperm.xlu0 %1615, %v360
      %v1617 = vpop.permute.xlu0 %1616
      %v1619 = vlaneseq
      %v1620 = vshrl.u32 %v1619, 7
      %v1621 = vsub.s32 0, %v1620
      %v1622 = vrot.slane %v1402, %v1621
      %v1623 = vmul.f32 %v1405, %v1622
      %v1624 = vmul.f32 %v1409, %v1622
      %v1625 = vmul.f32 %v1413, %v1622
      %v1626 = vmul.f32 %v1417, %v1622
      %v1627 = vmul.f32 %v1421, %v1622
      %v1628 = vmul.f32 %v1425, %v1622
      %v1629 = vmul.f32 %v1429, %v1622
      %v1630 = vmul.f32 %v1433, %v1622
      %v1631 = vmul.f32 %v1437, %v1622
      %v1632 = vmul.f32 %v1441, %v1622
      %v1633 = vmul.f32 %v1445, %v1622
      %v1634 = vmul.f32 %v1449, %v1622
      %v1635 = vmul.f32 %v1453, %v1622
      %v1636 = vmul.f32 %v1457, %v1622
      %v1637 = vmul.f32 %v1461, %v1622
      %v1638 = vmul.f32 %v1465, %v1622
      %v1639 = vmul.f32 %v1469, %v1622
      %v1640 = vmul.f32 %v1473, %v1622
      %v1641 = vmul.f32 %v1477, %v1622
      %v1642 = vmul.f32 %v1481, %v1622
      %v1643 = vmul.f32 %v1485, %v1622
      %v1644 = vmul.f32 %v1489, %v1622
      %v1645 = vmul.f32 %v1493, %v1622
      %v1646 = vmul.f32 %v1497, %v1622
      %v1647 = vmul.f32 %v1501, %v1622
      %v1648 = vmul.f32 %v1505, %v1622
      %v1649 = vmul.f32 %v1509, %v1622
      %v1650 = vmul.f32 %v1513, %v1622
      %v1651 = vmul.f32 %v1517, %v1622
      %v1652 = vmul.f32 %v1521, %v1622
      %v1653 = vmul.f32 %v1525, %v1622
      %v1654 = vmul.f32 %v1529, %v1622
      %v1655 = vmul.f32 %v1533, %v1622
      %v1656 = vmul.f32 %v1537, %v1622
      %v1657 = vmul.f32 %v1541, %v1622
      %v1658 = vmul.f32 %v1545, %v1622
      %v1659 = vmul.f32 %v1549, %v1622
      %v1660 = vmul.f32 %v1553, %v1622
      %v1661 = vmul.f32 %v1557, %v1622
      %v1662 = vmul.f32 %v1561, %v1622
      %v1663 = vmul.f32 %v1565, %v1622
      %v1664 = vmul.f32 %v1569, %v1622
      %v1665 = vmul.f32 %v1573, %v1622
      %v1666 = vmul.f32 %v1577, %v1622
      %v1667 = vmul.f32 %v1581, %v1622
      %v1668 = vmul.f32 %v1585, %v1622
      %v1669 = vmul.f32 %v1589, %v1622
      %v1670 = vmul.f32 %v1593, %v1622
      %v1671 = vmul.f32 %v1597, %v1622
      %v1672 = vmul.f32 %v1601, %v1622
      %v1673 = vmul.f32 %v1605, %v1622
      %v1674 = vmul.f32 %v1609, %v1622
      %v1675 = vmul.f32 %v1613, %v1622
      %v1676 = vmul.f32 %v1617, %v1622
      %v1677 = vadd.f32 %v1348, %v1623
      %v1678 = vadd.f32 %v1349, %v1624
      %v1679 = vadd.f32 %v1350, %v1625
      %v1680 = vadd.f32 %v1351, %v1626
      %v1681 = vadd.f32 %v1352, %v1627
      %v1682 = vadd.f32 %v1353, %v1628
      %v1683 = vadd.f32 %v1354, %v1629
      %v1684 = vadd.f32 %v1355, %v1630
      %v1685 = vadd.f32 %v1356, %v1631
      %v1686 = vadd.f32 %v1357, %v1632
      %v1687 = vadd.f32 %v1358, %v1633
      %v1688 = vadd.f32 %v1359, %v1634
      %v1689 = vadd.f32 %v1360, %v1635
      %v1690 = vadd.f32 %v1361, %v1636
      %v1691 = vadd.f32 %v1362, %v1637
      %v1692 = vadd.f32 %v1363, %v1638
      %v1693 = vadd.f32 %v1364, %v1639
      %v1694 = vadd.f32 %v1365, %v1640
      %v1695 = vadd.f32 %v1366, %v1641
      %v1696 = vadd.f32 %v1367, %v1642
      %v1697 = vadd.f32 %v1368, %v1643
      %v1698 = vadd.f32 %v1369, %v1644
      %v1699 = vadd.f32 %v1370, %v1645
      %v1700 = vadd.f32 %v1371, %v1646
      %v1701 = vadd.f32 %v1372, %v1647
      %v1702 = vadd.f32 %v1373, %v1648
      %v1703 = vadd.f32 %v1374, %v1649
      %v1704 = vadd.f32 %v1375, %v1650
      %v1705 = vadd.f32 %v1376, %v1651
      %v1706 = vadd.f32 %v1377, %v1652
      %v1707 = vadd.f32 %v1378, %v1653
      %v1708 = vadd.f32 %v1379, %v1654
      %v1709 = vadd.f32 %v1380, %v1655
      %v1710 = vadd.f32 %v1381, %v1656
      %v1711 = vadd.f32 %v1382, %v1657
      %v1712 = vadd.f32 %v1383, %v1658
      %v1713 = vadd.f32 %v1384, %v1659
      %v1714 = vadd.f32 %v1385, %v1660
      %v1715 = vadd.f32 %v1386, %v1661
      %v1716 = vadd.f32 %v1387, %v1662
      %v1717 = vadd.f32 %v1388, %v1663
      %v1718 = vadd.f32 %v1389, %v1664
      %v1719 = vadd.f32 %v1390, %v1665
      %v1720 = vadd.f32 %v1391, %v1666
      %v1721 = vadd.f32 %v1392, %v1667
      %v1722 = vadd.f32 %v1393, %v1668
      %v1723 = vadd.f32 %v1394, %v1669
      %v1724 = vadd.f32 %v1395, %v1670
      %v1725 = vadd.f32 %v1396, %v1671
      %v1726 = vadd.f32 %v1397, %v1672
      %v1727 = vadd.f32 %v1398, %v1673
      %v1728 = vadd.f32 %v1399, %v1674
      %v1729 = vadd.f32 %v1400, %v1675
      %v1730 = vadd.f32 %v1401, %v1676
      %v1731 = vld [vmem:[%s2] sm:$0x1]
      %v1733 = vlaneseq
      %v1734 = vshrl.u32 %v1733, 7
      %v1735 = vsub.s32 0, %v1734
      %v1736 = vrot.slane %v1731, %v1735
      %v1738 = vadd.f32 %v1677, %v1736
      %v1739 = vadd.f32 %v1678, %v1736
      %v1740 = vadd.f32 %v1679, %v1736
      %v1741 = vadd.f32 %v1680, %v1736
      %v1742 = vadd.f32 %v1681, %v1736
      %v1743 = vadd.f32 %v1682, %v1736
      %v1744 = vadd.f32 %v1683, %v1736
      %v1745 = vadd.f32 %v1684, %v1736
      %v1746 = vadd.f32 %v1685, %v1736
      %v1747 = vadd.f32 %v1686, %v1736
      %v1748 = vadd.f32 %v1687, %v1736
      %v1749 = vadd.f32 %v1688, %v1736
      %v1750 = vadd.f32 %v1689, %v1736
      %v1751 = vadd.f32 %v1690, %v1736
      %v1752 = vadd.f32 %v1691, %v1736
      %v1753 = vadd.f32 %v1692, %v1736
      %v1754 = vadd.f32 %v1693, %v1736
      %v1755 = vadd.f32 %v1694, %v1736
      %v1756 = vadd.f32 %v1695, %v1736
      %v1757 = vadd.f32 %v1696, %v1736
      %v1758 = vadd.f32 %v1697, %v1736
      %v1759 = vadd.f32 %v1698, %v1736
      %v1760 = vadd.f32 %v1699, %v1736
      %v1761 = vadd.f32 %v1700, %v1736
      %v1762 = vadd.f32 %v1701, %v1736
      %v1763 = vadd.f32 %v1702, %v1736
      %v1764 = vadd.f32 %v1703, %v1736
      %v1765 = vadd.f32 %v1704, %v1736
      %v1766 = vadd.f32 %v1705, %v1736
      %v1767 = vadd.f32 %v1706, %v1736
      %v1768 = vadd.f32 %v1707, %v1736
      %v1769 = vadd.f32 %v1708, %v1736
      %v1770 = vadd.f32 %v1709, %v1736
      %v1771 = vadd.f32 %v1710, %v1736
      %v1772 = vadd.f32 %v1711, %v1736
      %v1773 = vadd.f32 %v1712, %v1736
      %v1774 = vadd.f32 %v1713, %v1736
      %v1775 = vadd.f32 %v1714, %v1736
      %v1776 = vadd.f32 %v1715, %v1736
      %v1777 = vadd.f32 %v1716, %v1736
      %v1778 = vadd.f32 %v1717, %v1736
      %v1779 = vadd.f32 %v1718, %v1736
      %v1780 = vadd.f32 %v1719, %v1736
      %v1781 = vadd.f32 %v1720, %v1736
      %v1782 = vadd.f32 %v1721, %v1736
      %v1783 = vadd.f32 %v1722, %v1736
      %v1784 = vadd.f32 %v1723, %v1736
      %v1785 = vadd.f32 %v1724, %v1736
      %v1786 = vadd.f32 %v1725, %v1736
      %v1787 = vadd.f32 %v1726, %v1736
      %v1788 = vadd.f32 %v1727, %v1736
      %v1789 = vadd.f32 %v1728, %v1736
      %v1790 = vadd.f32 %v1729, %v1736
      %v1791 = vadd.f32 %v1730, %v1736
      %v1792 = vmax.f32 %v1738, 0.0
      %v1793 = vmax.f32 %v1739, 0.0
      %v1794 = vmax.f32 %v1740, 0.0
      %v1795 = vmax.f32 %v1741, 0.0
      %v1796 = vmax.f32 %v1742, 0.0
      %v1797 = vmax.f32 %v1743, 0.0
      %v1798 = vmax.f32 %v1744, 0.0
      %v1799 = vmax.f32 %v1745, 0.0
      %v1800 = vmax.f32 %v1746, 0.0
      %v1801 = vmax.f32 %v1747, 0.0
      %v1802 = vmax.f32 %v1748, 0.0
      %v1803 = vmax.f32 %v1749, 0.0
      %v1804 = vmax.f32 %v1750, 0.0
      %v1805 = vmax.f32 %v1751, 0.0
      %v1806 = vmax.f32 %v1752, 0.0
      %v1807 = vmax.f32 %v1753, 0.0
      %v1808 = vmax.f32 %v1754, 0.0
      %v1809 = vmax.f32 %v1755, 0.0
      %v1810 = vmax.f32 %v1756, 0.0
      %v1811 = vmax.f32 %v1757, 0.0
      %v1812 = vmax.f32 %v1758, 0.0
      %v1813 = vmax.f32 %v1759, 0.0
      %v1814 = vmax.f32 %v1760, 0.0
      %v1815 = vmax.f32 %v1761, 0.0
      %v1816 = vmax.f32 %v1762, 0.0
      %v1817 = vmax.f32 %v1763, 0.0
      %v1818 = vmax.f32 %v1764, 0.0
      %v1819 = vmax.f32 %v1765, 0.0
      %v1820 = vmax.f32 %v1766, 0.0
      %v1821 = vmax.f32 %v1767, 0.0
      %v1822 = vmax.f32 %v1768, 0.0
      %v1823 = vmax.f32 %v1769, 0.0
      %v1824 = vmax.f32 %v1770, 0.0
      %v1825 = vmax.f32 %v1771, 0.0
      %v1826 = vmax.f32 %v1772, 0.0
      %v1827 = vmax.f32 %v1773, 0.0
      %v1828 = vmax.f32 %v1774, 0.0
      %v1829 = vmax.f32 %v1775, 0.0
      %v1830 = vmax.f32 %v1776, 0.0
      %v1831 = vmax.f32 %v1777, 0.0
      %v1832 = vmax.f32 %v1778, 0.0
      %v1833 = vmax.f32 %v1779, 0.0
      %v1834 = vmax.f32 %v1780, 0.0
      %v1835 = vmax.f32 %v1781, 0.0
      %v1836 = vmax.f32 %v1782, 0.0
      %v1837 = vmax.f32 %v1783, 0.0
      %v1838 = vmax.f32 %v1784, 0.0
      %v1839 = vmax.f32 %v1785, 0.0
      %v1840 = vmax.f32 %v1786, 0.0
      %v1841 = vmax.f32 %v1787, 0.0
      %v1842 = vmax.f32 %v1788, 0.0
      %v1843 = vmax.f32 %v1789, 0.0
      %v1844 = vmax.f32 %v1790, 0.0
      %v1845 = vmax.f32 %v1791, 0.0
      %vm1846 = vcmask 195584
      %1847 = vst.msk [vmem:[#allocation2] sm:$0xff] %vm1846, %v1792
      %1848 = vst.msk [vmem:[#allocation2 + $0x8] sm:$0xff] %vm1846, %v1793
      %vm1849 = vcmask 189440
      %1850 = vst.msk [vmem:[#allocation2 + $0x10] sm:$0x3] %vm1849, %v1794
      %1851 = vst.msk [vmem:[#allocation2 + $0x18] sm:$0xff] %vm1846, %v1795
      %1852 = vst.msk [vmem:[#allocation2 + $0x20] sm:$0xff] %vm1846, %v1796
      %1853 = vst.msk [vmem:[#allocation2 + $0x28] sm:$0x3] %vm1849, %v1797
      %1854 = vst.msk [vmem:[#allocation2 + $0x30] sm:$0xff] %vm1846, %v1798
      %1855 = vst.msk [vmem:[#allocation2 + $0x38] sm:$0xff] %vm1846, %v1799
      %1856 = vst.msk [vmem:[#allocation2 + $0x40] sm:$0x3] %vm1849, %v1800
      %1857 = vst.msk [vmem:[#allocation2 + $0x48] sm:$0xff] %vm1846, %v1801
      %1858 = vst.msk [vmem:[#allocation2 + $0x50] sm:$0xff] %vm1846, %v1802
      %1859 = vst.msk [vmem:[#allocation2 + $0x58] sm:$0x3] %vm1849, %v1803
      %1860 = vst.msk [vmem:[#allocation2 + $0x60] sm:$0xff] %vm1846, %v1804
      %1861 = vst.msk [vmem:[#allocation2 + $0x68] sm:$0xff] %vm1846, %v1805
      %1862 = vst.msk [vmem:[#allocation2 + $0x70] sm:$0x3] %vm1849, %v1806
      %1863 = vst.msk [vmem:[#allocation2 + $0x78] sm:$0xff] %vm1846, %v1807
      %1864 = vst.msk [vmem:[#allocation2 + $0x80] sm:$0xff] %vm1846, %v1808
      %1865 = vst.msk [vmem:[#allocation2 + $0x88] sm:$0x3] %vm1849, %v1809
      %1866 = vst.msk [vmem:[#allocation2 + $0x90] sm:$0xff] %vm1846, %v1810
      %1867 = vst.msk [vmem:[#allocation2 + $0x98] sm:$0xff] %vm1846, %v1811
      %1868 = vst.msk [vmem:[#allocation2 + $0xa0] sm:$0x3] %vm1849, %v1812
      %1869 = vst.msk [vmem:[#allocation2 + $0xa8] sm:$0xff] %vm1846, %v1813
      %1870 = vst.msk [vmem:[#allocation2 + $0xb0] sm:$0xff] %vm1846, %v1814
      %1871 = vst.msk [vmem:[#allocation2 + $0xb8] sm:$0x3] %vm1849, %v1815
      %1872 = vst.msk [vmem:[#allocation2 + $0xc0] sm:$0xff] %vm1846, %v1816
      %1873 = vst.msk [vmem:[#allocation2 + $0xc8] sm:$0xff] %vm1846, %v1817
      %1874 = vst.msk [vmem:[#allocation2 + $0xd0] sm:$0x3] %vm1849, %v1818
      %1875 = vst.msk [vmem:[#allocation2 + $0xd8] sm:$0xff] %vm1846, %v1819
      %1876 = vst.msk [vmem:[#allocation2 + $0xe0] sm:$0xff] %vm1846, %v1820
      %1877 = vst.msk [vmem:[#allocation2 + $0xe8] sm:$0x3] %vm1849, %v1821
      %1878 = vst.msk [vmem:[#allocation2 + $0xf0] sm:$0xff] %vm1846, %v1822
      %1879 = vst.msk [vmem:[#allocation2 + $0xf8] sm:$0xff] %vm1846, %v1823
      %1880 = vst.msk [vmem:[#allocation2 + $0x100] sm:$0x3] %vm1849, %v1824
      %1881 = vst.msk [vmem:[#allocation2 + $0x108] sm:$0xff] %vm1846, %v1825
      %1882 = vst.msk [vmem:[#allocation2 + $0x110] sm:$0xff] %vm1846, %v1826
      %1883 = vst.msk [vmem:[#allocation2 + $0x118] sm:$0x3] %vm1849, %v1827
      %1884 = vst.msk [vmem:[#allocation2 + $0x120] sm:$0xff] %vm1846, %v1828
      %1885 = vst.msk [vmem:[#allocation2 + $0x128] sm:$0xff] %vm1846, %v1829
      %1886 = vst.msk [vmem:[#allocation2 + $0x130] sm:$0x3] %vm1849, %v1830
      %1887 = vst.msk [vmem:[#allocation2 + $0x138] sm:$0xff] %vm1846, %v1831
      %1888 = vst.msk [vmem:[#allocation2 + $0x140] sm:$0xff] %vm1846, %v1832
      %1889 = vst.msk [vmem:[#allocation2 + $0x148] sm:$0x3] %vm1849, %v1833
      %1890 = vst.msk [vmem:[#allocation2 + $0x150] sm:$0xff] %vm1846, %v1834
      %1891 = vst.msk [vmem:[#allocation2 + $0x158] sm:$0xff] %vm1846, %v1835
      %1892 = vst.msk [vmem:[#allocation2 + $0x160] sm:$0x3] %vm1849, %v1836
      %1893 = vst.msk [vmem:[#allocation2 + $0x168] sm:$0xff] %vm1846, %v1837
      %1894 = vst.msk [vmem:[#allocation2 + $0x170] sm:$0xff] %vm1846, %v1838
      %1895 = vst.msk [vmem:[#allocation2 + $0x178] sm:$0x3] %vm1849, %v1839
      %1896 = vst.msk [vmem:[#allocation2 + $0x180] sm:$0xff] %vm1846, %v1840
      %1897 = vst.msk [vmem:[#allocation2 + $0x188] sm:$0xff] %vm1846, %v1841
      %1898 = vst.msk [vmem:[#allocation2 + $0x190] sm:$0x3] %vm1849, %v1842
      %1899 = vst.msk [vmem:[#allocation2 + $0x198] sm:$0xff] %vm1846, %v1843
      %1900 = vst.msk [vmem:[#allocation2 + $0x1a0] sm:$0xff] %vm1846, %v1844
      %1901 = vst.msk [vmem:[#allocation2 + $0x1a8] sm:$0x3] %vm1849, %v1845
      %vm1902 = vcmask 188416
      %1903 = vst.msk [vmem:[#allocation2] sm:$0x1] %vm1902, 0.0
      %1904 = vst.msk [vmem:[#allocation2 + $0x18] sm:$0x1] %vm1902, 0.0
      %1905 = vst.msk [vmem:[#allocation2 + $0x30] sm:$0x1] %vm1902, 0.0
      %1906 = vst.msk [vmem:[#allocation2 + $0x48] sm:$0x1] %vm1902, 0.0
      %1907 = vst.msk [vmem:[#allocation2 + $0x60] sm:$0x1] %vm1902, 0.0
      %1908 = vst.msk [vmem:[#allocation2 + $0x78] sm:$0x1] %vm1902, 0.0
      %1909 = vst.msk [vmem:[#allocation2 + $0x90] sm:$0x1] %vm1902, 0.0
      %1910 = vst.msk [vmem:[#allocation2 + $0xa8] sm:$0x1] %vm1902, 0.0
      %1911 = vst.msk [vmem:[#allocation2 + $0xc0] sm:$0x1] %vm1902, 0.0
      %1912 = vst.msk [vmem:[#allocation2 + $0xd8] sm:$0x1] %vm1902, 0.0
      %1913 = vst.msk [vmem:[#allocation2 + $0xf0] sm:$0x1] %vm1902, 0.0
      %1914 = vst.msk [vmem:[#allocation2 + $0x108] sm:$0x1] %vm1902, 0.0
      %1915 = vst.msk [vmem:[#allocation2 + $0x120] sm:$0x1] %vm1902, 0.0
      %1916 = vst.msk [vmem:[#allocation2 + $0x138] sm:$0x1] %vm1902, 0.0
      %1917 = vst.msk [vmem:[#allocation2 + $0x150] sm:$0x1] %vm1902, 0.0
      %1918 = vst.msk [vmem:[#allocation2 + $0x168] sm:$0x1] %vm1902, 0.0
      %1919 = vst.msk [vmem:[#allocation2 + $0x180] sm:$0x1] %vm1902, 0.0
      %1920 = vst.msk [vmem:[#allocation2 + $0x198] sm:$0x1] %vm1902, 0.0
      %1921 = vst.msk [vmem:[#allocation2 + $0x11] sm:$0x1] %vm1902, 0.0
      %1922 = vst.msk [vmem:[#allocation2 + $0x29] sm:$0x1] %vm1902, 0.0
      %1923 = vst.msk [vmem:[#allocation2 + $0x41] sm:$0x1] %vm1902, 0.0
      %1924 = vst.msk [vmem:[#allocation2 + $0x59] sm:$0x1] %vm1902, 0.0
      %1925 = vst.msk [vmem:[#allocation2 + $0x71] sm:$0x1] %vm1902, 0.0
      %1926 = vst.msk [vmem:[#allocation2 + $0x89] sm:$0x1] %vm1902, 0.0
      %1927 = vst.msk [vmem:[#allocation2 + $0xa1] sm:$0x1] %vm1902, 0.0
      %1928 = vst.msk [vmem:[#allocation2 + $0xb9] sm:$0x1] %vm1902, 0.0
      %1929 = vst.msk [vmem:[#allocation2 + $0xd1] sm:$0x1] %vm1902, 0.0
      %1930 = vst.msk [vmem:[#allocation2 + $0xe9] sm:$0x1] %vm1902, 0.0
      %1931 = vst.msk [vmem:[#allocation2 + $0x101] sm:$0x1] %vm1902, 0.0
      %1932 = vst.msk [vmem:[#allocation2 + $0x119] sm:$0x1] %vm1902, 0.0
      %1933 = vst.msk [vmem:[#allocation2 + $0x131] sm:$0x1] %vm1902, 0.0
      %1934 = vst.msk [vmem:[#allocation2 + $0x149] sm:$0x1] %vm1902, 0.0
      %1935 = vst.msk [vmem:[#allocation2 + $0x161] sm:$0x1] %vm1902, 0.0
      %1936 = vst.msk [vmem:[#allocation2 + $0x179] sm:$0x1] %vm1902, 0.0
      %1937 = vst.msk [vmem:[#allocation2 + $0x191] sm:$0x1] %vm1902, 0.0
      %1938 = vst.msk [vmem:[#allocation2 + $0x1a9] sm:$0x1] %vm1902, 0.0
      %p1939 = scmp.eq.s32.totalorder %s304, 0
      // Predicated region
      $region49: #{tpu_custom_call.1} parent=47 // pred_check
        %p1940 = pneg %p1939
      $region50: #{tpu_custom_call.1} parent=47 // pred_check_branch
        %1942 = sbr.rel (%p1940) target = $region52
      $region51: #{tpu_custom_call.1} parent=47 // pred_region
        %1943 = vst.msk [vmem:[#allocation2] sm:$0xff] %vm1846, 0.0
        %1944 = vst.msk [vmem:[#allocation2 + $0x8] sm:$0xff] %vm1846, 0.0
        %1945 = vst.msk [vmem:[#allocation2 + $0x10] sm:$0x3] %vm1849, 0.0
      $region52: #{tpu_custom_call.1} parent=47 // pred_fallthru
        _
      %s1946 = sadd.s32 %s304, 17
      %p1947 = scmp.eq.s32.totalorder %s1946, 17
      // Predicated region
      $region53: #{tpu_custom_call.1} parent=47 // pred_check
        %p1948 = pneg %p1947
      $region54: #{tpu_custom_call.1} parent=47 // pred_check_branch
        %1950 = sbr.rel (%p1948) target = $region56
      $region55: #{tpu_custom_call.1} parent=47 // pred_region
        %s1951 = scalar_lea.vmem [#allocation2], 408
        %1952 = vst.msk [vmem:[%s1951] sm:$0xff] %vm1846, 0.0
        %1953 = vst.msk [vmem:[%s1951 + $0x8] sm:$0xff] %vm1846, 0.0
        %1954 = vst.msk [vmem:[%s1951 + $0x10] sm:$0x3] %vm1849, 0.0
      $region56: #{tpu_custom_call.1} parent=47 // pred_fallthru
        _
      %v1955 = vld [vmem:[#allocation2] sm:$0xff]
      %v1956 = vld [vmem:[#allocation2 + $0x8] sm:$0xff]
      %v1957 = vld [vmem:[#allocation2 + $0x18] sm:$0xff]
      %v1958 = vld [vmem:[#allocation2 + $0x20] sm:$0xff]
      %v1959 = vld [vmem:[#allocation2 + $0x30] sm:$0xff]
      %v1960 = vld [vmem:[#allocation2 + $0x38] sm:$0xff]
      %v1961 = vld [vmem:[#allocation2 + $0x48] sm:$0xff]
      %v1962 = vld [vmem:[#allocation2 + $0x50] sm:$0xff]
      %v1963 = vld [vmem:[#allocation2 + $0x60] sm:$0xff]
      %v1964 = vld [vmem:[#allocation2 + $0x68] sm:$0xff]
      %v1965 = vld [vmem:[#allocation2 + $0x78] sm:$0xff]
      %v1966 = vld [vmem:[#allocation2 + $0x80] sm:$0xff]
      %v1967 = vld [vmem:[#allocation2 + $0x90] sm:$0xff]
      %v1968 = vld [vmem:[#allocation2 + $0x98] sm:$0xff]
      %v1969 = vld [vmem:[#allocation2 + $0xa8] sm:$0xff]
      %v1970 = vld [vmem:[#allocation2 + $0xb0] sm:$0xff]
      %v1971 = vld [vmem:[#allocation2 + $0xc0] sm:$0xff]
      %v1972 = vld [vmem:[#allocation2 + $0xc8] sm:$0xff]
      %v1973 = vld [vmem:[#allocation2 + $0xd8] sm:$0xff]
      %v1974 = vld [vmem:[#allocation2 + $0xe0] sm:$0xff]
      %v1975 = vld [vmem:[#allocation2 + $0xf0] sm:$0xff]
      %v1976 = vld [vmem:[#allocation2 + $0xf8] sm:$0xff]
      %v1977 = vld [vmem:[#allocation2 + $0x108] sm:$0xff]
      %v1978 = vld [vmem:[#allocation2 + $0x110] sm:$0xff]
      %v1979 = vld [vmem:[#allocation2 + $0x120] sm:$0xff]
      %v1980 = vld [vmem:[#allocation2 + $0x128] sm:$0xff]
      %v1981 = vld [vmem:[#allocation2 + $0x138] sm:$0xff]
      %v1982 = vld [vmem:[#allocation2 + $0x140] sm:$0xff]
      %v1983 = vld [vmem:[#allocation2 + $0x150] sm:$0xff]
      %v1984 = vld [vmem:[#allocation2 + $0x158] sm:$0xff]
      %v1985 = vld [vmem:[#allocation2 + $0x168] sm:$0xff]
      %v1986 = vld [vmem:[#allocation2 + $0x170] sm:$0xff]
      %v1987 = vld [vmem:[#allocation2 + $0x180] sm:$0xff]
      %v1988 = vld [vmem:[#allocation2 + $0x188] sm:$0xff]
      %v1989 = vld [vmem:[#allocation2 + $0x198] sm:$0xff]
      %v1990 = vld [vmem:[#allocation2 + $0x1a0] sm:$0xff]
      %v1991 = vld [vmem:[%s3] sm:$0x1]
      %v1992 = vlaneseq
      %v1993 = vshrl.u32 %v1992, 7
      %v1994 = vsub.s32 0, %v1993
      %v1995 = vrot.slane %v1991, %v1994
      %v1996 = vmul.f32 %v1955, %v1995
      %v1997 = vmul.f32 %v1956, %v1995
      %v1998 = vmul.f32 %v1957, %v1995
      %v1999 = vmul.f32 %v1958, %v1995
      %v2000 = vmul.f32 %v1959, %v1995
      %v2001 = vmul.f32 %v1960, %v1995
      %v2002 = vmul.f32 %v1961, %v1995
      %v2003 = vmul.f32 %v1962, %v1995
      %v2004 = vmul.f32 %v1963, %v1995
      %v2005 = vmul.f32 %v1964, %v1995
      %v2006 = vmul.f32 %v1965, %v1995
      %v2007 = vmul.f32 %v1966, %v1995
      %v2008 = vmul.f32 %v1967, %v1995
      %v2009 = vmul.f32 %v1968, %v1995
      %v2010 = vmul.f32 %v1969, %v1995
      %v2011 = vmul.f32 %v1970, %v1995
      %v2012 = vmul.f32 %v1971, %v1995
      %v2013 = vmul.f32 %v1972, %v1995
      %v2014 = vmul.f32 %v1973, %v1995
      %v2015 = vmul.f32 %v1974, %v1995
      %v2016 = vmul.f32 %v1975, %v1995
      %v2017 = vmul.f32 %v1976, %v1995
      %v2018 = vmul.f32 %v1977, %v1995
      %v2019 = vmul.f32 %v1978, %v1995
      %v2020 = vmul.f32 %v1979, %v1995
      %v2021 = vmul.f32 %v1980, %v1995
      %v2022 = vmul.f32 %v1981, %v1995
      %v2023 = vmul.f32 %v1982, %v1995
      %v2024 = vmul.f32 %v1983, %v1995
      %v2025 = vmul.f32 %v1984, %v1995
      %v2026 = vmul.f32 %v1985, %v1995
      %v2027 = vmul.f32 %v1986, %v1995
      %v2028 = vadd.f32 %v1996, 0.0
      %v2029 = vadd.f32 %v1997, 0.0
      %v2030 = vadd.f32 %v1998, 0.0
      %v2031 = vadd.f32 %v1999, 0.0
      %v2032 = vadd.f32 %v2000, 0.0
      %v2033 = vadd.f32 %v2001, 0.0
      %v2034 = vadd.f32 %v2002, 0.0
      %v2035 = vadd.f32 %v2003, 0.0
      %v2036 = vadd.f32 %v2004, 0.0
      %v2037 = vadd.f32 %v2005, 0.0
      %v2038 = vadd.f32 %v2006, 0.0
      %v2039 = vadd.f32 %v2007, 0.0
      %v2040 = vadd.f32 %v2008, 0.0
      %v2041 = vadd.f32 %v2009, 0.0
      %v2042 = vadd.f32 %v2010, 0.0
      %v2043 = vadd.f32 %v2011, 0.0
      %v2044 = vadd.f32 %v2012, 0.0
      %v2045 = vadd.f32 %v2013, 0.0
      %v2046 = vadd.f32 %v2014, 0.0
      %v2047 = vadd.f32 %v2015, 0.0
      %v2048 = vadd.f32 %v2016, 0.0
      %v2049 = vadd.f32 %v2017, 0.0
      %v2050 = vadd.f32 %v2018, 0.0
      %v2051 = vadd.f32 %v2019, 0.0
      %v2052 = vadd.f32 %v2020, 0.0
      %v2053 = vadd.f32 %v2021, 0.0
      %v2054 = vadd.f32 %v2022, 0.0
      %v2055 = vadd.f32 %v2023, 0.0
      %v2056 = vadd.f32 %v2024, 0.0
      %v2057 = vadd.f32 %v2025, 0.0
      %v2058 = vadd.f32 %v2026, 0.0
      %v2059 = vadd.f32 %v2027, 0.0
      %s2060 = scalar_lea.vmem %s3, 4
      %v2061 = vld [vmem:[%s2060] sm:$0x1]
      %v2062 = vlaneseq
      %v2063 = vshrl.u32 %v2062, 7
      %v2064 = vsub.s32 0, %v2063
      %v2065 = vrot.slane %v2061, %v2064
      %v2066 = vmul.f32 %v1957, %v2065
      %v2067 = vmul.f32 %v1958, %v2065
      %v2068 = vmul.f32 %v1959, %v2065
      %v2069 = vmul.f32 %v1960, %v2065
      %v2070 = vmul.f32 %v1961, %v2065
      %v2071 = vmul.f32 %v1962, %v2065
      %v2072 = vmul.f32 %v1963, %v2065
      %v2073 = vmul.f32 %v1964, %v2065
      %v2074 = vmul.f32 %v1965, %v2065
      %v2075 = vmul.f32 %v1966, %v2065
      %v2076 = vmul.f32 %v1967, %v2065
      %v2077 = vmul.f32 %v1968, %v2065
      %v2078 = vmul.f32 %v1969, %v2065
      %v2079 = vmul.f32 %v1970, %v2065
      %v2080 = vmul.f32 %v1971, %v2065
      %v2081 = vmul.f32 %v1972, %v2065
      %v2082 = vmul.f32 %v1973, %v2065
      %v2083 = vmul.f32 %v1974, %v2065
      %v2084 = vmul.f32 %v1975, %v2065
      %v2085 = vmul.f32 %v1976, %v2065
      %v2086 = vmul.f32 %v1977, %v2065
      %v2087 = vmul.f32 %v1978, %v2065
      %v2088 = vmul.f32 %v1979, %v2065
      %v2089 = vmul.f32 %v1980, %v2065
      %v2090 = vmul.f32 %v1981, %v2065
      %v2091 = vmul.f32 %v1982, %v2065
      %v2092 = vmul.f32 %v1983, %v2065
      %v2093 = vmul.f32 %v1984, %v2065
      %v2094 = vmul.f32 %v1985, %v2065
      %v2095 = vmul.f32 %v1986, %v2065
      %v2096 = vmul.f32 %v1987, %v2065
      %v2097 = vmul.f32 %v1988, %v2065
      %v2098 = vadd.f32 %v2028, %v2066
      %v2099 = vadd.f32 %v2029, %v2067
      %v2100 = vadd.f32 %v2030, %v2068
      %v2101 = vadd.f32 %v2031, %v2069
      %v2102 = vadd.f32 %v2032, %v2070
      %v2103 = vadd.f32 %v2033, %v2071
      %v2104 = vadd.f32 %v2034, %v2072
      %v2105 = vadd.f32 %v2035, %v2073
      %v2106 = vadd.f32 %v2036, %v2074
      %v2107 = vadd.f32 %v2037, %v2075
      %v2108 = vadd.f32 %v2038, %v2076
      %v2109 = vadd.f32 %v2039, %v2077
      %v2110 = vadd.f32 %v2040, %v2078
      %v2111 = vadd.f32 %v2041, %v2079
      %v2112 = vadd.f32 %v2042, %v2080
      %v2113 = vadd.f32 %v2043, %v2081
      %v2114 = vadd.f32 %v2044, %v2082
      %v2115 = vadd.f32 %v2045, %v2083
      %v2116 = vadd.f32 %v2046, %v2084
      %v2117 = vadd.f32 %v2047, %v2085
      %v2118 = vadd.f32 %v2048, %v2086
      %v2119 = vadd.f32 %v2049, %v2087
      %v2120 = vadd.f32 %v2050, %v2088
      %v2121 = vadd.f32 %v2051, %v2089
      %v2122 = vadd.f32 %v2052, %v2090
      %v2123 = vadd.f32 %v2053, %v2091
      %v2124 = vadd.f32 %v2054, %v2092
      %v2125 = vadd.f32 %v2055, %v2093
      %v2126 = vadd.f32 %v2056, %v2094
      %v2127 = vadd.f32 %v2057, %v2095
      %v2128 = vadd.f32 %v2058, %v2096
      %v2129 = vadd.f32 %v2059, %v2097
      %s2130 = scalar_lea.vmem %s3, 8
      %v2131 = vld [vmem:[%s2130] sm:$0x1]
      %v2132 = vlaneseq
      %v2133 = vshrl.u32 %v2132, 7
      %v2134 = vsub.s32 0, %v2133
      %v2135 = vrot.slane %v2131, %v2134
      %v2136 = vmul.f32 %v1959, %v2135
      %v2137 = vmul.f32 %v1960, %v2135
      %v2138 = vmul.f32 %v1961, %v2135
      %v2139 = vmul.f32 %v1962, %v2135
      %v2140 = vmul.f32 %v1963, %v2135
      %v2141 = vmul.f32 %v1964, %v2135
      %v2142 = vmul.f32 %v1965, %v2135
      %v2143 = vmul.f32 %v1966, %v2135
      %v2144 = vmul.f32 %v1967, %v2135
      %v2145 = vmul.f32 %v1968, %v2135
      %v2146 = vmul.f32 %v1969, %v2135
      %v2147 = vmul.f32 %v1970, %v2135
      %v2148 = vmul.f32 %v1971, %v2135
      %v2149 = vmul.f32 %v1972, %v2135
      %v2150 = vmul.f32 %v1973, %v2135
      %v2151 = vmul.f32 %v1974, %v2135
      %v2152 = vmul.f32 %v1975, %v2135
      %v2153 = vmul.f32 %v1976, %v2135
      %v2154 = vmul.f32 %v1977, %v2135
      %v2155 = vmul.f32 %v1978, %v2135
      %v2156 = vmul.f32 %v1979, %v2135
      %v2157 = vmul.f32 %v1980, %v2135
      %v2158 = vmul.f32 %v1981, %v2135
      %v2159 = vmul.f32 %v1982, %v2135
      %v2160 = vmul.f32 %v1983, %v2135
      %v2161 = vmul.f32 %v1984, %v2135
      %v2162 = vmul.f32 %v1985, %v2135
      %v2163 = vmul.f32 %v1986, %v2135
      %v2164 = vmul.f32 %v1987, %v2135
      %v2165 = vmul.f32 %v1988, %v2135
      %v2166 = vmul.f32 %v1989, %v2135
      %v2167 = vmul.f32 %v1990, %v2135
      %v2168 = vadd.f32 %v2098, %v2136
      %v2169 = vadd.f32 %v2099, %v2137
      %v2170 = vadd.f32 %v2100, %v2138
      %v2171 = vadd.f32 %v2101, %v2139
      %v2172 = vadd.f32 %v2102, %v2140
      %v2173 = vadd.f32 %v2103, %v2141
      %v2174 = vadd.f32 %v2104, %v2142
      %v2175 = vadd.f32 %v2105, %v2143
      %v2176 = vadd.f32 %v2106, %v2144
      %v2177 = vadd.f32 %v2107, %v2145
      %v2178 = vadd.f32 %v2108, %v2146
      %v2179 = vadd.f32 %v2109, %v2147
      %v2180 = vadd.f32 %v2110, %v2148
      %v2181 = vadd.f32 %v2111, %v2149
      %v2182 = vadd.f32 %v2112, %v2150
      %v2183 = vadd.f32 %v2113, %v2151
      %v2184 = vadd.f32 %v2114, %v2152
      %v2185 = vadd.f32 %v2115, %v2153
      %v2186 = vadd.f32 %v2116, %v2154
      %v2187 = vadd.f32 %v2117, %v2155
      %v2188 = vadd.f32 %v2118, %v2156
      %v2189 = vadd.f32 %v2119, %v2157
      %v2190 = vadd.f32 %v2120, %v2158
      %v2191 = vadd.f32 %v2121, %v2159
      %v2192 = vadd.f32 %v2122, %v2160
      %v2193 = vadd.f32 %v2123, %v2161
      %v2194 = vadd.f32 %v2124, %v2162
      %v2195 = vadd.f32 %v2125, %v2163
      %v2196 = vadd.f32 %v2126, %v2164
      %v2197 = vadd.f32 %v2127, %v2165
      %v2198 = vadd.f32 %v2128, %v2166
      %v2199 = vadd.f32 %v2129, %v2167
      %v2200 = vld [vmem:[#allocation2 + $0x1] sm:$0xff]
      %v2201 = vld [vmem:[#allocation2 + $0x9] sm:$0xff]
      %v2202 = vld [vmem:[#allocation2 + $0x19] sm:$0xff]
      %v2203 = vld [vmem:[#allocation2 + $0x21] sm:$0xff]
      %v2204 = vld [vmem:[#allocation2 + $0x31] sm:$0xff]
      %v2205 = vld [vmem:[#allocation2 + $0x39] sm:$0xff]
      %v2206 = vld [vmem:[#allocation2 + $0x49] sm:$0xff]
      %v2207 = vld [vmem:[#allocation2 + $0x51] sm:$0xff]
      %v2208 = vld [vmem:[#allocation2 + $0x61] sm:$0xff]
      %v2209 = vld [vmem:[#allocation2 + $0x69] sm:$0xff]
      %v2210 = vld [vmem:[#allocation2 + $0x79] sm:$0xff]
      %v2211 = vld [vmem:[#allocation2 + $0x81] sm:$0xff]
      %v2212 = vld [vmem:[#allocation2 + $0x91] sm:$0xff]
      %v2213 = vld [vmem:[#allocation2 + $0x99] sm:$0xff]
      %v2214 = vld [vmem:[#allocation2 + $0xa9] sm:$0xff]
      %v2215 = vld [vmem:[#allocation2 + $0xb1] sm:$0xff]
      %v2216 = vld [vmem:[#allocation2 + $0xc1] sm:$0xff]
      %v2217 = vld [vmem:[#allocation2 + $0xc9] sm:$0xff]
      %v2218 = vld [vmem:[#allocation2 + $0xd9] sm:$0xff]
      %v2219 = vld [vmem:[#allocation2 + $0xe1] sm:$0xff]
      %v2220 = vld [vmem:[#allocation2 + $0xf1] sm:$0xff]
      %v2221 = vld [vmem:[#allocation2 + $0xf9] sm:$0xff]
      %v2222 = vld [vmem:[#allocation2 + $0x109] sm:$0xff]
      %v2223 = vld [vmem:[#allocation2 + $0x111] sm:$0xff]
      %v2224 = vld [vmem:[#allocation2 + $0x121] sm:$0xff]
      %v2225 = vld [vmem:[#allocation2 + $0x129] sm:$0xff]
      %v2226 = vld [vmem:[#allocation2 + $0x139] sm:$0xff]
      %v2227 = vld [vmem:[#allocation2 + $0x141] sm:$0xff]
      %v2228 = vld [vmem:[#allocation2 + $0x151] sm:$0xff]
      %v2229 = vld [vmem:[#allocation2 + $0x159] sm:$0xff]
      %v2230 = vld [vmem:[#allocation2 + $0x169] sm:$0xff]
      %v2231 = vld [vmem:[#allocation2 + $0x171] sm:$0xff]
      %v2232 = vld [vmem:[#allocation2 + $0x181] sm:$0xff]
      %v2233 = vld [vmem:[#allocation2 + $0x189] sm:$0xff]
      %v2234 = vld [vmem:[#allocation2 + $0x199] sm:$0xff]
      %v2235 = vld [vmem:[#allocation2 + $0x1a1] sm:$0xff]
      %v2236 = vld [vmem:[%s3 + $0x1] sm:$0x1]
      %v2237 = vlaneseq
      %v2238 = vshrl.u32 %v2237, 7
      %v2239 = vsub.s32 0, %v2238
      %v2240 = vrot.slane %v2236, %v2239
      %v2241 = vmul.f32 %v2200, %v2240
      %v2242 = vmul.f32 %v2201, %v2240
      %v2243 = vmul.f32 %v2202, %v2240
      %v2244 = vmul.f32 %v2203, %v2240
      %v2245 = vmul.f32 %v2204, %v2240
      %v2246 = vmul.f32 %v2205, %v2240
      %v2247 = vmul.f32 %v2206, %v2240
      %v2248 = vmul.f32 %v2207, %v2240
      %v2249 = vmul.f32 %v2208, %v2240
      %v2250 = vmul.f32 %v2209, %v2240
      %v2251 = vmul.f32 %v2210, %v2240
      %v2252 = vmul.f32 %v2211, %v2240
      %v2253 = vmul.f32 %v2212, %v2240
      %v2254 = vmul.f32 %v2213, %v2240
      %v2255 = vmul.f32 %v2214, %v2240
      %v2256 = vmul.f32 %v2215, %v2240
      %v2257 = vmul.f32 %v2216, %v2240
      %v2258 = vmul.f32 %v2217, %v2240
      %v2259 = vmul.f32 %v2218, %v2240
      %v2260 = vmul.f32 %v2219, %v2240
      %v2261 = vmul.f32 %v2220, %v2240
      %v2262 = vmul.f32 %v2221, %v2240
      %v2263 = vmul.f32 %v2222, %v2240
      %v2264 = vmul.f32 %v2223, %v2240
      %v2265 = vmul.f32 %v2224, %v2240
      %v2266 = vmul.f32 %v2225, %v2240
      %v2267 = vmul.f32 %v2226, %v2240
      %v2268 = vmul.f32 %v2227, %v2240
      %v2269 = vmul.f32 %v2228, %v2240
      %v2270 = vmul.f32 %v2229, %v2240
      %v2271 = vmul.f32 %v2230, %v2240
      %v2272 = vmul.f32 %v2231, %v2240
      %v2273 = vadd.f32 %v2168, %v2241
      %v2274 = vadd.f32 %v2169, %v2242
      %v2275 = vadd.f32 %v2170, %v2243
      %v2276 = vadd.f32 %v2171, %v2244
      %v2277 = vadd.f32 %v2172, %v2245
      %v2278 = vadd.f32 %v2173, %v2246
      %v2279 = vadd.f32 %v2174, %v2247
      %v2280 = vadd.f32 %v2175, %v2248
      %v2281 = vadd.f32 %v2176, %v2249
      %v2282 = vadd.f32 %v2177, %v2250
      %v2283 = vadd.f32 %v2178, %v2251
      %v2284 = vadd.f32 %v2179, %v2252
      %v2285 = vadd.f32 %v2180, %v2253
      %v2286 = vadd.f32 %v2181, %v2254
      %v2287 = vadd.f32 %v2182, %v2255
      %v2288 = vadd.f32 %v2183, %v2256
      %v2289 = vadd.f32 %v2184, %v2257
      %v2290 = vadd.f32 %v2185, %v2258
      %v2291 = vadd.f32 %v2186, %v2259
      %v2292 = vadd.f32 %v2187, %v2260
      %v2293 = vadd.f32 %v2188, %v2261
      %v2294 = vadd.f32 %v2189, %v2262
      %v2295 = vadd.f32 %v2190, %v2263
      %v2296 = vadd.f32 %v2191, %v2264
      %v2297 = vadd.f32 %v2192, %v2265
      %v2298 = vadd.f32 %v2193, %v2266
      %v2299 = vadd.f32 %v2194, %v2267
      %v2300 = vadd.f32 %v2195, %v2268
      %v2301 = vadd.f32 %v2196, %v2269
      %v2302 = vadd.f32 %v2197, %v2270
      %v2303 = vadd.f32 %v2198, %v2271
      %v2304 = vadd.f32 %v2199, %v2272
      %v2305 = vld [vmem:[%s2060 + $0x1] sm:$0x1]
      %v2306 = vlaneseq
      %v2307 = vshrl.u32 %v2306, 7
      %v2308 = vsub.s32 0, %v2307
      %v2309 = vrot.slane %v2305, %v2308
      %v2310 = vmul.f32 %v2202, %v2309
      %v2311 = vmul.f32 %v2203, %v2309
      %v2312 = vmul.f32 %v2204, %v2309
      %v2313 = vmul.f32 %v2205, %v2309
      %v2314 = vmul.f32 %v2206, %v2309
      %v2315 = vmul.f32 %v2207, %v2309
      %v2316 = vmul.f32 %v2208, %v2309
      %v2317 = vmul.f32 %v2209, %v2309
      %v2318 = vmul.f32 %v2210, %v2309
      %v2319 = vmul.f32 %v2211, %v2309
      %v2320 = vmul.f32 %v2212, %v2309
      %v2321 = vmul.f32 %v2213, %v2309
      %v2322 = vmul.f32 %v2214, %v2309
      %v2323 = vmul.f32 %v2215, %v2309
      %v2324 = vmul.f32 %v2216, %v2309
      %v2325 = vmul.f32 %v2217, %v2309
      %v2326 = vmul.f32 %v2218, %v2309
      %v2327 = vmul.f32 %v2219, %v2309
      %v2328 = vmul.f32 %v2220, %v2309
      %v2329 = vmul.f32 %v2221, %v2309
      %v2330 = vmul.f32 %v2222, %v2309
      %v2331 = vmul.f32 %v2223, %v2309
      %v2332 = vmul.f32 %v2224, %v2309
      %v2333 = vmul.f32 %v2225, %v2309
      %v2334 = vmul.f32 %v2226, %v2309
      %v2335 = vmul.f32 %v2227, %v2309
      %v2336 = vmul.f32 %v2228, %v2309
      %v2337 = vmul.f32 %v2229, %v2309
      %v2338 = vmul.f32 %v2230, %v2309
      %v2339 = vmul.f32 %v2231, %v2309
      %v2340 = vmul.f32 %v2232, %v2309
      %v2341 = vmul.f32 %v2233, %v2309
      %v2342 = vadd.f32 %v2273, %v2310
      %v2343 = vadd.f32 %v2274, %v2311
      %v2344 = vadd.f32 %v2275, %v2312
      %v2345 = vadd.f32 %v2276, %v2313
      %v2346 = vadd.f32 %v2277, %v2314
      %v2347 = vadd.f32 %v2278, %v2315
      %v2348 = vadd.f32 %v2279, %v2316
      %v2349 = vadd.f32 %v2280, %v2317
      %v2350 = vadd.f32 %v2281, %v2318
      %v2351 = vadd.f32 %v2282, %v2319
      %v2352 = vadd.f32 %v2283, %v2320
      %v2353 = vadd.f32 %v2284, %v2321
      %v2354 = vadd.f32 %v2285, %v2322
      %v2355 = vadd.f32 %v2286, %v2323
      %v2356 = vadd.f32 %v2287, %v2324
      %v2357 = vadd.f32 %v2288, %v2325
      %v2358 = vadd.f32 %v2289, %v2326
      %v2359 = vadd.f32 %v2290, %v2327
      %v2360 = vadd.f32 %v2291, %v2328
      %v2361 = vadd.f32 %v2292, %v2329
      %v2362 = vadd.f32 %v2293, %v2330
      %v2363 = vadd.f32 %v2294, %v2331
      %v2364 = vadd.f32 %v2295, %v2332
      %v2365 = vadd.f32 %v2296, %v2333
      %v2366 = vadd.f32 %v2297, %v2334
      %v2367 = vadd.f32 %v2298, %v2335
      %v2368 = vadd.f32 %v2299, %v2336
      %v2369 = vadd.f32 %v2300, %v2337
      %v2370 = vadd.f32 %v2301, %v2338
      %v2371 = vadd.f32 %v2302, %v2339
      %v2372 = vadd.f32 %v2303, %v2340
      %v2373 = vadd.f32 %v2304, %v2341
      %v2374 = vld [vmem:[%s2130 + $0x1] sm:$0x1]
      %v2375 = vlaneseq
      %v2376 = vshrl.u32 %v2375, 7
      %v2377 = vsub.s32 0, %v2376
      %v2378 = vrot.slane %v2374, %v2377
      %v2379 = vmul.f32 %v2204, %v2378
      %v2380 = vmul.f32 %v2205, %v2378
      %v2381 = vmul.f32 %v2206, %v2378
      %v2382 = vmul.f32 %v2207, %v2378
      %v2383 = vmul.f32 %v2208, %v2378
      %v2384 = vmul.f32 %v2209, %v2378
      %v2385 = vmul.f32 %v2210, %v2378
      %v2386 = vmul.f32 %v2211, %v2378
      %v2387 = vmul.f32 %v2212, %v2378
      %v2388 = vmul.f32 %v2213, %v2378
      %v2389 = vmul.f32 %v2214, %v2378
      %v2390 = vmul.f32 %v2215, %v2378
      %v2391 = vmul.f32 %v2216, %v2378
      %v2392 = vmul.f32 %v2217, %v2378
      %v2393 = vmul.f32 %v2218, %v2378
      %v2394 = vmul.f32 %v2219, %v2378
      %v2395 = vmul.f32 %v2220, %v2378
      %v2396 = vmul.f32 %v2221, %v2378
      %v2397 = vmul.f32 %v2222, %v2378
      %v2398 = vmul.f32 %v2223, %v2378
      %v2399 = vmul.f32 %v2224, %v2378
      %v2400 = vmul.f32 %v2225, %v2378
      %v2401 = vmul.f32 %v2226, %v2378
      %v2402 = vmul.f32 %v2227, %v2378
      %v2403 = vmul.f32 %v2228, %v2378
      %v2404 = vmul.f32 %v2229, %v2378
      %v2405 = vmul.f32 %v2230, %v2378
      %v2406 = vmul.f32 %v2231, %v2378
      %v2407 = vmul.f32 %v2232, %v2378
      %v2408 = vmul.f32 %v2233, %v2378
      %v2409 = vmul.f32 %v2234, %v2378
      %v2410 = vmul.f32 %v2235, %v2378
      %v2411 = vadd.f32 %v2342, %v2379
      %v2412 = vadd.f32 %v2343, %v2380
      %v2413 = vadd.f32 %v2344, %v2381
      %v2414 = vadd.f32 %v2345, %v2382
      %v2415 = vadd.f32 %v2346, %v2383
      %v2416 = vadd.f32 %v2347, %v2384
      %v2417 = vadd.f32 %v2348, %v2385
      %v2418 = vadd.f32 %v2349, %v2386
      %v2419 = vadd.f32 %v2350, %v2387
      %v2420 = vadd.f32 %v2351, %v2388
      %v2421 = vadd.f32 %v2352, %v2389
      %v2422 = vadd.f32 %v2353, %v2390
      %v2423 = vadd.f32 %v2354, %v2391
      %v2424 = vadd.f32 %v2355, %v2392
      %v2425 = vadd.f32 %v2356, %v2393
      %v2426 = vadd.f32 %v2357, %v2394
      %v2427 = vadd.f32 %v2358, %v2395
      %v2428 = vadd.f32 %v2359, %v2396
      %v2429 = vadd.f32 %v2360, %v2397
      %v2430 = vadd.f32 %v2361, %v2398
      %v2431 = vadd.f32 %v2362, %v2399
      %v2432 = vadd.f32 %v2363, %v2400
      %v2433 = vadd.f32 %v2364, %v2401
      %v2434 = vadd.f32 %v2365, %v2402
      %v2435 = vadd.f32 %v2366, %v2403
      %v2436 = vadd.f32 %v2367, %v2404
      %v2437 = vadd.f32 %v2368, %v2405
      %v2438 = vadd.f32 %v2369, %v2406
      %v2439 = vadd.f32 %v2370, %v2407
      %v2440 = vadd.f32 %v2371, %v2408
      %v2441 = vadd.f32 %v2372, %v2409
      %v2442 = vadd.f32 %v2373, %v2410
      %v2443 = vld [vmem:[#allocation2 + $0x2] sm:$0xff]
      %v2444 = vld [vmem:[#allocation2 + $0xa] sm:$0xff]
      %v2445 = vld [vmem:[#allocation2 + $0x1a] sm:$0xff]
      %v2446 = vld [vmem:[#allocation2 + $0x22] sm:$0xff]
      %v2447 = vld [vmem:[#allocation2 + $0x32] sm:$0xff]
      %v2448 = vld [vmem:[#allocation2 + $0x3a] sm:$0xff]
      %v2449 = vld [vmem:[#allocation2 + $0x4a] sm:$0xff]
      %v2450 = vld [vmem:[#allocation2 + $0x52] sm:$0xff]
      %v2451 = vld [vmem:[#allocation2 + $0x62] sm:$0xff]
      %v2452 = vld [vmem:[#allocation2 + $0x6a] sm:$0xff]
      %v2453 = vld [vmem:[#allocation2 + $0x7a] sm:$0xff]
      %v2454 = vld [vmem:[#allocation2 + $0x82] sm:$0xff]
      %v2455 = vld [vmem:[#allocation2 + $0x92] sm:$0xff]
      %v2456 = vld [vmem:[#allocation2 + $0x9a] sm:$0xff]
      %v2457 = vld [vmem:[#allocation2 + $0xaa] sm:$0xff]
      %v2458 = vld [vmem:[#allocation2 + $0xb2] sm:$0xff]
      %v2459 = vld [vmem:[#allocation2 + $0xc2] sm:$0xff]
      %v2460 = vld [vmem:[#allocation2 + $0xca] sm:$0xff]
      %v2461 = vld [vmem:[#allocation2 + $0xda] sm:$0xff]
      %v2462 = vld [vmem:[#allocation2 + $0xe2] sm:$0xff]
      %v2463 = vld [vmem:[#allocation2 + $0xf2] sm:$0xff]
      %v2464 = vld [vmem:[#allocation2 + $0xfa] sm:$0xff]
      %v2465 = vld [vmem:[#allocation2 + $0x10a] sm:$0xff]
      %v2466 = vld [vmem:[#allocation2 + $0x112] sm:$0xff]
      %v2467 = vld [vmem:[#allocation2 + $0x122] sm:$0xff]
      %v2468 = vld [vmem:[#allocation2 + $0x12a] sm:$0xff]
      %v2469 = vld [vmem:[#allocation2 + $0x13a] sm:$0xff]
      %v2470 = vld [vmem:[#allocation2 + $0x142] sm:$0xff]
      %v2471 = vld [vmem:[#allocation2 + $0x152] sm:$0xff]
      %v2472 = vld [vmem:[#allocation2 + $0x15a] sm:$0xff]
      %v2473 = vld [vmem:[#allocation2 + $0x16a] sm:$0xff]
      %v2474 = vld [vmem:[#allocation2 + $0x172] sm:$0xff]
      %v2475 = vld [vmem:[#allocation2 + $0x182] sm:$0xff]
      %v2476 = vld [vmem:[#allocation2 + $0x18a] sm:$0xff]
      %v2477 = vld [vmem:[#allocation2 + $0x19a] sm:$0xff]
      %v2478 = vld [vmem:[#allocation2 + $0x1a2] sm:$0xff]
      %v2479 = vld [vmem:[%s3 + $0x2] sm:$0x1]
      %v2480 = vlaneseq
      %v2481 = vshrl.u32 %v2480, 7
      %v2482 = vsub.s32 0, %v2481
      %v2483 = vrot.slane %v2479, %v2482
      %v2484 = vmul.f32 %v2443, %v2483
      %v2485 = vmul.f32 %v2444, %v2483
      %v2486 = vmul.f32 %v2445, %v2483
      %v2487 = vmul.f32 %v2446, %v2483
      %v2488 = vmul.f32 %v2447, %v2483
      %v2489 = vmul.f32 %v2448, %v2483
      %v2490 = vmul.f32 %v2449, %v2483
      %v2491 = vmul.f32 %v2450, %v2483
      %v2492 = vmul.f32 %v2451, %v2483
      %v2493 = vmul.f32 %v2452, %v2483
      %v2494 = vmul.f32 %v2453, %v2483
      %v2495 = vmul.f32 %v2454, %v2483
      %v2496 = vmul.f32 %v2455, %v2483
      %v2497 = vmul.f32 %v2456, %v2483
      %v2498 = vmul.f32 %v2457, %v2483
      %v2499 = vmul.f32 %v2458, %v2483
      %v2500 = vmul.f32 %v2459, %v2483
      %v2501 = vmul.f32 %v2460, %v2483
      %v2502 = vmul.f32 %v2461, %v2483
      %v2503 = vmul.f32 %v2462, %v2483
      %v2504 = vmul.f32 %v2463, %v2483
      %v2505 = vmul.f32 %v2464, %v2483
      %v2506 = vmul.f32 %v2465, %v2483
      %v2507 = vmul.f32 %v2466, %v2483
      %v2508 = vmul.f32 %v2467, %v2483
      %v2509 = vmul.f32 %v2468, %v2483
      %v2510 = vmul.f32 %v2469, %v2483
      %v2511 = vmul.f32 %v2470, %v2483
      %v2512 = vmul.f32 %v2471, %v2483
      %v2513 = vmul.f32 %v2472, %v2483
      %v2514 = vmul.f32 %v2473, %v2483
      %v2515 = vmul.f32 %v2474, %v2483
      %v2516 = vadd.f32 %v2411, %v2484
      %v2517 = vadd.f32 %v2412, %v2485
      %v2518 = vadd.f32 %v2413, %v2486
      %v2519 = vadd.f32 %v2414, %v2487
      %v2520 = vadd.f32 %v2415, %v2488
      %v2521 = vadd.f32 %v2416, %v2489
      %v2522 = vadd.f32 %v2417, %v2490
      %v2523 = vadd.f32 %v2418, %v2491
      %v2524 = vadd.f32 %v2419, %v2492
      %v2525 = vadd.f32 %v2420, %v2493
      %v2526 = vadd.f32 %v2421, %v2494
      %v2527 = vadd.f32 %v2422, %v2495
      %v2528 = vadd.f32 %v2423, %v2496
      %v2529 = vadd.f32 %v2424, %v2497
      %v2530 = vadd.f32 %v2425, %v2498
      %v2531 = vadd.f32 %v2426, %v2499
      %v2532 = vadd.f32 %v2427, %v2500
      %v2533 = vadd.f32 %v2428, %v2501
      %v2534 = vadd.f32 %v2429, %v2502
      %v2535 = vadd.f32 %v2430, %v2503
      %v2536 = vadd.f32 %v2431, %v2504
      %v2537 = vadd.f32 %v2432, %v2505
      %v2538 = vadd.f32 %v2433, %v2506
      %v2539 = vadd.f32 %v2434, %v2507
      %v2540 = vadd.f32 %v2435, %v2508
      %v2541 = vadd.f32 %v2436, %v2509
      %v2542 = vadd.f32 %v2437, %v2510
      %v2543 = vadd.f32 %v2438, %v2511
      %v2544 = vadd.f32 %v2439, %v2512
      %v2545 = vadd.f32 %v2440, %v2513
      %v2546 = vadd.f32 %v2441, %v2514
      %v2547 = vadd.f32 %v2442, %v2515
      %v2548 = vld [vmem:[%s2060 + $0x2] sm:$0x1]
      %v2549 = vlaneseq
      %v2550 = vshrl.u32 %v2549, 7
      %v2551 = vsub.s32 0, %v2550
      %v2552 = vrot.slane %v2548, %v2551
      %v2553 = vmul.f32 %v2445, %v2552
      %v2554 = vmul.f32 %v2446, %v2552
      %v2555 = vmul.f32 %v2447, %v2552
      %v2556 = vmul.f32 %v2448, %v2552
      %v2557 = vmul.f32 %v2449, %v2552
      %v2558 = vmul.f32 %v2450, %v2552
      %v2559 = vmul.f32 %v2451, %v2552
      %v2560 = vmul.f32 %v2452, %v2552
      %v2561 = vmul.f32 %v2453, %v2552
      %v2562 = vmul.f32 %v2454, %v2552
      %v2563 = vmul.f32 %v2455, %v2552
      %v2564 = vmul.f32 %v2456, %v2552
      %v2565 = vmul.f32 %v2457, %v2552
      %v2566 = vmul.f32 %v2458, %v2552
      %v2567 = vmul.f32 %v2459, %v2552
      %v2568 = vmul.f32 %v2460, %v2552
      %v2569 = vmul.f32 %v2461, %v2552
      %v2570 = vmul.f32 %v2462, %v2552
      %v2571 = vmul.f32 %v2463, %v2552
      %v2572 = vmul.f32 %v2464, %v2552
      %v2573 = vmul.f32 %v2465, %v2552
      %v2574 = vmul.f32 %v2466, %v2552
      %v2575 = vmul.f32 %v2467, %v2552
      %v2576 = vmul.f32 %v2468, %v2552
      %v2577 = vmul.f32 %v2469, %v2552
      %v2578 = vmul.f32 %v2470, %v2552
      %v2579 = vmul.f32 %v2471, %v2552
      %v2580 = vmul.f32 %v2472, %v2552
      %v2581 = vmul.f32 %v2473, %v2552
      %v2582 = vmul.f32 %v2474, %v2552
      %v2583 = vmul.f32 %v2475, %v2552
      %v2584 = vmul.f32 %v2476, %v2552
      %v2585 = vadd.f32 %v2516, %v2553
      %v2586 = vadd.f32 %v2517, %v2554
      %v2587 = vadd.f32 %v2518, %v2555
      %v2588 = vadd.f32 %v2519, %v2556
      %v2589 = vadd.f32 %v2520, %v2557
      %v2590 = vadd.f32 %v2521, %v2558
      %v2591 = vadd.f32 %v2522, %v2559
      %v2592 = vadd.f32 %v2523, %v2560
      %v2593 = vadd.f32 %v2524, %v2561
      %v2594 = vadd.f32 %v2525, %v2562
      %v2595 = vadd.f32 %v2526, %v2563
      %v2596 = vadd.f32 %v2527, %v2564
      %v2597 = vadd.f32 %v2528, %v2565
      %v2598 = vadd.f32 %v2529, %v2566
      %v2599 = vadd.f32 %v2530, %v2567
      %v2600 = vadd.f32 %v2531, %v2568
      %v2601 = vadd.f32 %v2532, %v2569
      %v2602 = vadd.f32 %v2533, %v2570
      %v2603 = vadd.f32 %v2534, %v2571
      %v2604 = vadd.f32 %v2535, %v2572
      %v2605 = vadd.f32 %v2536, %v2573
      %v2606 = vadd.f32 %v2537, %v2574
      %v2607 = vadd.f32 %v2538, %v2575
      %v2608 = vadd.f32 %v2539, %v2576
      %v2609 = vadd.f32 %v2540, %v2577
      %v2610 = vadd.f32 %v2541, %v2578
      %v2611 = vadd.f32 %v2542, %v2579
      %v2612 = vadd.f32 %v2543, %v2580
      %v2613 = vadd.f32 %v2544, %v2581
      %v2614 = vadd.f32 %v2545, %v2582
      %v2615 = vadd.f32 %v2546, %v2583
      %v2616 = vadd.f32 %v2547, %v2584
      %v2617 = vld [vmem:[%s2130 + $0x2] sm:$0x1]
      %v2618 = vlaneseq
      %v2619 = vshrl.u32 %v2618, 7
      %v2620 = vsub.s32 0, %v2619
      %v2621 = vrot.slane %v2617, %v2620
      %v2622 = vmul.f32 %v2447, %v2621
      %v2623 = vmul.f32 %v2448, %v2621
      %v2624 = vmul.f32 %v2449, %v2621
      %v2625 = vmul.f32 %v2450, %v2621
      %v2626 = vmul.f32 %v2451, %v2621
      %v2627 = vmul.f32 %v2452, %v2621
      %v2628 = vmul.f32 %v2453, %v2621
      %v2629 = vmul.f32 %v2454, %v2621
      %v2630 = vmul.f32 %v2455, %v2621
      %v2631 = vmul.f32 %v2456, %v2621
      %v2632 = vmul.f32 %v2457, %v2621
      %v2633 = vmul.f32 %v2458, %v2621
      %v2634 = vmul.f32 %v2459, %v2621
      %v2635 = vmul.f32 %v2460, %v2621
      %v2636 = vmul.f32 %v2461, %v2621
      %v2637 = vmul.f32 %v2462, %v2621
      %v2638 = vmul.f32 %v2463, %v2621
      %v2639 = vmul.f32 %v2464, %v2621
      %v2640 = vmul.f32 %v2465, %v2621
      %v2641 = vmul.f32 %v2466, %v2621
      %v2642 = vmul.f32 %v2467, %v2621
      %v2643 = vmul.f32 %v2468, %v2621
      %v2644 = vmul.f32 %v2469, %v2621
      %v2645 = vmul.f32 %v2470, %v2621
      %v2646 = vmul.f32 %v2471, %v2621
      %v2647 = vmul.f32 %v2472, %v2621
      %v2648 = vmul.f32 %v2473, %v2621
      %v2649 = vmul.f32 %v2474, %v2621
      %v2650 = vmul.f32 %v2475, %v2621
      %v2651 = vmul.f32 %v2476, %v2621
      %v2652 = vmul.f32 %v2477, %v2621
      %v2653 = vmul.f32 %v2478, %v2621
      %v2654 = vadd.f32 %v2585, %v2622
      %v2655 = vadd.f32 %v2586, %v2623
      %v2656 = vadd.f32 %v2587, %v2624
      %v2657 = vadd.f32 %v2588, %v2625
      %v2658 = vadd.f32 %v2589, %v2626
      %v2659 = vadd.f32 %v2590, %v2627
      %v2660 = vadd.f32 %v2591, %v2628
      %v2661 = vadd.f32 %v2592, %v2629
      %v2662 = vadd.f32 %v2593, %v2630
      %v2663 = vadd.f32 %v2594, %v2631
      %v2664 = vadd.f32 %v2595, %v2632
      %v2665 = vadd.f32 %v2596, %v2633
      %v2666 = vadd.f32 %v2597, %v2634
      %v2667 = vadd.f32 %v2598, %v2635
      %v2668 = vadd.f32 %v2599, %v2636
      %v2669 = vadd.f32 %v2600, %v2637
      %v2670 = vadd.f32 %v2601, %v2638
      %v2671 = vadd.f32 %v2602, %v2639
      %v2672 = vadd.f32 %v2603, %v2640
      %v2673 = vadd.f32 %v2604, %v2641
      %v2674 = vadd.f32 %v2605, %v2642
      %v2675 = vadd.f32 %v2606, %v2643
      %v2676 = vadd.f32 %v2607, %v2644
      %v2677 = vadd.f32 %v2608, %v2645
      %v2678 = vadd.f32 %v2609, %v2646
      %v2679 = vadd.f32 %v2610, %v2647
      %v2680 = vadd.f32 %v2611, %v2648
      %v2681 = vadd.f32 %v2612, %v2649
      %v2682 = vadd.f32 %v2613, %v2650
      %v2683 = vadd.f32 %v2614, %v2651
      %v2684 = vadd.f32 %v2615, %v2652
      %v2685 = vadd.f32 %v2616, %v2653
      %v2686 = vld [vmem:[%s4] sm:$0x1]
      %v2688 = vlaneseq
      %v2689 = vshrl.u32 %v2688, 7
      %v2690 = vsub.s32 0, %v2689
      %v2691 = vrot.slane %v2686, %v2690
      %v2693 = vadd.f32 %v2654, %v2691
      %v2694 = vadd.f32 %v2655, %v2691
      %v2695 = vadd.f32 %v2656, %v2691
      %v2696 = vadd.f32 %v2657, %v2691
      %v2697 = vadd.f32 %v2658, %v2691
      %v2698 = vadd.f32 %v2659, %v2691
      %v2699 = vadd.f32 %v2660, %v2691
      %v2700 = vadd.f32 %v2661, %v2691
      %v2701 = vadd.f32 %v2662, %v2691
      %v2702 = vadd.f32 %v2663, %v2691
      %v2703 = vadd.f32 %v2664, %v2691
      %v2704 = vadd.f32 %v2665, %v2691
      %v2705 = vadd.f32 %v2666, %v2691
      %v2706 = vadd.f32 %v2667, %v2691
      %v2707 = vadd.f32 %v2668, %v2691
      %v2708 = vadd.f32 %v2669, %v2691
      %v2709 = vadd.f32 %v2670, %v2691
      %v2710 = vadd.f32 %v2671, %v2691
      %v2711 = vadd.f32 %v2672, %v2691
      %v2712 = vadd.f32 %v2673, %v2691
      %v2713 = vadd.f32 %v2674, %v2691
      %v2714 = vadd.f32 %v2675, %v2691
      %v2715 = vadd.f32 %v2676, %v2691
      %v2716 = vadd.f32 %v2677, %v2691
      %v2717 = vadd.f32 %v2678, %v2691
      %v2718 = vadd.f32 %v2679, %v2691
      %v2719 = vadd.f32 %v2680, %v2691
      %v2720 = vadd.f32 %v2681, %v2691
      %v2721 = vadd.f32 %v2682, %v2691
      %v2722 = vadd.f32 %v2683, %v2691
      %v2723 = vadd.f32 %v2684, %v2691
      %v2724 = vadd.f32 %v2685, %v2691
      %v2725 = vmax.f32 %v2693, 0.0
      %v2726 = vmax.f32 %v2694, 0.0
      %v2727 = vmax.f32 %v2695, 0.0
      %v2728 = vmax.f32 %v2696, 0.0
      %v2729 = vmax.f32 %v2697, 0.0
      %v2730 = vmax.f32 %v2698, 0.0
      %v2731 = vmax.f32 %v2699, 0.0
      %v2732 = vmax.f32 %v2700, 0.0
      %v2733 = vmax.f32 %v2701, 0.0
      %v2734 = vmax.f32 %v2702, 0.0
      %v2735 = vmax.f32 %v2703, 0.0
      %v2736 = vmax.f32 %v2704, 0.0
      %v2737 = vmax.f32 %v2705, 0.0
      %v2738 = vmax.f32 %v2706, 0.0
      %v2739 = vmax.f32 %v2707, 0.0
      %v2740 = vmax.f32 %v2708, 0.0
      %v2741 = vmax.f32 %v2709, 0.0
      %v2742 = vmax.f32 %v2710, 0.0
      %v2743 = vmax.f32 %v2711, 0.0
      %v2744 = vmax.f32 %v2712, 0.0
      %v2745 = vmax.f32 %v2713, 0.0
      %v2746 = vmax.f32 %v2714, 0.0
      %v2747 = vmax.f32 %v2715, 0.0
      %v2748 = vmax.f32 %v2716, 0.0
      %v2749 = vmax.f32 %v2717, 0.0
      %v2750 = vmax.f32 %v2718, 0.0
      %v2751 = vmax.f32 %v2719, 0.0
      %v2752 = vmax.f32 %v2720, 0.0
      %v2753 = vmax.f32 %v2721, 0.0
      %v2754 = vmax.f32 %v2722, 0.0
      %v2755 = vmax.f32 %v2723, 0.0
      %v2756 = vmax.f32 %v2724, 0.0
      %v2757 = vld [vmem:[%s5] sm:$0xff]
      %v2758 = vld [vmem:[%s5 + $0x8] sm:$0xff]
      %v2759 = vld [vmem:[%s5 + $0x10] sm:$0xff]
      %v2761 = vsel %vm1846, %v2725, 0
      %v2764 = vsel %vm1846, %v2726, 0
      %v2767 = vsel %vm1846, %v2727, 0
      %v2770 = vsel %vm1846, %v2728, 0
      %v2773 = vsel %vm1846, %v2729, 0
      %v2776 = vsel %vm1846, %v2730, 0
      %v2779 = vsel %vm1846, %v2731, 0
      %v2782 = vsel %vm1846, %v2732, 0
      %v2785 = vsel %vm1846, %v2733, 0
      %v2788 = vsel %vm1846, %v2734, 0
      %v2791 = vsel %vm1846, %v2735, 0
      %v2794 = vsel %vm1846, %v2736, 0
      %v2797 = vsel %vm1846, %v2737, 0
      %v2800 = vsel %vm1846, %v2738, 0
      %v2803 = vsel %vm1846, %v2739, 0
      %v2806 = vsel %vm1846, %v2740, 0
      %v2809 = vsel %vm1846, %v2741, 0
      %v2812 = vsel %vm1846, %v2742, 0
      %v2815 = vsel %vm1846, %v2743, 0
      %v2818 = vsel %vm1846, %v2744, 0
      %v2821 = vsel %vm1846, %v2745, 0
      %v2824 = vsel %vm1846, %v2746, 0
      %v2827 = vsel %vm1846, %v2747, 0
      %v2830 = vsel %vm1846, %v2748, 0
      %v2833 = vsel %vm1846, %v2749, 0
      %v2836 = vsel %vm1846, %v2750, 0
      %v2839 = vsel %vm1846, %v2751, 0
      %v2842 = vsel %vm1846, %v2752, 0
      %v2845 = vsel %vm1846, %v2753, 0
      %v2848 = vsel %vm1846, %v2754, 0
      %v2851 = vsel %vm1846, %v2755, 0
      %v2854 = vsel %vm1846, %v2756, 0
      %2856 = vmatprep.subr.mxu0 0.0
      %2857 = vmatpush1.msra.mxu0 %v2757
      %2858 = vmatprep.subr.mxu0 0.0
      %2859 = vmatpush1.msra.mxu0 %v2758
      %2860 = vmatprep.subr.mxu0 0.0
      %2861 = vmatpush1.msra.mxu0 %v2759
      %2862 = vmatprep.subr.mxu0 0.0
      %2863 = vmatpush1.msra.mxu0 0.0
      %2864 = vmatprep.subr.mxu0 0.0
      %2865 = vmatpush1.msra.mxu0 0.0
      %2866 = vmatprep.subr.mxu0 0.0
      %2867 = vmatpush1.msra.mxu0 0.0
      %2868 = vmatprep.subr.mxu0 0.0
      %2869 = vmatpush1.msra.mxu0 0.0
      %2870 = vmatprep.subr.mxu0 0.0
      %2871 = vmatpush1.msra.mxu0 0.0
      %2872 = vmatprep.subr.mxu0 0.0
      %2873 = vmatpush1.msra.mxu0 0.0
      %2874 = vmatprep.subr.mxu0 0.0
      %2875 = vmatpush1.msra.mxu0 0.0
      %2876 = vmatprep.subr.mxu0 0.0
      %2877 = vmatpush1.msra.mxu0 0.0
      %2878 = vmatprep.subr.mxu0 0.0
      %2879 = vmatpush1.msra.mxu0 0.0
      %2880 = vmatprep.subr.mxu0 0.0
      %2881 = vmatpush1.msra.mxu0 0.0
      %2882 = vmatprep.subr.mxu0 0.0
      %2883 = vmatpush1.msra.mxu0 0.0
      %2884 = vmatprep.subr.mxu0 0.0
      %2885 = vmatpush1.msra.mxu0 0.0
      %2886 = vmatprep.subr.mxu0 0.0
      %2887 = vmatpush1.msra.mxu0 0.0
      %2888 = vmatprep.subr.mxu0 0.0
      %2889 = vmatpush1.msra.mxu0 0.0
      %2890 = vmatprep.subr.mxu0 0.0
      %2891 = vmatpush1.msra.mxu0 0.0
      %2892 = vmatprep.subr.mxu0 0.0
      %2893 = vmatpush1.msra.mxu0 0.0
      %2894 = vmatprep.subr.mxu0 0.0
      %2895 = vmatpush1.msra.mxu0 0.0
      %2896 = vmatprep.subr.mxu0 0.0
      %2897 = vmatpush1.msra.mxu0 0.0
      %2898 = vmatprep.subr.mxu0 0.0
      %2899 = vmatpush1.msra.mxu0 0.0
      %2900 = vmatprep.subr.mxu0 0.0
      %2901 = vmatpush1.msra.mxu0 0.0
      %2902 = vmatprep.subr.mxu0 0.0
      %2903 = vmatpush1.msra.mxu0 0.0
      %2904 = vmatprep.subr.mxu0 0.0
      %2905 = vmatpush1.msra.mxu0 0.0
      %2906 = vmatprep.subr.mxu0 0.0
      %2907 = vmatpush1.msra.mxu0 0.0
      %2908 = vmatprep.subr.mxu0 0.0
      %2909 = vmatpush1.msra.mxu0 0.0
      %2910 = vmatprep.subr.mxu0 0.0
      %2911 = vmatpush1.msra.mxu0 0.0
      %2912 = vmatprep.subr.mxu0 0.0
      %2913 = vmatpush1.msra.mxu0 0.0
      %2914 = vmatprep.subr.mxu0 0.0
      %2915 = vmatpush1.msra.mxu0 0.0
      %2916 = vmatprep.subr.mxu0 0.0
      %2917 = vmatpush1.msra.mxu0 0.0
      %2918 = vmatprep.subr.mxu0 0.0
      %2919 = vmatpush1.msra.mxu0 0.0
      %2920 = vmatprep.mubr.f32.mxu0 0.0
      %2921 = vmatmul.mubr.f32.gmra.mrb[0].mxu0 %v2761
      %v2922 = vpop.f32.mrb[0].mxu0
      %v2923 = vadd.f32 0.0, %v2922
      %v2924 = vpop.f32.mrb[0].mxu0
      %2925 = vmatprep.mubr.f32.mxu0 0.0
      %2926 = vmatmul.mubr.f32.gmra.mrb[0].mxu0 %v2764
      %v2927 = vpop.f32.mrb[0].mxu0
      %v2928 = vadd.f32 0.0, %v2927
      %v2929 = vpop.f32.mrb[0].mxu0
      %2930 = vmatprep.mubr.f32.mxu0 0.0
      %2931 = vmatmul.mubr.f32.gmra.mrb[0].mxu0 %v2767
      %v2932 = vpop.f32.mrb[0].mxu0
      %v2933 = vadd.f32 0.0, %v2932
      %v2934 = vpop.f32.mrb[0].mxu0
      %2935 = vmatprep.mubr.f32.mxu0 0.0
      %2936 = vmatmul.mubr.f32.gmra.mrb[0].mxu0 %v2770
      %v2937 = vpop.f32.mrb[0].mxu0
      %v2938 = vadd.f32 0.0, %v2937
      %v2939 = vpop.f32.mrb[0].mxu0
      %2940 = vmatprep.mubr.f32.mxu0 0.0
      %2941 = vmatmul.mubr.f32.gmra.mrb[0].mxu0 %v2773
      %v2942 = vpop.f32.mrb[0].mxu0
      %v2943 = vadd.f32 0.0, %v2942
      %v2944 = vpop.f32.mrb[0].mxu0
      %2945 = vmatprep.mubr.f32.mxu0 0.0
      %2946 = vmatmul.mubr.f32.gmra.mrb[0].mxu0 %v2776
      %v2947 = vpop.f32.mrb[0].mxu0
      %v2948 = vadd.f32 0.0, %v2947
      %v2949 = vpop.f32.mrb[0].mxu0
      %2950 = vmatprep.mubr.f32.mxu0 0.0
      %2951 = vmatmul.mubr.f32.gmra.mrb[0].mxu0 %v2779
      %v2952 = vpop.f32.mrb[0].mxu0
      %v2953 = vadd.f32 0.0, %v2952
      %v2954 = vpop.f32.mrb[0].mxu0
      %2955 = vmatprep.mubr.f32.mxu0 0.0
      %2956 = vmatmul.mubr.f32.gmra.mrb[0].mxu0 %v2782
      %v2957 = vpop.f32.mrb[0].mxu0
      %v2958 = vadd.f32 0.0, %v2957
      %v2959 = vpop.f32.mrb[0].mxu0
      %2960 = vmatprep.mubr.f32.mxu0 0.0
      %2961 = vmatmul.mubr.f32.gmra.mrb[0].mxu0 %v2785
      %v2962 = vpop.f32.mrb[0].mxu0
      %v2963 = vadd.f32 0.0, %v2962
      %v2964 = vpop.f32.mrb[0].mxu0
      %2965 = vmatprep.mubr.f32.mxu0 0.0
      %2966 = vmatmul.mubr.f32.gmra.mrb[0].mxu0 %v2788
      %v2967 = vpop.f32.mrb[0].mxu0
      %v2968 = vadd.f32 0.0, %v2967
      %v2969 = vpop.f32.mrb[0].mxu0
      %2970 = vmatprep.mubr.f32.mxu0 0.0
      %2971 = vmatmul.mubr.f32.gmra.mrb[0].mxu0 %v2791
      %v2972 = vpop.f32.mrb[0].mxu0
      %v2973 = vadd.f32 0.0, %v2972
      %v2974 = vpop.f32.mrb[0].mxu0
      %2975 = vmatprep.mubr.f32.mxu0 0.0
      %2976 = vmatmul.mubr.f32.gmra.mrb[0].mxu0 %v2794
      %v2977 = vpop.f32.mrb[0].mxu0
      %v2978 = vadd.f32 0.0, %v2977
      %v2979 = vpop.f32.mrb[0].mxu0
      %2980 = vmatprep.mubr.f32.mxu0 0.0
      %2981 = vmatmul.mubr.f32.gmra.mrb[0].mxu0 %v2797
      %v2982 = vpop.f32.mrb[0].mxu0
      %v2983 = vadd.f32 0.0, %v2982
      %v2984 = vpop.f32.mrb[0].mxu0
      %2985 = vmatprep.mubr.f32.mxu0 0.0
      %2986 = vmatmul.mubr.f32.gmra.mrb[0].mxu0 %v2800
      %v2987 = vpop.f32.mrb[0].mxu0
      %v2988 = vadd.f32 0.0, %v2987
      %v2989 = vpop.f32.mrb[0].mxu0
      %2990 = vmatprep.mubr.f32.mxu0 0.0
      %2991 = vmatmul.mubr.f32.gmra.mrb[0].mxu0 %v2803
      %v2992 = vpop.f32.mrb[0].mxu0
      %v2993 = vadd.f32 0.0, %v2992
      %v2994 = vpop.f32.mrb[0].mxu0
      %2995 = vmatprep.mubr.f32.mxu0 0.0
      %2996 = vmatmul.mubr.f32.gmra.mrb[0].mxu0 %v2806
      %v2997 = vpop.f32.mrb[0].mxu0
      %v2998 = vadd.f32 0.0, %v2997
      %v2999 = vpop.f32.mrb[0].mxu0
      %3000 = vmatprep.mubr.f32.mxu0 0.0
      %3001 = vmatmul.mubr.f32.gmra.mrb[0].mxu0 %v2809
      %v3002 = vpop.f32.mrb[0].mxu0
      %v3003 = vadd.f32 0.0, %v3002
      %v3004 = vpop.f32.mrb[0].mxu0
      %3005 = vmatprep.mubr.f32.mxu0 0.0
      %3006 = vmatmul.mubr.f32.gmra.mrb[0].mxu0 %v2812
      %v3007 = vpop.f32.mrb[0].mxu0
      %v3008 = vadd.f32 0.0, %v3007
      %v3009 = vpop.f32.mrb[0].mxu0
      %3010 = vmatprep.mubr.f32.mxu0 0.0
      %3011 = vmatmul.mubr.f32.gmra.mrb[0].mxu0 %v2815
      %v3012 = vpop.f32.mrb[0].mxu0
      %v3013 = vadd.f32 0.0, %v3012
      %v3014 = vpop.f32.mrb[0].mxu0
      %3015 = vmatprep.mubr.f32.mxu0 0.0
      %3016 = vmatmul.mubr.f32.gmra.mrb[0].mxu0 %v2818
      %v3017 = vpop.f32.mrb[0].mxu0
      %v3018 = vadd.f32 0.0, %v3017
      %v3019 = vpop.f32.mrb[0].mxu0
      %3020 = vmatprep.mubr.f32.mxu0 0.0
      %3021 = vmatmul.mubr.f32.gmra.mrb[0].mxu0 %v2821
      %v3022 = vpop.f32.mrb[0].mxu0
      %v3023 = vadd.f32 0.0, %v3022
      %v3024 = vpop.f32.mrb[0].mxu0
      %3025 = vmatprep.mubr.f32.mxu0 0.0
      %3026 = vmatmul.mubr.f32.gmra.mrb[0].mxu0 %v2824
      %v3027 = vpop.f32.mrb[0].mxu0
      %v3028 = vadd.f32 0.0, %v3027
      %v3029 = vpop.f32.mrb[0].mxu0
      %3030 = vmatprep.mubr.f32.mxu0 0.0
      %3031 = vmatmul.mubr.f32.gmra.mrb[0].mxu0 %v2827
      %v3032 = vpop.f32.mrb[0].mxu0
      %v3033 = vadd.f32 0.0, %v3032
      %v3034 = vpop.f32.mrb[0].mxu0
      %3035 = vmatprep.mubr.f32.mxu0 0.0
      %3036 = vmatmul.mubr.f32.gmra.mrb[0].mxu0 %v2830
      %v3037 = vpop.f32.mrb[0].mxu0
      %v3038 = vadd.f32 0.0, %v3037
      %v3039 = vpop.f32.mrb[0].mxu0
      %3040 = vmatprep.mubr.f32.mxu0 0.0
      %3041 = vmatmul.mubr.f32.gmra.mrb[0].mxu0 %v2833
      %v3042 = vpop.f32.mrb[0].mxu0
      %v3043 = vadd.f32 0.0, %v3042
      %v3044 = vpop.f32.mrb[0].mxu0
      %3045 = vmatprep.mubr.f32.mxu0 0.0
      %3046 = vmatmul.mubr.f32.gmra.mrb[0].mxu0 %v2836
      %v3047 = vpop.f32.mrb[0].mxu0
      %v3048 = vadd.f32 0.0, %v3047
      %v3049 = vpop.f32.mrb[0].mxu0
      %3050 = vmatprep.mubr.f32.mxu0 0.0
      %3051 = vmatmul.mubr.f32.gmra.mrb[0].mxu0 %v2839
      %v3052 = vpop.f32.mrb[0].mxu0
      %v3053 = vadd.f32 0.0, %v3052
      %v3054 = vpop.f32.mrb[0].mxu0
      %3055 = vmatprep.mubr.f32.mxu0 0.0
      %3056 = vmatmul.mubr.f32.gmra.mrb[0].mxu0 %v2842
      %v3057 = vpop.f32.mrb[0].mxu0
      %v3058 = vadd.f32 0.0, %v3057
      %v3059 = vpop.f32.mrb[0].mxu0
      %3060 = vmatprep.mubr.f32.mxu0 0.0
      %3061 = vmatmul.mubr.f32.gmra.mrb[0].mxu0 %v2845
      %v3062 = vpop.f32.mrb[0].mxu0
      %v3063 = vadd.f32 0.0, %v3062
      %v3064 = vpop.f32.mrb[0].mxu0
      %3065 = vmatprep.mubr.f32.mxu0 0.0
      %3066 = vmatmul.mubr.f32.gmra.mrb[0].mxu0 %v2848
      %v3067 = vpop.f32.mrb[0].mxu0
      %v3068 = vadd.f32 0.0, %v3067
      %v3069 = vpop.f32.mrb[0].mxu0
      %3070 = vmatprep.mubr.f32.mxu0 0.0
      %3071 = vmatmul.mubr.f32.gmra.mrb[0].mxu0 %v2851
      %v3072 = vpop.f32.mrb[0].mxu0
      %v3073 = vadd.f32 0.0, %v3072
      %v3074 = vpop.f32.mrb[0].mxu0
      %3075 = vmatprep.mubr.f32.mxu0 0.0
      %3076 = vmatmul.mubr.f32.gmra.mrb[0].mxu0 %v2854
      %v3077 = vpop.f32.mrb[0].mxu0
      %v3078 = vadd.f32 0.0, %v3077
      %v3079 = vpop.f32.mrb[0].mxu0
      %3080 = vdwg.mxu0
      %v3081 = vld [vmem:[%s6] sm:$0x1]
      %v3083 = vlaneseq
      %v3084 = vshrl.u32 %v3083, 7
      %v3085 = vsub.s32 0, %v3084
      %v3086 = vrot.slane %v3081, %v3085
      %v3088 = vadd.f32 %v2923, %v3086
      %v3089 = vadd.f32 %v2928, %v3086
      %v3090 = vadd.f32 %v2933, %v3086
      %v3091 = vadd.f32 %v2938, %v3086
      %v3092 = vadd.f32 %v2943, %v3086
      %v3093 = vadd.f32 %v2948, %v3086
      %v3094 = vadd.f32 %v2953, %v3086
      %v3095 = vadd.f32 %v2958, %v3086
      %v3096 = vadd.f32 %v2963, %v3086
      %v3097 = vadd.f32 %v2968, %v3086
      %v3098 = vadd.f32 %v2973, %v3086
      %v3099 = vadd.f32 %v2978, %v3086
      %v3100 = vadd.f32 %v2983, %v3086
      %v3101 = vadd.f32 %v2988, %v3086
      %v3102 = vadd.f32 %v2993, %v3086
      %v3103 = vadd.f32 %v2998, %v3086
      %v3104 = vadd.f32 %v3003, %v3086
      %v3105 = vadd.f32 %v3008, %v3086
      %v3106 = vadd.f32 %v3013, %v3086
      %v3107 = vadd.f32 %v3018, %v3086
      %v3108 = vadd.f32 %v3023, %v3086
      %v3109 = vadd.f32 %v3028, %v3086
      %v3110 = vadd.f32 %v3033, %v3086
      %v3111 = vadd.f32 %v3038, %v3086
      %v3112 = vadd.f32 %v3043, %v3086
      %v3113 = vadd.f32 %v3048, %v3086
      %v3114 = vadd.f32 %v3053, %v3086
      %v3115 = vadd.f32 %v3058, %v3086
      %v3116 = vadd.f32 %v3063, %v3086
      %v3117 = vadd.f32 %v3068, %v3086
      %v3118 = vadd.f32 %v3073, %v3086
      %v3119 = vadd.f32 %v3078, %v3086
      %s3120 = sadd.s32 %s304, 1
      %s3121 = smul.u32 %s3120, 24
      %s3122 = scalar_lea.vmem %s292, %s3121
      %v3123 = vld [vmem:[%s3122 + $0x1] sm:$0xff]
      %v3124 = vld [vmem:[%s3122 + $0x9] sm:$0xff]
      %v3125 = vld [vmem:[%s3122 + $0x19] sm:$0xff]
      %v3126 = vld [vmem:[%s3122 + $0x21] sm:$0xff]
      %v3127 = vld [vmem:[%s3122 + $0x31] sm:$0xff]
      %v3128 = vld [vmem:[%s3122 + $0x39] sm:$0xff]
      %v3129 = vld [vmem:[%s3122 + $0x49] sm:$0xff]
      %v3130 = vld [vmem:[%s3122 + $0x51] sm:$0xff]
      %v3131 = vld [vmem:[%s3122 + $0x61] sm:$0xff]
      %v3132 = vld [vmem:[%s3122 + $0x69] sm:$0xff]
      %v3133 = vld [vmem:[%s3122 + $0x79] sm:$0xff]
      %v3134 = vld [vmem:[%s3122 + $0x81] sm:$0xff]
      %v3135 = vld [vmem:[%s3122 + $0x91] sm:$0xff]
      %v3136 = vld [vmem:[%s3122 + $0x99] sm:$0xff]
      %v3137 = vld [vmem:[%s3122 + $0xa9] sm:$0xff]
      %v3138 = vld [vmem:[%s3122 + $0xb1] sm:$0xff]
      %v3139 = vld [vmem:[%s3122 + $0xc1] sm:$0xff]
      %v3140 = vld [vmem:[%s3122 + $0xc9] sm:$0xff]
      %v3141 = vld [vmem:[%s3122 + $0xd9] sm:$0xff]
      %v3142 = vld [vmem:[%s3122 + $0xe1] sm:$0xff]
      %v3143 = vld [vmem:[%s3122 + $0xf1] sm:$0xff]
      %v3144 = vld [vmem:[%s3122 + $0xf9] sm:$0xff]
      %v3145 = vld [vmem:[%s3122 + $0x109] sm:$0xff]
      %v3146 = vld [vmem:[%s3122 + $0x111] sm:$0xff]
      %v3147 = vld [vmem:[%s3122 + $0x121] sm:$0xff]
      %v3148 = vld [vmem:[%s3122 + $0x129] sm:$0xff]
      %v3149 = vld [vmem:[%s3122 + $0x139] sm:$0xff]
      %v3150 = vld [vmem:[%s3122 + $0x141] sm:$0xff]
      %v3151 = vld [vmem:[%s3122 + $0x151] sm:$0xff]
      %v3152 = vld [vmem:[%s3122 + $0x159] sm:$0xff]
      %v3153 = vld [vmem:[%s3122 + $0x169] sm:$0xff]
      %v3154 = vld [vmem:[%s3122 + $0x171] sm:$0xff]
      %v3155 = vadd.f32 %v3088, %v3123
      %v3156 = vadd.f32 %v3089, %v3124
      %v3157 = vadd.f32 %v3090, %v3125
      %v3158 = vadd.f32 %v3091, %v3126
      %v3159 = vadd.f32 %v3092, %v3127
      %v3160 = vadd.f32 %v3093, %v3128
      %v3161 = vadd.f32 %v3094, %v3129
      %v3162 = vadd.f32 %v3095, %v3130
      %v3163 = vadd.f32 %v3096, %v3131
      %v3164 = vadd.f32 %v3097, %v3132
      %v3165 = vadd.f32 %v3098, %v3133
      %v3166 = vadd.f32 %v3099, %v3134
      %v3167 = vadd.f32 %v3100, %v3135
      %v3168 = vadd.f32 %v3101, %v3136
      %v3169 = vadd.f32 %v3102, %v3137
      %v3170 = vadd.f32 %v3103, %v3138
      %v3171 = vadd.f32 %v3104, %v3139
      %v3172 = vadd.f32 %v3105, %v3140
      %v3173 = vadd.f32 %v3106, %v3141
      %v3174 = vadd.f32 %v3107, %v3142
      %v3175 = vadd.f32 %v3108, %v3143
      %v3176 = vadd.f32 %v3109, %v3144
      %v3177 = vadd.f32 %v3110, %v3145
      %v3178 = vadd.f32 %v3111, %v3146
      %v3179 = vadd.f32 %v3112, %v3147
      %v3180 = vadd.f32 %v3113, %v3148
      %v3181 = vadd.f32 %v3114, %v3149
      %v3182 = vadd.f32 %v3115, %v3150
      %v3183 = vadd.f32 %v3116, %v3151
      %v3184 = vadd.f32 %v3117, %v3152
      %v3185 = vadd.f32 %v3118, %v3153
      %v3186 = vadd.f32 %v3119, %v3154
      %vm3187 = vcmask 31744
      %3188 = vst.msk [vmem:[%s302] sm:$0xff] %vm3187, %v3155
      %3189 = vst.msk [vmem:[%s302 + $0x8] sm:$0xff] %vm3187, %v3156
      %3190 = vst.msk [vmem:[%s302 + $0x10] sm:$0xff] %vm3187, %v3157
      %3191 = vst.msk [vmem:[%s302 + $0x18] sm:$0xff] %vm3187, %v3158
      %3192 = vst.msk [vmem:[%s302 + $0x20] sm:$0xff] %vm3187, %v3159
      %3193 = vst.msk [vmem:[%s302 + $0x28] sm:$0xff] %vm3187, %v3160
      %3194 = vst.msk [vmem:[%s302 + $0x30] sm:$0xff] %vm3187, %v3161
      %3195 = vst.msk [vmem:[%s302 + $0x38] sm:$0xff] %vm3187, %v3162
      %3196 = vst.msk [vmem:[%s302 + $0x40] sm:$0xff] %vm3187, %v3163
      %3197 = vst.msk [vmem:[%s302 + $0x48] sm:$0xff] %vm3187, %v3164
      %3198 = vst.msk [vmem:[%s302 + $0x50] sm:$0xff] %vm3187, %v3165
      %3199 = vst.msk [vmem:[%s302 + $0x58] sm:$0xff] %vm3187, %v3166
      %3200 = vst.msk [vmem:[%s302 + $0x60] sm:$0xff] %vm3187, %v3167
      %3201 = vst.msk [vmem:[%s302 + $0x68] sm:$0xff] %vm3187, %v3168
      %3202 = vst.msk [vmem:[%s302 + $0x70] sm:$0xff] %vm3187, %v3169
      %3203 = vst.msk [vmem:[%s302 + $0x78] sm:$0xff] %vm3187, %v3170
      %3204 = vst.msk [vmem:[%s302 + $0x80] sm:$0xff] %vm3187, %v3171
      %3205 = vst.msk [vmem:[%s302 + $0x88] sm:$0xff] %vm3187, %v3172
      %3206 = vst.msk [vmem:[%s302 + $0x90] sm:$0xff] %vm3187, %v3173
      %3207 = vst.msk [vmem:[%s302 + $0x98] sm:$0xff] %vm3187, %v3174
      %3208 = vst.msk [vmem:[%s302 + $0xa0] sm:$0xff] %vm3187, %v3175
      %3209 = vst.msk [vmem:[%s302 + $0xa8] sm:$0xff] %vm3187, %v3176
      %3210 = vst.msk [vmem:[%s302 + $0xb0] sm:$0xff] %vm3187, %v3177
      %3211 = vst.msk [vmem:[%s302 + $0xb8] sm:$0xff] %vm3187, %v3178
      %3212 = vst.msk [vmem:[%s302 + $0xc0] sm:$0xff] %vm3187, %v3179
      %3213 = vst.msk [vmem:[%s302 + $0xc8] sm:$0xff] %vm3187, %v3180
      %3214 = vst.msk [vmem:[%s302 + $0xd0] sm:$0xff] %vm3187, %v3181
      %3215 = vst.msk [vmem:[%s302 + $0xd8] sm:$0xff] %vm3187, %v3182
      %3216 = vst.msk [vmem:[%s302 + $0xe0] sm:$0xff] %vm3187, %v3183
      %3217 = vst.msk [vmem:[%s302 + $0xe8] sm:$0xff] %vm3187, %v3184
      %3218 = vst.msk [vmem:[%s302 + $0xf0] sm:$0xff] %vm3187, %v3185
      %3219 = vst.msk [vmem:[%s302 + $0xf8] sm:$0xff] %vm3187, %v3186
      %s3220 = smul.u32 16, %s23
      %p3221 = scmp.lt.s32.totalorder %s22, 1
      %s3222 = scalar_select %p3221, %s22, 1
      %p3223 = scmp.lt.s32.totalorder %s3220, 15
      %s3224 = scalar_select %p3223, %s3220, 15
      %s3225 = smul.addr %s3224, 2
      %s3226 = smul.addr %s3222, 32
      %s3227 = sadd.s32 %s3225, %s3226
      %s3228 = smul.addr %s3227, 8
      %s3229 = scalar_lea.vmem %s7, %s3228
      // Predicated region
      $region57: #{tpu_custom_call.1} parent=47 // pred_check
        %p3230 = pneg %p202
      $region58: #{tpu_custom_call.1} parent=47 // pred_check_branch
        %3232 = sbr.rel (%p3230) target = $region60
      $region59: #{tpu_custom_call.1} parent=47 // pred_region
        %s3233 = smul.u32 16, %s23
      $region60: #{tpu_custom_call.1} parent=47 // pred_fallthru
        _
    $region48: #{tpu_custom_call.1} parent=5 // pred_fallthru
      _
    %p3234 = scmp.le.s32.totalorder 2, %s13
    // Predicated region
    $region61: #{tpu_custom_call.1} parent=5 // pred_check
      %p3235 = pneg %p3234
    $region62: #{tpu_custom_call.1} parent=5 // pred_check_branch
      %3237 = sbr.rel (%p3235) target = $region64
    $region63: #{tpu_custom_call.1} parent=5 // pred_region
      %s3238 = ssub.s32 %s13, 2
      // Predicated region
      $region65: #{tpu_custom_call.1} parent=63 // pred_check
        %p3239 = pneg %p208
      $region66: #{tpu_custom_call.1} parent=63 // pred_check_branch
        %3241 = sbr.rel (%p3239) target = $region68
      $region67: #{tpu_custom_call.1} parent=63 // pred_region
        %s3242 = smul.u32 16, %s25
        %p3243 = scmp.lt.s32.totalorder %s24, 1
        %s3244 = scalar_select %p3243, %s24, 1
        %p3245 = scmp.lt.s32.totalorder %s3242, 15
        %s3246 = scalar_select %p3245, %s3242, 15
        %s3247 = smul.addr %s3246, 2
        %s3248 = smul.addr %s3244, 32
        %s3249 = sadd.s32 %s3247, %s3248
        %s3250 = smul.addr %s3249, 8
        %s3251 = scalar_lea.vmem %s7, %s3250
      $region68: #{tpu_custom_call.1} parent=63 // pred_fallthru
        _
    $region64: #{tpu_custom_call.1} parent=5 // pred_fallthru
      _
  $region6: #{tpu_custom_call.1} parent=0 // loop_footer
    %s17 = sadd.s32 1, %s13
  $region7: #{tpu_custom_call.1} parent=0 // loop_footer_branch
    %12 = sbr.rel target = $region3
  $region8: #{tpu_custom_call.1} parent=0 // loop_exit
    _

</llo_original>
